<compile_context>
chip_gen: v7x
topology: tpu7x:2x2x1
jax: 0.10.0
libtpu: 0.0.40
codegen_flags: <defaults>
</compile_context>

<pallas_src>
import functools

import numpy as np
import jax
import jax.numpy as jnp
from jax.experimental import pallas as pl
from jax.experimental.pallas import tpu as pltpu


# ---------------------------------------------------------------------------
# Fused Pallas kernel: one window-group (a contiguous row chunk of the
# flattened (B*L, C) slab) per grid step.
# ---------------------------------------------------------------------------

def _ln(x, g, b, eps=1e-5):
    mean = jnp.mean(x, axis=-1, keepdims=True)
    var = jnp.mean((x - mean) ** 2, axis=-1, keepdims=True)
    return (x - mean) * jax.lax.rsqrt(var + eps) * g + b


def _fused_swin_block_kernel(x_ref, n1g_ref, n1b_ref,
                             qkvw_ref, qkvb_ref,
                             projw_ref, projb_ref,
                             relb_ref, mask_ref,
                             n2g_ref, n2b_ref,
                             w1_ref, b1_ref, w2_ref, b2_ref,
                             o_ref, *, num_heads, win_tokens, windows_per_block):
    nh, N, wg = num_heads, win_tokens, windows_per_block
    Mb, C = x_ref.shape
    hd = C // nh
    scale = float(hd) ** -0.5

    # Rows arrive in (shifted) window-major order: local window w occupies rows
    # [w*N, (w+1)*N) of this (Mb, C) block.
    x1 = x_ref[...].astype(jnp.float32)

    # ---- norm1 (qact1 modeled as identity) ----
    xn = _ln(x1, n1g_ref[...], n1b_ref[...])

    # ---- fused QKV: one full-width MXU matmul ----
    qkv = jnp.dot(xn, qkvw_ref[...], preferred_element_type=jnp.float32)
    qkv = qkv + qkvb_ref[...]                                 # (Mb, 3C)

    # ---- head split (static lane slices) -> one (nh*wg, N, hd) batch ----
    qs, ks, vs = [], [], []
    for h in range(nh):
        lo = h * hd
        qs.append(qkv[:, lo:lo + hd].reshape(wg, N, hd))
        ks.append(qkv[:, C + lo:C + lo + hd].reshape(wg, N, hd))
        vs.append(qkv[:, 2 * C + lo:2 * C + lo + hd].reshape(wg, N, hd))
    q = jnp.concatenate(qs, axis=0)                           # head-major batch
    k = jnp.concatenate(ks, axis=0)
    v = jnp.concatenate(vs, axis=0)

    # rel-pos bias (nh, N, N) + shift mask (wg, N, N) combined in-register.
    bm = (relb_ref[...][:, None] + mask_ref[...][None, :]).reshape(nh * wg, N, N)

    # ---- attention: score / softmax / P@V batched over heads*windows ----
    s = jnp.einsum('bnd,bmd->bnm', q, k,
                   preferred_element_type=jnp.float32) * scale
    s = s + bm
    s = s - jnp.max(s, axis=-1, keepdims=True)
    p = jnp.exp(s)
    p = p * pl.reciprocal(jnp.sum(p, axis=-1, keepdims=True), approx=True)
    pv = jnp.einsum('bnm,bmd->bnd', p, v,
                    preferred_element_type=jnp.float32)       # (nh*wg, N, hd)

    # ---- merge heads (lane concat) + fused output projection + residual ----
    attn_out = jnp.concatenate(
        [pv[h * wg:(h + 1) * wg].reshape(Mb, hd) for h in range(nh)], axis=-1)
    x2 = jnp.dot(attn_out, projw_ref[...], preferred_element_type=jnp.float32)
    x2 = x2 + projb_ref[...] + x1                             # drop_path = identity

    # ---- norm2 + MLP + residual ----
    y = _ln(x2, n2g_ref[...], n2b_ref[...])
    hid = jnp.dot(y, w1_ref[...], preferred_element_type=jnp.float32) + b1_ref[...]
    # TODO(synk): PyTorch nn.GELU defaults to exact erf GELU; tanh approximation used.
    hid = jax.nn.gelu(hid, approximate=True)
    out = jnp.dot(hid, w2_ref[...], preferred_element_type=jnp.float32) + b2_ref[...]
    o_ref[...] = (out + x2).astype(o_ref.dtype)


def swin_block_pallas(x1p, params, rel_bias, attn_mask, *, num_heads, win_tokens,
                      windows_per_block=None, storage_dtype=jnp.float32):
    """x1p: (B, L, C), tokens already in shifted, window-major order per batch.

    storage_dtype: set to jnp.bfloat16 on v6e/v7x to halve HBM->VMEM traffic
    (matmuls still accumulate in f32); kept f32 here to match the f32 reference.
    """
    B, L, C = x1p.shape
    N = win_tokens
    nW = attn_mask.shape[0]
    Hd = params['fc1_w'].shape[1]
    assert L % N == 0 and (L // N) == nW
    total_windows = B * nW

    if windows_per_block is None:
        # Largest divisor of nW with <=~128 rows per step: keeps the mask
        # index_map trivial, gives >1 grid step (pipelining / megacore work)
        # and bounds the per-step VMEM tile at production Swin sizes.
        windows_per_block = 1
        for d in range(1, nW + 1):
            if nW % d == 0 and d * N <= max(N, 128):
                windows_per_block = d
    wg = windows_per_block
    assert nW % wg == 0
    Mb = wg * N
    n_groups = total_windows // wg
    n_mask_blocks = nW // wg

    x2d = x1p.reshape(B * L, C).astype(storage_dtype)

    def const(shape):
        return pl.BlockSpec(shape, lambda g: (0,) * len(shape))

    kernel = functools.partial(_fused_swin_block_kernel, num_heads=num_heads,
                               win_tokens=N, windows_per_block=wg)

    out2d = pl.pallas_call(
        kernel,
        out_shape=jax.ShapeDtypeStruct((B * L, C), x1p.dtype),
        grid=(n_groups,),
        in_specs=[
            pl.BlockSpec((Mb, C), lambda g: (g, 0)),          # x (window group)
            const((1, C)), const((1, C)),                      # norm1 g/b
            const((C, 3 * C)), const((1, 3 * C)),              # fused QKV w/b
            const((C, C)), const((1, C)),                      # proj w/b
            const((num_heads, N, N)),                          # rel-pos bias
            pl.BlockSpec((wg, N, N),                           # shift mask
                         lambda g: (g % n_mask_blocks, 0, 0)),
            const((1, C)), const((1, C)),                      # norm2 g/b
            const((C, Hd)), const((1, Hd)),                    # fc1
            const((Hd, C)), const((1, C)),                     # fc2
        ],
        out_specs=pl.BlockSpec((Mb, C), lambda g: (g, 0)),
        compiler_params=pltpu.CompilerParams(
            dimension_semantics=("parallel",),
            # Tiny here; at production sizes budget x-block + (Mb, Hd) GELU
            # intermediate + 2x-buffered weights and leave headroom.
            vmem_limit_bytes=32 * 1024 * 1024),
    )(x2d,
      params['norm1_g'].reshape(1, C).astype(storage_dtype),
      params['norm1_b'].reshape(1, C).astype(storage_dtype),
      params['qkv_w'].astype(storage_dtype),
      params['qkv_b'].reshape(1, 3 * C).astype(storage_dtype),
      params['proj_w'].astype(storage_dtype),
      params['proj_b'].reshape(1, C).astype(storage_dtype),
      rel_bias.astype(storage_dtype),
      attn_mask.astype(storage_dtype),
      params['norm2_g'].reshape(1, C).astype(storage_dtype),
      params['norm2_b'].reshape(1, C).astype(storage_dtype),
      params['fc1_w'].astype(storage_dtype),
      params['fc1_b'].reshape(1, Hd).astype(storage_dtype),
      params['fc2_w'].astype(storage_dtype),
      params['fc2_b'].reshape(1, C).astype(storage_dtype))

    return out2d.reshape(B, L, C)


# ---------------------------------------------------------------------------
# Pure-JAX reference (for correctness check), same math / same gelu approx
# ---------------------------------------------------------------------------

def _ref_layernorm(x2d, gamma, beta):
    x = x2d.astype(jnp.float32)
    mean = jnp.mean(x, axis=-1, keepdims=True)
    var = jnp.mean((x - mean) ** 2, axis=-1, keepdims=True)
    return (x - mean) * jax.lax.rsqrt(var + 1e-5) * gamma + beta


def _ref_attention(xw, *, params, rel_bias, mask, num_heads, scale):
    Bw, N, C = xw.shape
    hd = C // num_heads
    qkv = xw @ params['qkv_w'] + params['qkv_b']
    qkv = qkv.reshape(Bw, N, 3, num_heads, hd).transpose(2, 0, 3, 1, 4)
    q, k, v = qkv[0], qkv[1], qkv[2]                       # (Bw, H, N, hd)
    attn = jnp.einsum('bhnd,bhmd->bhnm', q, k) * scale
    attn = attn + rel_bias[None]
    nW = mask.shape[0]
    attn = attn.reshape(Bw // nW, nW, num_heads, N, N) + mask[None, :, None]
    attn = attn.reshape(Bw, num_heads, N, N)
    attn = jax.nn.softmax(attn, axis=-1)
    out = jnp.einsum('bhnm,bhmd->bhnd', attn, v)
    out = out.transpose(0, 2, 1, 3).reshape(Bw, N, C)
    return out @ params['proj_w'] + params['proj_b']


def _ref_mlp(x2d, *, w1, b1, w2, b2):
    h = jax.nn.gelu(x2d @ w1 + b1, approximate=True)
    return h @ w2 + b2


def window_partition(x, ws):
    B, H, W, C = x.shape
    x = x.reshape(B, H // ws, ws, W // ws, ws, C)
    return x.transpose(0, 1, 3, 2, 4, 5).reshape(-1, ws, ws, C)


def window_reverse(windows, ws, H, W):
    B = windows.shape[0] // (H * W // ws // ws)
    x = windows.reshape(B, H // ws, W // ws, ws, ws, -1)
    return x.transpose(0, 1, 3, 2, 4, 5).reshape(B, H, W, -1)


# ---------------------------------------------------------------------------
# Glue: masks, relative position index, shift+partition permutation
# ---------------------------------------------------------------------------

def build_relative_position_index(ws):
    coords = np.stack(np.meshgrid(np.arange(ws), np.arange(ws), indexing='ij'))
    coords_flatten = coords.reshape(2, -1)
    rel = coords_flatten[:, :, None] - coords_flatten[:, None, :]
    rel = rel.transpose(1, 2, 0).astype(np.int64)
    rel[:, :, 0] += ws - 1
    rel[:, :, 1] += ws - 1
    rel[:, :, 0] *= 2 * ws - 1
    return rel.sum(-1)                                     # (N, N)


def build_attn_mask(H, W, ws, ss):
    N = ws * ws
    nW = (H // ws) * (W // ws)
    if ss == 0:
        return np.zeros((nW, N, N), np.float32)
    img_mask = np.zeros((1, H, W, 1), np.float32)
    cnt = 0
    for h in (slice(0, -ws), slice(-ws, -ss), slice(-ss, None)):
        for w in (slice(0, -ws), slice(-ws, -ss), slice(-ss, None)):
            img_mask[:, h, w, :] = cnt
            cnt += 1
    mw = img_mask.reshape(1, H // ws, ws, W // ws, ws, 1)
    mw = mw.transpose(0, 1, 3, 2, 4, 5).reshape(-1, N)
    am = mw[:, None, :] - mw[:, :, None]
    return np.where(am != 0, -100.0, 0.0).astype(np.float32)


def build_window_permutation(H, W, ws, ss):
    """Token permutation that combines roll(-ss,-ss) and window_partition.

    perm[j] = original flat token index feeding window-major position j;
    inv[l]  = window-major position of original token l.
    """
    nWx = W // ws
    perm = np.empty((H * W,), np.int32)
    j = 0
    for wy in range(H // ws):
        for wx in range(nWx):
            for iy in range(ws):
                for ix in range(ws):
                    hh = (wy * ws + iy + ss) % H
                    ww = (wx * ws + ix + ss) % W
                    perm[j] = hh * W + ww
                    j += 1
    inv = np.argsort(perm).astype(np.int32)
    return perm, inv


# ---------------------------------------------------------------------------
# Full SwinTransformerBlock forward
# ---------------------------------------------------------------------------

def swin_block_forward(x1, act_scaling_factor, params, cfg, use_pallas=True):
    H, W = cfg['input_resolution']
    ws, ss = cfg['window_size'], cfg['shift_size']
    nh = cfg['num_heads']
    B, L, C = x1.shape
    assert L == H * W
    N = ws * ws
    scale = float((C // nh) ** (-0.5))

    # Relative position bias (parameter gather — glue outside the kernel).
    rel_bias = params['rel_table'][cfg['rel_index'].reshape(-1)]
    rel_bias = rel_bias.reshape(N, N, nh).transpose(2, 0, 1)     # (nh, N, N)
    attn_mask = cfg['attn_mask']                                 # (nW, N, N)

    if use_pallas:
        # One gather replaces roll + window_partition; LN/MLP/residuals are
        # per-token and commute with the permutation.
        x1p = x1[:, cfg['perm'], :]
        outp = swin_block_pallas(x1p, params, rel_bias, attn_mask,
                                 num_heads=nh, win_tokens=N)
        out = outp[:, cfg['inv_perm'], :]
        # TODO(synk): QuantAct/QuantLinear/QuantMatMul/IntSoftmax fake-quant
        # bookkeeping has no Pallas equivalent here; modeled as float identity
        # and the returned act_scaling_factor is a placeholder scalar.
        return out, jnp.float32(1.0)

    # ---- pure-JAX reference path (PyTorch float semantics) ----
    x = _ref_layernorm(x1.reshape(B * L, C), params['norm1_g'], params['norm1_b'])
    x = x.reshape(B, H, W, C)
    if ss > 0:
        x = jnp.roll(x, shift=(-ss, -ss), axis=(1, 2))
    xw = window_partition(x, ws).reshape(-1, N, C)
    aw = _ref_attention(xw, params=params, rel_bias=rel_bias, mask=attn_mask,
                        num_heads=nh, scale=scale).reshape(-1, ws, ws, C)
    x = window_reverse(aw, ws, H, W)
    if ss > 0:
        x = jnp.roll(x, shift=(ss, ss), axis=(1, 2))
    x = x.reshape(B, L, C)
    x2 = x + x1
    y = _ref_layernorm(x2.reshape(B * L, C), params['norm2_g'], params['norm2_b'])
    y = _ref_mlp(y, w1=params['fc1_w'], b1=params['fc1_b'],
                 w2=params['fc2_w'], b2=params['fc2_b']).reshape(B, L, C)
    return y + x2, jnp.float32(1.0)


# ---------------------------------------------------------------------------
# Main
# ---------------------------------------------------------------------------

if __name__ == "__main__":
    B = 2
    dim = 32
    input_resolution = (8, 8)
    num_heads = 4
    window_size = 4
    shift_size = 2
    mlp_ratio = 4.0

    H, W = input_resolution
    L = H * W
    C = dim
    hidden = int(dim * mlp_ratio)

    key = jax.random.PRNGKey(0)
    ks = jax.random.split(key, 12)
    params = dict(
        norm1_g=jnp.ones((C,), jnp.float32),
        norm1_b=jnp.zeros((C,), jnp.float32),
        norm2_g=jnp.ones((C,), jnp.float32),
        norm2_b=jnp.zeros((C,), jnp.float32),
        qkv_w=0.02 * jax.random.normal(ks[0], (C, 3 * C), jnp.float32),
        qkv_b=0.02 * jax.random.normal(ks[1], (3 * C,), jnp.float32),
        proj_w=0.02 * jax.random.normal(ks[2], (C, C), jnp.float32),
        proj_b=0.02 * jax.random.normal(ks[3], (C,), jnp.float32),
        rel_table=0.02 * jax.random.truncated_normal(
            ks[4], -2.0, 2.0, ((2 * window_size - 1) ** 2, num_heads), jnp.float32),
        fc1_w=0.02 * jax.random.normal(ks[5], (C, hidden), jnp.float32),
        fc1_b=0.02 * jax.random.normal(ks[6], (hidden,), jnp.float32),
        fc2_w=0.02 * jax.random.normal(ks[7], (hidden, C), jnp.float32),
        fc2_b=0.02 * jax.random.normal(ks[8], (C,), jnp.float32),
    )

    perm, inv_perm = build_window_permutation(H, W, window_size, shift_size)
    cfg = dict(
        input_resolution=input_resolution,
        window_size=window_size,
        shift_size=shift_size,
        num_heads=num_heads,
        rel_index=jnp.asarray(build_relative_position_index(window_size)),
        attn_mask=jnp.asarray(build_attn_mask(H, W, window_size, shift_size)),
        perm=jnp.asarray(perm),
        inv_perm=jnp.asarray(inv_perm),
    )

    x1 = jax.random.normal(ks[9], (B, L, C), jnp.float32)
    act_scaling_factor_1 = jnp.float32(1.0)

    out, sf = swin_block_forward(x1, act_scaling_factor_1, params, cfg, use_pallas=True)
    out = jax.block_until_ready(out)

    out_ref, _ = swin_block_forward(x1, act_scaling_factor_1, params, cfg, use_pallas=False)
    out_ref = jax.block_until_ready(out_ref)

    np.testing.assert_allclose(np.asarray(out), np.asarray(out_ref), rtol=1e-2, atol=1e-2)
    print("KERNEL_OK")
</pallas_src>

<mosaic_0001>
module attributes {stable_mosaic.version = 11 : i64} {
  func.func @_fused_swin_block_kernel(%arg0: i32, %arg1: memref<64x32xf32, #tpu.memory_space<vmem>>, %arg2: memref<1x32xf32, #tpu.memory_space<vmem>>, %arg3: memref<1x32xf32, #tpu.memory_space<vmem>>, %arg4: memref<32x96xf32, #tpu.memory_space<vmem>>, %arg5: memref<1x96xf32, #tpu.memory_space<vmem>>, %arg6: memref<32x32xf32, #tpu.memory_space<vmem>>, %arg7: memref<1x32xf32, #tpu.memory_space<vmem>>, %arg8: memref<4x16x16xf32, #tpu.memory_space<vmem>>, %arg9: memref<4x16x16xf32, #tpu.memory_space<vmem>>, %arg10: memref<1x32xf32, #tpu.memory_space<vmem>>, %arg11: memref<1x32xf32, #tpu.memory_space<vmem>>, %arg12: memref<32x128xf32, #tpu.memory_space<vmem>>, %arg13: memref<1x128xf32, #tpu.memory_space<vmem>>, %arg14: memref<128x32xf32, #tpu.memory_space<vmem>>, %arg15: memref<1x32xf32, #tpu.memory_space<vmem>>, %arg16: memref<64x32xf32, #tpu.memory_space<vmem>>) attributes {dimension_semantics = [#tpu.dimension_semantics<parallel>], iteration_bounds = array<i64: 2>, scalar_prefetch = 0 : i64, scratch_operands = 0 : i64, tpu.core_type = #tpu.core_type<tc>, window_params = [{transform_indices = @transform_0, window_bounds = array<i64: 64, 32>}, {pipeline_mode = #tpu.pipeline_mode<synchronous>, transform_indices = @transform_1, window_bounds = array<i64: 1, 32>}, {pipeline_mode = #tpu.pipeline_mode<synchronous>, transform_indices = @transform_2, window_bounds = array<i64: 1, 32>}, {pipeline_mode = #tpu.pipeline_mode<synchronous>, transform_indices = @transform_3, window_bounds = array<i64: 32, 96>}, {pipeline_mode = #tpu.pipeline_mode<synchronous>, transform_indices = @transform_4, window_bounds = array<i64: 1, 96>}, {pipeline_mode = #tpu.pipeline_mode<synchronous>, transform_indices = @transform_5, window_bounds = array<i64: 32, 32>}, {pipeline_mode = #tpu.pipeline_mode<synchronous>, transform_indices = @transform_6, window_bounds = array<i64: 1, 32>}, {pipeline_mode = #tpu.pipeline_mode<synchronous>, transform_indices = @transform_7, window_bounds = array<i64: 4, 16, 16>}, {transform_indices = @transform_8, window_bounds = array<i64: 4, 16, 16>}, {pipeline_mode = #tpu.pipeline_mode<synchronous>, transform_indices = @transform_9, window_bounds = array<i64: 1, 32>}, {pipeline_mode = #tpu.pipeline_mode<synchronous>, transform_indices = @transform_10, window_bounds = array<i64: 1, 32>}, {pipeline_mode = #tpu.pipeline_mode<synchronous>, transform_indices = @transform_11, window_bounds = array<i64: 32, 128>}, {pipeline_mode = #tpu.pipeline_mode<synchronous>, transform_indices = @transform_12, window_bounds = array<i64: 1, 128>}, {pipeline_mode = #tpu.pipeline_mode<synchronous>, transform_indices = @transform_13, window_bounds = array<i64: 128, 32>}, {pipeline_mode = #tpu.pipeline_mode<synchronous>, transform_indices = @transform_14, window_bounds = array<i64: 1, 32>}, {transform_indices = @transform_15, window_bounds = array<i64: 64, 32>}]} {
    %c0 = arith.constant 0 : index
    %c0_0 = arith.constant 0 : index
    %0 = vector.load %arg1[%c0, %c0_0] : memref<64x32xf32, #tpu.memory_space<vmem>>, vector<64x32xf32>
    %c0_1 = arith.constant 0 : index
    %c0_2 = arith.constant 0 : index
    %1 = vector.load %arg2[%c0_1, %c0_2] : memref<1x32xf32, #tpu.memory_space<vmem>>, vector<1x32xf32>
    %c0_3 = arith.constant 0 : index
    %c0_4 = arith.constant 0 : index
    %2 = vector.load %arg3[%c0_3, %c0_4] : memref<1x32xf32, #tpu.memory_space<vmem>>, vector<1x32xf32>
    %cst = arith.constant dense<0.000000e+00> : vector<64xf32>
    %3 = vector.multi_reduction <add>, %0, %cst [1] : vector<64x32xf32> to vector<64xf32>
    %4 = vector.shape_cast %3 : vector<64xf32> to vector<64x1xf32>
    %cst_5 = arith.constant 3.200000e+01 : f32
    %5 = vector.broadcast %cst_5 : f32 to vector<64x1xf32>
    %6 = arith.divf %4, %5 : vector<64x1xf32>
    %7 = vector.broadcast %6 : vector<64x1xf32> to vector<64x32xf32>
    %8 = arith.subf %0, %7 : vector<64x32xf32>
    %9 = arith.mulf %8, %8 : vector<64x32xf32>
    %cst_6 = arith.constant dense<0.000000e+00> : vector<64xf32>
    %10 = vector.multi_reduction <add>, %9, %cst_6 [1] : vector<64x32xf32> to vector<64xf32>
    %11 = vector.shape_cast %10 : vector<64xf32> to vector<64x1xf32>
    %cst_7 = arith.constant 3.200000e+01 : f32
    %12 = vector.broadcast %cst_7 : f32 to vector<64x1xf32>
    %13 = arith.divf %11, %12 : vector<64x1xf32>
    %14 = vector.broadcast %6 : vector<64x1xf32> to vector<64x32xf32>
    %15 = arith.subf %0, %14 : vector<64x32xf32>
    %cst_8 = arith.constant 9.99999974E-6 : f32
    %16 = vector.broadcast %cst_8 : f32 to vector<64x1xf32>
    %17 = arith.addf %13, %16 : vector<64x1xf32>
    %18 = math.rsqrt %17 : vector<64x1xf32>
    %19 = vector.broadcast %18 : vector<64x1xf32> to vector<64x32xf32>
    %20 = arith.mulf %15, %19 : vector<64x32xf32>
    %21 = vector.broadcast %1 : vector<1x32xf32> to vector<64x32xf32>
    %22 = arith.mulf %20, %21 : vector<64x32xf32>
    %23 = vector.broadcast %2 : vector<1x32xf32> to vector<64x32xf32>
    %24 = arith.addf %22, %23 : vector<64x32xf32>
    %c0_9 = arith.constant 0 : index
    %c0_10 = arith.constant 0 : index
    %25 = vector.load %arg4[%c0_9, %c0_10] : memref<32x96xf32, #tpu.memory_space<vmem>>, vector<32x96xf32>
    %cst_11 = arith.constant dense<0.000000e+00> : vector<64x96xf32>
    %26 = tpu.matmul %24, %25, %cst_11 {dimension_numbers = #tpu.dot_dimension_numbers<[1], [0], [0], [1], [0, 0, 1, 1], [], []>} : vector<64x32xf32>, vector<32x96xf32>, vector<64x96xf32> -> vector<64x96xf32>
    %c0_12 = arith.constant 0 : index
    %c0_13 = arith.constant 0 : index
    %27 = vector.load %arg5[%c0_12, %c0_13] : memref<1x96xf32, #tpu.memory_space<vmem>>, vector<1x96xf32>
    %28 = vector.broadcast %27 : vector<1x96xf32> to vector<64x96xf32>
    %29 = arith.addf %26, %28 : vector<64x96xf32>
    %30 = vector.extract_strided_slice %29 {offsets = [0, 0], sizes = [64, 8], strides = [1, 1]} : vector<64x96xf32> to vector<64x8xf32>
    %31 = vector.shape_cast %30 : vector<64x8xf32> to vector<4x16x8xf32>
    %32 = vector.extract_strided_slice %29 {offsets = [0, 32], sizes = [64, 8], strides = [1, 1]} : vector<64x96xf32> to vector<64x8xf32>
    %33 = vector.shape_cast %32 : vector<64x8xf32> to vector<4x16x8xf32>
    %34 = vector.extract_strided_slice %29 {offsets = [0, 64], sizes = [64, 8], strides = [1, 1]} : vector<64x96xf32> to vector<64x8xf32>
    %35 = vector.shape_cast %34 : vector<64x8xf32> to vector<4x16x8xf32>
    %36 = vector.extract_strided_slice %29 {offsets = [0, 8], sizes = [64, 8], strides = [1, 1]} : vector<64x96xf32> to vector<64x8xf32>
    %37 = vector.shape_cast %36 : vector<64x8xf32> to vector<4x16x8xf32>
    %38 = vector.extract_strided_slice %29 {offsets = [0, 40], sizes = [64, 8], strides = [1, 1]} : vector<64x96xf32> to vector<64x8xf32>
    %39 = vector.shape_cast %38 : vector<64x8xf32> to vector<4x16x8xf32>
    %40 = vector.extract_strided_slice %29 {offsets = [0, 72], sizes = [64, 8], strides = [1, 1]} : vector<64x96xf32> to vector<64x8xf32>
    %41 = vector.shape_cast %40 : vector<64x8xf32> to vector<4x16x8xf32>
    %42 = vector.extract_strided_slice %29 {offsets = [0, 16], sizes = [64, 8], strides = [1, 1]} : vector<64x96xf32> to vector<64x8xf32>
    %43 = vector.shape_cast %42 : vector<64x8xf32> to vector<4x16x8xf32>
    %44 = vector.extract_strided_slice %29 {offsets = [0, 48], sizes = [64, 8], strides = [1, 1]} : vector<64x96xf32> to vector<64x8xf32>
    %45 = vector.shape_cast %44 : vector<64x8xf32> to vector<4x16x8xf32>
    %46 = vector.extract_strided_slice %29 {offsets = [0, 80], sizes = [64, 8], strides = [1, 1]} : vector<64x96xf32> to vector<64x8xf32>
    %47 = vector.shape_cast %46 : vector<64x8xf32> to vector<4x16x8xf32>
    %48 = vector.extract_strided_slice %29 {offsets = [0, 24], sizes = [64, 8], strides = [1, 1]} : vector<64x96xf32> to vector<64x8xf32>
    %49 = vector.shape_cast %48 : vector<64x8xf32> to vector<4x16x8xf32>
    %50 = vector.extract_strided_slice %29 {offsets = [0, 56], sizes = [64, 8], strides = [1, 1]} : vector<64x96xf32> to vector<64x8xf32>
    %51 = vector.shape_cast %50 : vector<64x8xf32> to vector<4x16x8xf32>
    %52 = vector.extract_strided_slice %29 {offsets = [0, 88], sizes = [64, 8], strides = [1, 1]} : vector<64x96xf32> to vector<64x8xf32>
    %53 = vector.shape_cast %52 : vector<64x8xf32> to vector<4x16x8xf32>
    %54 = tpu.concatenate %31, %37, %43, %49 in 0 : vector<4x16x8xf32>, vector<4x16x8xf32>, vector<4x16x8xf32>, vector<4x16x8xf32> -> vector<16x16x8xf32>
    %55 = tpu.concatenate %33, %39, %45, %51 in 0 : vector<4x16x8xf32>, vector<4x16x8xf32>, vector<4x16x8xf32>, vector<4x16x8xf32> -> vector<16x16x8xf32>
    %56 = tpu.concatenate %35, %41, %47, %53 in 0 : vector<4x16x8xf32>, vector<4x16x8xf32>, vector<4x16x8xf32>, vector<4x16x8xf32> -> vector<16x16x8xf32>
    %c0_14 = arith.constant 0 : index
    %c0_15 = arith.constant 0 : index
    %c0_16 = arith.constant 0 : index
    %57 = vector.load %arg8[%c0_14, %c0_15, %c0_16] : memref<4x16x16xf32, #tpu.memory_space<vmem>>, vector<4x16x16xf32>
    %58 = vector.shape_cast %57 : vector<4x16x16xf32> to vector<4x1x16x16xf32>
    %c0_17 = arith.constant 0 : index
    %c0_18 = arith.constant 0 : index
    %c0_19 = arith.constant 0 : index
    %59 = vector.load %arg9[%c0_17, %c0_18, %c0_19] : memref<4x16x16xf32, #tpu.memory_space<vmem>>, vector<4x16x16xf32>
    %60 = vector.shape_cast %59 : vector<4x16x16xf32> to vector<1x4x16x16xf32>
    %61 = vector.broadcast %58 : vector<4x1x16x16xf32> to vector<4x4x16x16xf32>
    %62 = vector.broadcast %60 : vector<1x4x16x16xf32> to vector<4x4x16x16xf32>
    %63 = arith.addf %61, %62 : vector<4x4x16x16xf32>
    %64 = vector.shape_cast %63 : vector<4x4x16x16xf32> to vector<16x16x16xf32>
    "tpu.trace_start"() <{level = 10 : i32, message = "bnd,bmd->bnm"}> : () -> ()
    %cst_20 = arith.constant dense<0.000000e+00> : vector<16x16x16xf32>
    %65 = tpu.matmul %54, %55, %cst_20 {dimension_numbers = #tpu.dot_dimension_numbers<[2], [2], [1], [1], [0, 0, 0, 1, 1, 1], [0], [0]>} : vector<16x16x8xf32>, vector<16x16x8xf32>, vector<16x16x16xf32> -> vector<16x16x16xf32>
    "tpu.trace_stop"() : () -> ()
    %cst_21 = arith.constant 0.353553385 : f32
    %66 = vector.broadcast %cst_21 : f32 to vector<16x16x16xf32>
    %67 = arith.mulf %65, %66 : vector<16x16x16xf32>
    %68 = arith.addf %67, %64 : vector<16x16x16xf32>
    %cst_22 = arith.constant dense<0xFF800000> : vector<16x16xf32>
    %69 = vector.multi_reduction <maximumf>, %68, %cst_22 [2] : vector<16x16x16xf32> to vector<16x16xf32>
    %70 = vector.shape_cast %69 : vector<16x16xf32> to vector<16x16x1xf32>
    %71 = vector.broadcast %70 : vector<16x16x1xf32> to vector<16x16x16xf32>
    %72 = arith.subf %68, %71 : vector<16x16x16xf32>
    %73 = math.exp %72 : vector<16x16x16xf32>
    %cst_23 = arith.constant dense<0.000000e+00> : vector<16x16xf32>
    %74 = vector.multi_reduction <add>, %73, %cst_23 [2] : vector<16x16x16xf32> to vector<16x16xf32>
    %75 = vector.shape_cast %74 : vector<16x16xf32> to vector<16x16x1xf32>
    %76 = tpu.reciprocal %75 {approx = true} : vector<16x16x1xf32> -> vector<16x16x1xf32>
    %77 = vector.broadcast %76 : vector<16x16x1xf32> to vector<16x16x16xf32>
    %78 = arith.mulf %73, %77 : vector<16x16x16xf32>
    "tpu.trace_start"() <{level = 10 : i32, message = "bnm,bmd->bnd"}> : () -> ()
    %cst_24 = arith.constant dense<0.000000e+00> : vector<16x16x8xf32>
    %79 = tpu.matmul %78, %56, %cst_24 {dimension_numbers = #tpu.dot_dimension_numbers<[2], [1], [1], [2], [0, 0, 0, 1, 1, 2], [0], [0]>} : vector<16x16x16xf32>, vector<16x16x8xf32>, vector<16x16x8xf32> -> vector<16x16x8xf32>
    "tpu.trace_stop"() : () -> ()
    %80 = vector.extract_strided_slice %79 {offsets = [0, 0, 0], sizes = [4, 16, 8], strides = [1, 1, 1]} : vector<16x16x8xf32> to vector<4x16x8xf32>
    %81 = vector.shape_cast %80 : vector<4x16x8xf32> to vector<64x8xf32>
    %82 = vector.extract_strided_slice %79 {offsets = [4, 0, 0], sizes = [4, 16, 8], strides = [1, 1, 1]} : vector<16x16x8xf32> to vector<4x16x8xf32>
    %83 = vector.shape_cast %82 : vector<4x16x8xf32> to vector<64x8xf32>
    %84 = vector.extract_strided_slice %79 {offsets = [8, 0, 0], sizes = [4, 16, 8], strides = [1, 1, 1]} : vector<16x16x8xf32> to vector<4x16x8xf32>
    %85 = vector.shape_cast %84 : vector<4x16x8xf32> to vector<64x8xf32>
    %86 = vector.extract_strided_slice %79 {offsets = [12, 0, 0], sizes = [4, 16, 8], strides = [1, 1, 1]} : vector<16x16x8xf32> to vector<4x16x8xf32>
    %87 = vector.shape_cast %86 : vector<4x16x8xf32> to vector<64x8xf32>
    %88 = tpu.concatenate %81, %83, %85, %87 in 1 : vector<64x8xf32>, vector<64x8xf32>, vector<64x8xf32>, vector<64x8xf32> -> vector<64x32xf32>
    %c0_25 = arith.constant 0 : index
    %c0_26 = arith.constant 0 : index
    %89 = vector.load %arg6[%c0_25, %c0_26] : memref<32x32xf32, #tpu.memory_space<vmem>>, vector<32x32xf32>
    %cst_27 = arith.constant dense<0.000000e+00> : vector<64x32xf32>
    %90 = tpu.matmul %88, %89, %cst_27 {dimension_numbers = #tpu.dot_dimension_numbers<[1], [0], [0], [1], [0, 0, 1, 1], [], []>} : vector<64x32xf32>, vector<32x32xf32>, vector<64x32xf32> -> vector<64x32xf32>
    %c0_28 = arith.constant 0 : index
    %c0_29 = arith.constant 0 : index
    %91 = vector.load %arg7[%c0_28, %c0_29] : memref<1x32xf32, #tpu.memory_space<vmem>>, vector<1x32xf32>
    %92 = vector.broadcast %91 : vector<1x32xf32> to vector<64x32xf32>
    %93 = arith.addf %90, %92 : vector<64x32xf32>
    %94 = arith.addf %93, %0 : vector<64x32xf32>
    %c0_30 = arith.constant 0 : index
    %c0_31 = arith.constant 0 : index
    %95 = vector.load %arg10[%c0_30, %c0_31] : memref<1x32xf32, #tpu.memory_space<vmem>>, vector<1x32xf32>
    %c0_32 = arith.constant 0 : index
    %c0_33 = arith.constant 0 : index
    %96 = vector.load %arg11[%c0_32, %c0_33] : memref<1x32xf32, #tpu.memory_space<vmem>>, vector<1x32xf32>
    %cst_34 = arith.constant dense<0.000000e+00> : vector<64xf32>
    %97 = vector.multi_reduction <add>, %94, %cst_34 [1] : vector<64x32xf32> to vector<64xf32>
    %98 = vector.shape_cast %97 : vector<64xf32> to vector<64x1xf32>
    %cst_35 = arith.constant 3.200000e+01 : f32
    %99 = vector.broadcast %cst_35 : f32 to vector<64x1xf32>
    %100 = arith.divf %98, %99 : vector<64x1xf32>
    %101 = vector.broadcast %100 : vector<64x1xf32> to vector<64x32xf32>
    %102 = arith.subf %94, %101 : vector<64x32xf32>
    %103 = arith.mulf %102, %102 : vector<64x32xf32>
    %cst_36 = arith.constant dense<0.000000e+00> : vector<64xf32>
    %104 = vector.multi_reduction <add>, %103, %cst_36 [1] : vector<64x32xf32> to vector<64xf32>
    %105 = vector.shape_cast %104 : vector<64xf32> to vector<64x1xf32>
    %cst_37 = arith.constant 3.200000e+01 : f32
    %106 = vector.broadcast %cst_37 : f32 to vector<64x1xf32>
    %107 = arith.divf %105, %106 : vector<64x1xf32>
    %108 = vector.broadcast %100 : vector<64x1xf32> to vector<64x32xf32>
    %109 = arith.subf %94, %108 : vector<64x32xf32>
    %cst_38 = arith.constant 9.99999974E-6 : f32
    %110 = vector.broadcast %cst_38 : f32 to vector<64x1xf32>
    %111 = arith.addf %107, %110 : vector<64x1xf32>
    %112 = math.rsqrt %111 : vector<64x1xf32>
    %113 = vector.broadcast %112 : vector<64x1xf32> to vector<64x32xf32>
    %114 = arith.mulf %109, %113 : vector<64x32xf32>
    %115 = vector.broadcast %95 : vector<1x32xf32> to vector<64x32xf32>
    %116 = arith.mulf %114, %115 : vector<64x32xf32>
    %117 = vector.broadcast %96 : vector<1x32xf32> to vector<64x32xf32>
    %118 = arith.addf %116, %117 : vector<64x32xf32>
    %c0_39 = arith.constant 0 : index
    %c0_40 = arith.constant 0 : index
    %119 = vector.load %arg12[%c0_39, %c0_40] : memref<32x128xf32, #tpu.memory_space<vmem>>, vector<32x128xf32>
    %cst_41 = arith.constant dense<0.000000e+00> : vector<64x128xf32>
    %120 = tpu.matmul %118, %119, %cst_41 {dimension_numbers = #tpu.dot_dimension_numbers<[1], [0], [0], [1], [0, 0, 1, 1], [], []>} : vector<64x32xf32>, vector<32x128xf32>, vector<64x128xf32> -> vector<64x128xf32>
    %c0_42 = arith.constant 0 : index
    %c0_43 = arith.constant 0 : index
    %121 = vector.load %arg13[%c0_42, %c0_43] : memref<1x128xf32, #tpu.memory_space<vmem>>, vector<1x128xf32>
    %122 = vector.broadcast %121 : vector<1x128xf32> to vector<64x128xf32>
    %123 = arith.addf %120, %122 : vector<64x128xf32>
    %124 = arith.mulf %123, %123 : vector<64x128xf32>
    %125 = arith.mulf %123, %124 : vector<64x128xf32>
    %cst_44 = arith.constant 4.471500e-02 : f32
    %126 = vector.broadcast %cst_44 : f32 to vector<64x128xf32>
    %127 = arith.mulf %126, %125 : vector<64x128xf32>
    %128 = arith.addf %123, %127 : vector<64x128xf32>
    %cst_45 = arith.constant 0.797884583 : f32
    %129 = vector.broadcast %cst_45 : f32 to vector<64x128xf32>
    %130 = arith.mulf %129, %128 : vector<64x128xf32>
    %131 = math.tanh %130 : vector<64x128xf32>
    %cst_46 = arith.constant 1.000000e+00 : f32
    %132 = vector.broadcast %cst_46 : f32 to vector<64x128xf32>
    %133 = arith.addf %132, %131 : vector<64x128xf32>
    %cst_47 = arith.constant 5.000000e-01 : f32
    %134 = vector.broadcast %cst_47 : f32 to vector<64x128xf32>
    %135 = arith.mulf %134, %133 : vector<64x128xf32>
    %136 = arith.mulf %123, %135 : vector<64x128xf32>
    %c0_48 = arith.constant 0 : index
    %c0_49 = arith.constant 0 : index
    %137 = vector.load %arg14[%c0_48, %c0_49] : memref<128x32xf32, #tpu.memory_space<vmem>>, vector<128x32xf32>
    %cst_50 = arith.constant dense<0.000000e+00> : vector<64x32xf32>
    %138 = tpu.matmul %136, %137, %cst_50 {dimension_numbers = #tpu.dot_dimension_numbers<[1], [0], [0], [1], [0, 0, 1, 1], [], []>} : vector<64x128xf32>, vector<128x32xf32>, vector<64x32xf32> -> vector<64x32xf32>
    %c0_51 = arith.constant 0 : index
    %c0_52 = arith.constant 0 : index
    %139 = vector.load %arg15[%c0_51, %c0_52] : memref<1x32xf32, #tpu.memory_space<vmem>>, vector<1x32xf32>
    %140 = vector.broadcast %139 : vector<1x32xf32> to vector<64x32xf32>
    %141 = arith.addf %138, %140 : vector<64x32xf32>
    %142 = arith.addf %141, %94 : vector<64x32xf32>
    %c0_53 = arith.constant 0 : index
    %c0_54 = arith.constant 0 : index
    %143 = vector.load %arg16[%c0_53, %c0_54] : memref<64x32xf32, #tpu.memory_space<vmem>>, vector<64x32xf32>
    tpu.vector_store %arg16[%c0_53, %c0_54], %142 {strides = array<i32>} : memref<64x32xf32, #tpu.memory_space<vmem>>, vector<64x32xf32>,
    return
  }
  func.func @transform_0(%arg0: i32) -> (i32, i32) {
    %c0_i32 = arith.constant 0 : i32
    %c0_i32_0 = arith.constant 0 : i32
    return %arg0, %c0_i32 : i32, i32
  }
  func.func @transform_1(%arg0: i32) -> (i32, i32) {
    %c0_i32 = arith.constant 0 : i32
    %c0_i32_0 = arith.constant 0 : i32
    %c0_i32_1 = arith.constant 0 : i32
    return %c0_i32, %c0_i32_0 : i32, i32
  }
  func.func @transform_2(%arg0: i32) -> (i32, i32) {
    %c0_i32 = arith.constant 0 : i32
    %c0_i32_0 = arith.constant 0 : i32
    %c0_i32_1 = arith.constant 0 : i32
    return %c0_i32, %c0_i32_0 : i32, i32
  }
  func.func @transform_3(%arg0: i32) -> (i32, i32) {
    %c0_i32 = arith.constant 0 : i32
    %c0_i32_0 = arith.constant 0 : i32
    %c0_i32_1 = arith.constant 0 : i32
    return %c0_i32, %c0_i32_0 : i32, i32
  }
  func.func @transform_4(%arg0: i32) -> (i32, i32) {
    %c0_i32 = arith.constant 0 : i32
    %c0_i32_0 = arith.constant 0 : i32
    %c0_i32_1 = arith.constant 0 : i32
    return %c0_i32, %c0_i32_0 : i32, i32
  }
  func.func @transform_5(%arg0: i32) -> (i32, i32) {
    %c0_i32 = arith.constant 0 : i32
    %c0_i32_0 = arith.constant 0 : i32
    %c0_i32_1 = arith.constant 0 : i32
    return %c0_i32, %c0_i32_0 : i32, i32
  }
  func.func @transform_6(%arg0: i32) -> (i32, i32) {
    %c0_i32 = arith.constant 0 : i32
    %c0_i32_0 = arith.constant 0 : i32
    %c0_i32_1 = arith.constant 0 : i32
    return %c0_i32, %c0_i32_0 : i32, i32
  }
  func.func @transform_7(%arg0: i32) -> (i32, i32, i32) {
    %c0_i32 = arith.constant 0 : i32
    %c0_i32_0 = arith.constant 0 : i32
    %c0_i32_1 = arith.constant 0 : i32
    %c0_i32_2 = arith.constant 0 : i32
    return %c0_i32, %c0_i32_0, %c0_i32_1 : i32, i32, i32
  }
  func.func @transform_8(%arg0: i32) -> (i32, i32, i32) {
    %c1_i32 = arith.constant 1 : i32
    %c0_i32 = arith.constant 0 : i32
    %0 = arith.cmpi eq, %c1_i32, %c0_i32 : i32
    %c1_i32_0 = arith.constant 1 : i32
    %1 = arith.select %0, %c1_i32_0, %c1_i32 : i32
    %2 = arith.remsi %arg0, %1 : i32
    %c0_i32_1 = arith.constant 0 : i32
    %3 = arith.cmpi ne, %2, %c0_i32_1 : i32
    %c0_i32_2 = arith.constant 0 : i32
    %4 = arith.cmpi slt, %2, %c0_i32_2 : i32
    %c0_i32_3 = arith.constant 0 : i32
    %5 = arith.cmpi slt, %1, %c0_i32_3 : i32
    %6 = arith.xori %4, %5 : i1
    %7 = arith.andi %6, %3 : i1
    %8 = arith.addi %2, %1 : i32
    %9 = arith.select %7, %8, %2 : i32
    %c0_i32_4 = arith.constant 0 : i32
    %c0_i32_5 = arith.constant 0 : i32
    %c0_i32_6 = arith.constant 0 : i32
    return %9, %c0_i32_4, %c0_i32_5 : i32, i32, i32
  }
  func.func @transform_9(%arg0: i32) -> (i32, i32) {
    %c0_i32 = arith.constant 0 : i32
    %c0_i32_0 = arith.constant 0 : i32
    %c0_i32_1 = arith.constant 0 : i32
    return %c0_i32, %c0_i32_0 : i32, i32
  }
  func.func @transform_10(%arg0: i32) -> (i32, i32) {
    %c0_i32 = arith.constant 0 : i32
    %c0_i32_0 = arith.constant 0 : i32
    %c0_i32_1 = arith.constant 0 : i32
    return %c0_i32, %c0_i32_0 : i32, i32
  }
  func.func @transform_11(%arg0: i32) -> (i32, i32) {
    %c0_i32 = arith.constant 0 : i32
    %c0_i32_0 = arith.constant 0 : i32
    %c0_i32_1 = arith.constant 0 : i32
    return %c0_i32, %c0_i32_0 : i32, i32
  }
  func.func @transform_12(%arg0: i32) -> (i32, i32) {
    %c0_i32 = arith.constant 0 : i32
    %c0_i32_0 = arith.constant 0 : i32
    %c0_i32_1 = arith.constant 0 : i32
    return %c0_i32, %c0_i32_0 : i32, i32
  }
  func.func @transform_13(%arg0: i32) -> (i32, i32) {
    %c0_i32 = arith.constant 0 : i32
    %c0_i32_0 = arith.constant 0 : i32
    %c0_i32_1 = arith.constant 0 : i32
    return %c0_i32, %c0_i32_0 : i32, i32
  }
  func.func @transform_14(%arg0: i32) -> (i32, i32) {
    %c0_i32 = arith.constant 0 : i32
    %c0_i32_0 = arith.constant 0 : i32
    %c0_i32_1 = arith.constant 0 : i32
    return %c0_i32, %c0_i32_0 : i32, i32
  }
  func.func @transform_15(%arg0: i32) -> (i32, i32) {
    %c0_i32 = arith.constant 0 : i32
    %c0_i32_0 = arith.constant 0 : i32
    return %arg0, %c0_i32 : i32, i32
  }
}

</mosaic_0001>

<llo_original>
// kernel: tpu_custom_call.1
$region0: #{tpu_custom_call.1}
  #allocation0 [shape = 'u32[]', space=smem, size = 0x4, offset = 0x4, fixed_abs, tag = 'smem constant byte address 0x4 - core index']
  #allocation1 [shape = 'u32[144,128]{1,0:T(1,128)}', space=vmem, size = 0x12000, scoped, tag = 'internal scratch']
  %s0 = inlined_call_operand.vmem [shape: f32[128,32], index: 0, kind: input, shape index: {}]
  %s1 = inlined_call_operand.vmem [shape: f32[1,32], index: 1, kind: input, shape index: {}]
  %s2 = inlined_call_operand.vmem [shape: f32[1,32], index: 2, kind: input, shape index: {}]
  %s3 = inlined_call_operand.vmem [shape: f32[32,96], index: 3, kind: input, shape index: {}]
  %s4 = inlined_call_operand.vmem [shape: f32[1,96], index: 4, kind: input, shape index: {}]
  %s5 = inlined_call_operand.vmem [shape: f32[32,32], index: 5, kind: input, shape index: {}]
  %s6 = inlined_call_operand.vmem [shape: f32[1,32], index: 6, kind: input, shape index: {}]
  %s7 = inlined_call_operand.vmem [shape: f32[4,16,16], index: 7, kind: input, shape index: {}]
  %s8 = inlined_call_operand.vmem [shape: f32[4,16,16], index: 8, kind: input, shape index: {}]
  %s9 = inlined_call_operand.vmem [shape: f32[1,32], index: 9, kind: input, shape index: {}]
  %s10 = inlined_call_operand.vmem [shape: f32[1,32], index: 10, kind: input, shape index: {}]
  %s11 = inlined_call_operand.vmem [shape: f32[32,128], index: 11, kind: input, shape index: {}]
  %s12 = inlined_call_operand.vmem [shape: f32[1,128], index: 12, kind: input, shape index: {}]
  %s13 = inlined_call_operand.vmem [shape: f32[128,32], index: 13, kind: input, shape index: {}]
  %s14 = inlined_call_operand.vmem [shape: f32[1,32], index: 14, kind: input, shape index: {}]
  %s15 = inlined_call_operand.vmem [shape: f32[128,32], index: 15, kind: output, shape index: {}]
  %s16 = sld [smem:[#allocation0]]
  $region93: #{tpu_custom_call.1} parent=0
    _
  %s18 = ssub.s32 1, %s16
  %s19 = scalar_select 0, %s18, %s16
  loop: start=0, step=1, limit=4
  $region2: #{tpu_custom_call.1} parent=0 // loop_pre_header
    _
  $region3: #{tpu_custom_call.1} parent=0 // loop_header
    %s21 = sphi 0, %s25
    %p22 = scmp.ge.s32.totalorder %s21, 4
    %s31 = sphi 0, %s33
    %s34 = sphi 0, %s31
    %s35 = sphi 0, %s34
    %s51 = sphi 0, %s35
    %s55 = sphi 0, %s55
    %s57 = sphi 0, %s55
    %s58 = sphi 0, %s57
    %s72 = sphi 0, %s58
    %s76 = sphi 0, %s76
    %s78 = sphi 0, %s76
    %s79 = sphi 0, %s78
    %s93 = sphi 0, %s79
    %s97 = sphi 0, %s97
    %s99 = sphi 0, %s97
    %s100 = sphi 0, %s99
    %s114 = sphi 0, %s100
    %s118 = sphi 0, %s118
    %s120 = sphi 0, %s118
    %s121 = sphi 0, %s120
    %s135 = sphi 0, %s121
    %s139 = sphi 0, %s139
    %s141 = sphi 0, %s139
    %s142 = sphi 0, %s141
    %s156 = sphi 0, %s142
    %s160 = sphi 0, %s160
    %s162 = sphi 0, %s160
    %s163 = sphi 0, %s162
    %s177 = sphi 0, %s163
    %s181 = sphi 0, %s181
    %s183 = sphi 0, %s181
    %s184 = sphi 0, %s183
    %s198 = sphi 0, %s184
    %s202 = sphi 0, %s202
    %s204 = sphi 0, %s202
    %s205 = sphi 0, %s204
    %s219 = sphi 0, %s205
    %s223 = sphi 0, %s223
    %s225 = sphi 0, %s223
    %s226 = sphi 0, %s225
    %s240 = sphi 0, %s226
    %s244 = sphi 0, %s244
    %s246 = sphi 0, %s244
    %s247 = sphi 0, %s246
    %s261 = sphi 0, %s247
    %s265 = sphi 0, %s265
    %s267 = sphi 0, %s265
    %s268 = sphi 0, %s267
    %s282 = sphi 0, %s268
    %s286 = sphi 0, %s286
    %s288 = sphi 0, %s286
    %s289 = sphi 0, %s288
    %s303 = sphi 0, %s289
    %s307 = sphi 0, %s307
    %s309 = sphi 0, %s307
    %s310 = sphi 0, %s309
    %s324 = sphi 0, %s310
    %s328 = sphi 0, %s328
    %s330 = sphi 0, %s328
    %s331 = sphi 0, %s330
    %s345 = sphi 0, %s331
    %s351 = sphi 0, %s353
    %s354 = sphi 0, %s351
    %s355 = sphi 0, %s354
    %s371 = sphi 0, %s355
  $region4: #{tpu_custom_call.1} parent=0 // loop_header_branch
    %24 = sbr.rel (%p22) target = $region8
  $region5: #{tpu_custom_call.1} parent=0 // loop_body
    %s26 = ssub.s32 %s21, 1
    %s27 = ssub.s32 %s21, 2
    %s28 = sadd.s32 %s21, 1
    %s29 = ssub.s32 %s21, %s28
    %p30 = scmp.eq.s32.totalorder %s29, 0
    %s32 = sadd.s32 %s31, 1
    %s33 = scalar_select %p30, %s31, %s32
    %p36 = pneg %p30
    %p37 = scmp.eq.s32.totalorder %s21, 1
    %p38 = por %p36, %p37
    %p39 = scmp.ne.s32.totalorder %s31, %s34
    %p40 = scmp.eq.s32.totalorder %s21, 0
    %p41 = por %p39, %p40
    %p42 = scmp.ne.s32.totalorder %s31, %s34
    %p43 = scmp.eq.s32.totalorder %s26, 1
    %p44 = por %p42, %p43
    %p45 = scmp.ne.s32.totalorder %s34, %s35
    %p46 = scmp.eq.s32.totalorder %s26, 0
    %p47 = por %p45, %p46
    %p48 = scmp.ne.s32.totalorder %s34, %s35
    %p49 = scmp.eq.s32.totalorder %s27, 1
    %p50 = por %p48, %p49
    %p52 = scmp.ne.s32.totalorder %s35, %s51
    %p53 = scmp.eq.s32.totalorder %s27, 0
    %p54 = por %p52, %p53
    %s56 = sadd.s32 %s55, 1
    %p59 = scmp.eq.s32.totalorder %s21, 1
    %p60 = scmp.ne.s32.totalorder %s55, %s57
    %p61 = scmp.eq.s32.totalorder %s21, 0
    %p62 = por %p60, %p61
    %p63 = scmp.ne.s32.totalorder %s55, %s57
    %p64 = scmp.eq.s32.totalorder %s26, 1
    %p65 = por %p63, %p64
    %p66 = scmp.ne.s32.totalorder %s57, %s58
    %p67 = scmp.eq.s32.totalorder %s26, 0
    %p68 = por %p66, %p67
    %p69 = scmp.ne.s32.totalorder %s57, %s58
    %p70 = scmp.eq.s32.totalorder %s27, 1
    %p71 = por %p69, %p70
    %p73 = scmp.ne.s32.totalorder %s58, %s72
    %p74 = scmp.eq.s32.totalorder %s27, 0
    %p75 = por %p73, %p74
    %s77 = sadd.s32 %s76, 1
    %p80 = scmp.eq.s32.totalorder %s21, 1
    %p81 = scmp.ne.s32.totalorder %s76, %s78
    %p82 = scmp.eq.s32.totalorder %s21, 0
    %p83 = por %p81, %p82
    %p84 = scmp.ne.s32.totalorder %s76, %s78
    %p85 = scmp.eq.s32.totalorder %s26, 1
    %p86 = por %p84, %p85
    %p87 = scmp.ne.s32.totalorder %s78, %s79
    %p88 = scmp.eq.s32.totalorder %s26, 0
    %p89 = por %p87, %p88
    %p90 = scmp.ne.s32.totalorder %s78, %s79
    %p91 = scmp.eq.s32.totalorder %s27, 1
    %p92 = por %p90, %p91
    %p94 = scmp.ne.s32.totalorder %s79, %s93
    %p95 = scmp.eq.s32.totalorder %s27, 0
    %p96 = por %p94, %p95
    %s98 = sadd.s32 %s97, 1
    %p101 = scmp.eq.s32.totalorder %s21, 1
    %p102 = scmp.ne.s32.totalorder %s97, %s99
    %p103 = scmp.eq.s32.totalorder %s21, 0
    %p104 = por %p102, %p103
    %p105 = scmp.ne.s32.totalorder %s97, %s99
    %p106 = scmp.eq.s32.totalorder %s26, 1
    %p107 = por %p105, %p106
    %p108 = scmp.ne.s32.totalorder %s99, %s100
    %p109 = scmp.eq.s32.totalorder %s26, 0
    %p110 = por %p108, %p109
    %p111 = scmp.ne.s32.totalorder %s99, %s100
    %p112 = scmp.eq.s32.totalorder %s27, 1
    %p113 = por %p111, %p112
    %p115 = scmp.ne.s32.totalorder %s100, %s114
    %p116 = scmp.eq.s32.totalorder %s27, 0
    %p117 = por %p115, %p116
    %s119 = sadd.s32 %s118, 1
    %p122 = scmp.eq.s32.totalorder %s21, 1
    %p123 = scmp.ne.s32.totalorder %s118, %s120
    %p124 = scmp.eq.s32.totalorder %s21, 0
    %p125 = por %p123, %p124
    %p126 = scmp.ne.s32.totalorder %s118, %s120
    %p127 = scmp.eq.s32.totalorder %s26, 1
    %p128 = por %p126, %p127
    %p129 = scmp.ne.s32.totalorder %s120, %s121
    %p130 = scmp.eq.s32.totalorder %s26, 0
    %p131 = por %p129, %p130
    %p132 = scmp.ne.s32.totalorder %s120, %s121
    %p133 = scmp.eq.s32.totalorder %s27, 1
    %p134 = por %p132, %p133
    %p136 = scmp.ne.s32.totalorder %s121, %s135
    %p137 = scmp.eq.s32.totalorder %s27, 0
    %p138 = por %p136, %p137
    %s140 = sadd.s32 %s139, 1
    %p143 = scmp.eq.s32.totalorder %s21, 1
    %p144 = scmp.ne.s32.totalorder %s139, %s141
    %p145 = scmp.eq.s32.totalorder %s21, 0
    %p146 = por %p144, %p145
    %p147 = scmp.ne.s32.totalorder %s139, %s141
    %p148 = scmp.eq.s32.totalorder %s26, 1
    %p149 = por %p147, %p148
    %p150 = scmp.ne.s32.totalorder %s141, %s142
    %p151 = scmp.eq.s32.totalorder %s26, 0
    %p152 = por %p150, %p151
    %p153 = scmp.ne.s32.totalorder %s141, %s142
    %p154 = scmp.eq.s32.totalorder %s27, 1
    %p155 = por %p153, %p154
    %p157 = scmp.ne.s32.totalorder %s142, %s156
    %p158 = scmp.eq.s32.totalorder %s27, 0
    %p159 = por %p157, %p158
    %s161 = sadd.s32 %s160, 1
    %p164 = scmp.eq.s32.totalorder %s21, 1
    %p165 = scmp.ne.s32.totalorder %s160, %s162
    %p166 = scmp.eq.s32.totalorder %s21, 0
    %p167 = por %p165, %p166
    %p168 = scmp.ne.s32.totalorder %s160, %s162
    %p169 = scmp.eq.s32.totalorder %s26, 1
    %p170 = por %p168, %p169
    %p171 = scmp.ne.s32.totalorder %s162, %s163
    %p172 = scmp.eq.s32.totalorder %s26, 0
    %p173 = por %p171, %p172
    %p174 = scmp.ne.s32.totalorder %s162, %s163
    %p175 = scmp.eq.s32.totalorder %s27, 1
    %p176 = por %p174, %p175
    %p178 = scmp.ne.s32.totalorder %s163, %s177
    %p179 = scmp.eq.s32.totalorder %s27, 0
    %p180 = por %p178, %p179
    %s182 = sadd.s32 %s181, 1
    %p185 = scmp.eq.s32.totalorder %s21, 1
    %p186 = scmp.ne.s32.totalorder %s181, %s183
    %p187 = scmp.eq.s32.totalorder %s21, 0
    %p188 = por %p186, %p187
    %p189 = scmp.ne.s32.totalorder %s181, %s183
    %p190 = scmp.eq.s32.totalorder %s26, 1
    %p191 = por %p189, %p190
    %p192 = scmp.ne.s32.totalorder %s183, %s184
    %p193 = scmp.eq.s32.totalorder %s26, 0
    %p194 = por %p192, %p193
    %p195 = scmp.ne.s32.totalorder %s183, %s184
    %p196 = scmp.eq.s32.totalorder %s27, 1
    %p197 = por %p195, %p196
    %p199 = scmp.ne.s32.totalorder %s184, %s198
    %p200 = scmp.eq.s32.totalorder %s27, 0
    %p201 = por %p199, %p200
    %s203 = sadd.s32 %s202, 1
    %p206 = scmp.eq.s32.totalorder %s21, 1
    %p207 = scmp.ne.s32.totalorder %s202, %s204
    %p208 = scmp.eq.s32.totalorder %s21, 0
    %p209 = por %p207, %p208
    %p210 = scmp.ne.s32.totalorder %s202, %s204
    %p211 = scmp.eq.s32.totalorder %s26, 1
    %p212 = por %p210, %p211
    %p213 = scmp.ne.s32.totalorder %s204, %s205
    %p214 = scmp.eq.s32.totalorder %s26, 0
    %p215 = por %p213, %p214
    %p216 = scmp.ne.s32.totalorder %s204, %s205
    %p217 = scmp.eq.s32.totalorder %s27, 1
    %p218 = por %p216, %p217
    %p220 = scmp.ne.s32.totalorder %s205, %s219
    %p221 = scmp.eq.s32.totalorder %s27, 0
    %p222 = por %p220, %p221
    %s224 = sadd.s32 %s223, 1
    %p227 = scmp.eq.s32.totalorder %s21, 1
    %p228 = scmp.ne.s32.totalorder %s223, %s225
    %p229 = scmp.eq.s32.totalorder %s21, 0
    %p230 = por %p228, %p229
    %p231 = scmp.ne.s32.totalorder %s223, %s225
    %p232 = scmp.eq.s32.totalorder %s26, 1
    %p233 = por %p231, %p232
    %p234 = scmp.ne.s32.totalorder %s225, %s226
    %p235 = scmp.eq.s32.totalorder %s26, 0
    %p236 = por %p234, %p235
    %p237 = scmp.ne.s32.totalorder %s225, %s226
    %p238 = scmp.eq.s32.totalorder %s27, 1
    %p239 = por %p237, %p238
    %p241 = scmp.ne.s32.totalorder %s226, %s240
    %p242 = scmp.eq.s32.totalorder %s27, 0
    %p243 = por %p241, %p242
    %s245 = sadd.s32 %s244, 1
    %p248 = scmp.eq.s32.totalorder %s21, 1
    %p249 = scmp.ne.s32.totalorder %s244, %s246
    %p250 = scmp.eq.s32.totalorder %s21, 0
    %p251 = por %p249, %p250
    %p252 = scmp.ne.s32.totalorder %s244, %s246
    %p253 = scmp.eq.s32.totalorder %s26, 1
    %p254 = por %p252, %p253
    %p255 = scmp.ne.s32.totalorder %s246, %s247
    %p256 = scmp.eq.s32.totalorder %s26, 0
    %p257 = por %p255, %p256
    %p258 = scmp.ne.s32.totalorder %s246, %s247
    %p259 = scmp.eq.s32.totalorder %s27, 1
    %p260 = por %p258, %p259
    %p262 = scmp.ne.s32.totalorder %s247, %s261
    %p263 = scmp.eq.s32.totalorder %s27, 0
    %p264 = por %p262, %p263
    %s266 = sadd.s32 %s265, 1
    %p269 = scmp.eq.s32.totalorder %s21, 1
    %p270 = scmp.ne.s32.totalorder %s265, %s267
    %p271 = scmp.eq.s32.totalorder %s21, 0
    %p272 = por %p270, %p271
    %p273 = scmp.ne.s32.totalorder %s265, %s267
    %p274 = scmp.eq.s32.totalorder %s26, 1
    %p275 = por %p273, %p274
    %p276 = scmp.ne.s32.totalorder %s267, %s268
    %p277 = scmp.eq.s32.totalorder %s26, 0
    %p278 = por %p276, %p277
    %p279 = scmp.ne.s32.totalorder %s267, %s268
    %p280 = scmp.eq.s32.totalorder %s27, 1
    %p281 = por %p279, %p280
    %p283 = scmp.ne.s32.totalorder %s268, %s282
    %p284 = scmp.eq.s32.totalorder %s27, 0
    %p285 = por %p283, %p284
    %s287 = sadd.s32 %s286, 1
    %p290 = scmp.eq.s32.totalorder %s21, 1
    %p291 = scmp.ne.s32.totalorder %s286, %s288
    %p292 = scmp.eq.s32.totalorder %s21, 0
    %p293 = por %p291, %p292
    %p294 = scmp.ne.s32.totalorder %s286, %s288
    %p295 = scmp.eq.s32.totalorder %s26, 1
    %p296 = por %p294, %p295
    %p297 = scmp.ne.s32.totalorder %s288, %s289
    %p298 = scmp.eq.s32.totalorder %s26, 0
    %p299 = por %p297, %p298
    %p300 = scmp.ne.s32.totalorder %s288, %s289
    %p301 = scmp.eq.s32.totalorder %s27, 1
    %p302 = por %p300, %p301
    %p304 = scmp.ne.s32.totalorder %s289, %s303
    %p305 = scmp.eq.s32.totalorder %s27, 0
    %p306 = por %p304, %p305
    %s308 = sadd.s32 %s307, 1
    %p311 = scmp.eq.s32.totalorder %s21, 1
    %p312 = scmp.ne.s32.totalorder %s307, %s309
    %p313 = scmp.eq.s32.totalorder %s21, 0
    %p314 = por %p312, %p313
    %p315 = scmp.ne.s32.totalorder %s307, %s309
    %p316 = scmp.eq.s32.totalorder %s26, 1
    %p317 = por %p315, %p316
    %p318 = scmp.ne.s32.totalorder %s309, %s310
    %p319 = scmp.eq.s32.totalorder %s26, 0
    %p320 = por %p318, %p319
    %p321 = scmp.ne.s32.totalorder %s309, %s310
    %p322 = scmp.eq.s32.totalorder %s27, 1
    %p323 = por %p321, %p322
    %p325 = scmp.ne.s32.totalorder %s310, %s324
    %p326 = scmp.eq.s32.totalorder %s27, 0
    %p327 = por %p325, %p326
    %s329 = sadd.s32 %s328, 1
    %p332 = scmp.eq.s32.totalorder %s21, 1
    %p333 = scmp.ne.s32.totalorder %s328, %s330
    %p334 = scmp.eq.s32.totalorder %s21, 0
    %p335 = por %p333, %p334
    %p336 = scmp.ne.s32.totalorder %s328, %s330
    %p337 = scmp.eq.s32.totalorder %s26, 1
    %p338 = por %p336, %p337
    %p339 = scmp.ne.s32.totalorder %s330, %s331
    %p340 = scmp.eq.s32.totalorder %s26, 0
    %p341 = por %p339, %p340
    %p342 = scmp.ne.s32.totalorder %s330, %s331
    %p343 = scmp.eq.s32.totalorder %s27, 1
    %p344 = por %p342, %p343
    %p346 = scmp.ne.s32.totalorder %s331, %s345
    %p347 = scmp.eq.s32.totalorder %s27, 0
    %p348 = por %p346, %p347
    %s349 = ssub.s32 %s21, %s28
    %p350 = scmp.eq.s32.totalorder %s349, 0
    %s352 = sadd.s32 %s351, 1
    %s353 = scalar_select %p350, %s351, %s352
    %p356 = pneg %p350
    %p357 = scmp.eq.s32.totalorder %s21, 1
    %p358 = por %p356, %p357
    %p359 = scmp.ne.s32.totalorder %s351, %s354
    %p360 = scmp.eq.s32.totalorder %s21, 0
    %p361 = por %p359, %p360
    %p362 = scmp.ne.s32.totalorder %s351, %s354
    %p363 = scmp.eq.s32.totalorder %s26, 1
    %p364 = por %p362, %p363
    %p365 = scmp.ne.s32.totalorder %s354, %s355
    %p366 = scmp.eq.s32.totalorder %s26, 0
    %p367 = por %p365, %p366
    %p368 = scmp.ne.s32.totalorder %s354, %s355
    %p369 = scmp.eq.s32.totalorder %s27, 1
    %p370 = por %p368, %p369
    %p372 = scmp.ne.s32.totalorder %s355, %s371
    %p373 = scmp.eq.s32.totalorder %s27, 0
    %p374 = por %p372, %p373
    %p375 = scmp.le.s32.totalorder 1, %s21
    %p376 = scmp.lt.s32.totalorder %s21, 3
    %p377 = pnand %p375, %p376
    %p378 = pneg %p377
    // Predicated region
    $region9: #{tpu_custom_call.1} parent=5 // pred_check
      _
    $region10: #{tpu_custom_call.1} parent=5 // pred_check_branch
      %380 = sbr.rel (%p377) target = $region12
    $region11: #{tpu_custom_call.1} parent=5 // pred_region
      %s381 = ssub.s32 %s21, 1
      // Predicated region
      $region13: #{tpu_custom_call.1} parent=11 // pred_check
        %p382 = pneg %p68
      $region14: #{tpu_custom_call.1} parent=11 // pred_check_branch
        %384 = sbr.rel (%p382) target = $region16
      $region15: #{tpu_custom_call.1} parent=11 // pred_region
        _
      $region16: #{tpu_custom_call.1} parent=11 // pred_fallthru
        _
      // Predicated region
      $region17: #{tpu_custom_call.1} parent=11 // pred_check
        %p385 = pneg %p89
      $region18: #{tpu_custom_call.1} parent=11 // pred_check_branch
        %387 = sbr.rel (%p385) target = $region20
      $region19: #{tpu_custom_call.1} parent=11 // pred_region
        _
      $region20: #{tpu_custom_call.1} parent=11 // pred_fallthru
        _
      // Predicated region
      $region21: #{tpu_custom_call.1} parent=11 // pred_check
        %p388 = pneg %p110
      $region22: #{tpu_custom_call.1} parent=11 // pred_check_branch
        %390 = sbr.rel (%p388) target = $region24
      $region23: #{tpu_custom_call.1} parent=11 // pred_region
        _
      $region24: #{tpu_custom_call.1} parent=11 // pred_fallthru
        _
      // Predicated region
      $region25: #{tpu_custom_call.1} parent=11 // pred_check
        %p391 = pneg %p131
      $region26: #{tpu_custom_call.1} parent=11 // pred_check_branch
        %393 = sbr.rel (%p391) target = $region28
      $region27: #{tpu_custom_call.1} parent=11 // pred_region
        _
      $region28: #{tpu_custom_call.1} parent=11 // pred_fallthru
        _
      // Predicated region
      $region29: #{tpu_custom_call.1} parent=11 // pred_check
        %p394 = pneg %p152
      $region30: #{tpu_custom_call.1} parent=11 // pred_check_branch
        %396 = sbr.rel (%p394) target = $region32
      $region31: #{tpu_custom_call.1} parent=11 // pred_region
        _
      $region32: #{tpu_custom_call.1} parent=11 // pred_fallthru
        _
      // Predicated region
      $region33: #{tpu_custom_call.1} parent=11 // pred_check
        %p397 = pneg %p173
      $region34: #{tpu_custom_call.1} parent=11 // pred_check_branch
        %399 = sbr.rel (%p397) target = $region36
      $region35: #{tpu_custom_call.1} parent=11 // pred_region
        _
      $region36: #{tpu_custom_call.1} parent=11 // pred_fallthru
        _
      // Predicated region
      $region37: #{tpu_custom_call.1} parent=11 // pred_check
        %p400 = pneg %p194
      $region38: #{tpu_custom_call.1} parent=11 // pred_check_branch
        %402 = sbr.rel (%p400) target = $region40
      $region39: #{tpu_custom_call.1} parent=11 // pred_region
        _
      $region40: #{tpu_custom_call.1} parent=11 // pred_fallthru
        _
      // Predicated region
      $region41: #{tpu_custom_call.1} parent=11 // pred_check
        %p403 = pneg %p215
      $region42: #{tpu_custom_call.1} parent=11 // pred_check_branch
        %405 = sbr.rel (%p403) target = $region44
      $region43: #{tpu_custom_call.1} parent=11 // pred_region
        _
      $region44: #{tpu_custom_call.1} parent=11 // pred_fallthru
        _
      // Predicated region
      $region45: #{tpu_custom_call.1} parent=11 // pred_check
        %p406 = pneg %p236
      $region46: #{tpu_custom_call.1} parent=11 // pred_check_branch
        %408 = sbr.rel (%p406) target = $region48
      $region47: #{tpu_custom_call.1} parent=11 // pred_region
        _
      $region48: #{tpu_custom_call.1} parent=11 // pred_fallthru
        _
      // Predicated region
      $region49: #{tpu_custom_call.1} parent=11 // pred_check
        %p409 = pneg %p257
      $region50: #{tpu_custom_call.1} parent=11 // pred_check_branch
        %411 = sbr.rel (%p409) target = $region52
      $region51: #{tpu_custom_call.1} parent=11 // pred_region
        _
      $region52: #{tpu_custom_call.1} parent=11 // pred_fallthru
        _
      // Predicated region
      $region53: #{tpu_custom_call.1} parent=11 // pred_check
        %p412 = pneg %p278
      $region54: #{tpu_custom_call.1} parent=11 // pred_check_branch
        %414 = sbr.rel (%p412) target = $region56
      $region55: #{tpu_custom_call.1} parent=11 // pred_region
        _
      $region56: #{tpu_custom_call.1} parent=11 // pred_fallthru
        _
      // Predicated region
      $region57: #{tpu_custom_call.1} parent=11 // pred_check
        %p415 = pneg %p299
      $region58: #{tpu_custom_call.1} parent=11 // pred_check_branch
        %417 = sbr.rel (%p415) target = $region60
      $region59: #{tpu_custom_call.1} parent=11 // pred_region
        _
      $region60: #{tpu_custom_call.1} parent=11 // pred_fallthru
        _
      // Predicated region
      $region61: #{tpu_custom_call.1} parent=11 // pred_check
        %p418 = pneg %p320
      $region62: #{tpu_custom_call.1} parent=11 // pred_check_branch
        %420 = sbr.rel (%p418) target = $region64
      $region63: #{tpu_custom_call.1} parent=11 // pred_region
        _
      $region64: #{tpu_custom_call.1} parent=11 // pred_fallthru
        _
      // Predicated region
      $region65: #{tpu_custom_call.1} parent=11 // pred_check
        %p421 = pneg %p341
      $region66: #{tpu_custom_call.1} parent=11 // pred_check_branch
        %423 = sbr.rel (%p421) target = $region68
      $region67: #{tpu_custom_call.1} parent=11 // pred_region
        _
      $region68: #{tpu_custom_call.1} parent=11 // pred_fallthru
        _
    $region12: #{tpu_custom_call.1} parent=5 // pred_fallthru
      _
    %p424 = scmp.lt.s32.totalorder %s21, 2
    // Predicated region
    $region69: #{tpu_custom_call.1} parent=5 // pred_check
      %p425 = pneg %p424
    $region70: #{tpu_custom_call.1} parent=5 // pred_check_branch
      %427 = sbr.rel (%p425) target = $region72
    $region71: #{tpu_custom_call.1} parent=5 // pred_region
      // Predicated region
      $region73: #{tpu_custom_call.1} parent=71 // pred_check
        %p428 = pneg %p41
      $region74: #{tpu_custom_call.1} parent=71 // pred_check_branch
        %430 = sbr.rel (%p428) target = $region76
      $region75: #{tpu_custom_call.1} parent=71 // pred_region
        %s431 = smul.u32 8, %s21
        %p432 = scmp.lt.s32.totalorder %s431, 15
        %s433 = scalar_select %p432, %s431, 15
        %s434 = smul.addr %s433, 8
        %s435 = scalar_lea.vmem %s0, %s434
        %s436 = smul.u32 8, %s21
      $region76: #{tpu_custom_call.1} parent=71 // pred_fallthru
        _
    $region72: #{tpu_custom_call.1} parent=5 // pred_fallthru
      _
    %p437 = scmp.le.s32.totalorder 1, %s21
    %p438 = scmp.lt.s32.totalorder %s21, 3
    %p439 = pnand %p437, %p438
    %p440 = pneg %p439
    // Predicated region
    $region77: #{tpu_custom_call.1} parent=5 // pred_check
      _
    $region78: #{tpu_custom_call.1} parent=5 // pred_check_branch
      %442 = sbr.rel (%p439) target = $region80
    $region79: #{tpu_custom_call.1} parent=5 // pred_region
      %s443 = ssub.s32 %s21, 1
      %s444 = smul.u32 8, %s26
      %p445 = scmp.lt.s32.totalorder %s444, 15
      %s446 = scalar_select %p445, %s444, 15
      %s447 = smul.addr %s446, 8
      %s448 = scalar_lea.vmem %s0, %s447
      %p449 = pneg %p47
      %p450 = pneg %p44
      %p451 = pneg %p68
      %p452 = pneg %p65
      %p453 = pneg %p89
      %p454 = pneg %p86
      %p455 = pneg %p110
      %p456 = pneg %p107
      %p457 = pneg %p131
      %p458 = pneg %p128
      %p459 = pneg %p152
      %p460 = pneg %p149
      %p461 = pneg %p173
      %p462 = pneg %p170
      %p463 = pneg %p194
      %p464 = pneg %p191
      %p465 = pneg %p215
      %p466 = pneg %p212
      %p467 = pneg %p236
      %p468 = pneg %p233
      %p469 = pneg %p257
      %p470 = pneg %p254
      %p471 = pneg %p278
      %p472 = pneg %p275
      %p473 = pneg %p299
      %p474 = pneg %p296
      %p475 = pneg %p320
      %p476 = pneg %p317
      %p477 = pneg %p341
      %p478 = pneg %p338
      %p479 = pneg %p367
      %p480 = pneg %p364
      %s481 = smul.u32 8, %s26
      %p482 = scmp.lt.s32.totalorder %s481, 15
      %s483 = scalar_select %p482, %s481, 15
      %s484 = smul.addr %s483, 8
      %s485 = scalar_lea.vmem %s15, %s484
      %s486 = smul.u32 8, %s26
      %p487 = scmp.lt.s32.totalorder %s486, 15
      %s488 = scalar_select %p487, %s486, 15
      %s489 = smul.addr %s488, 8
      %s490 = scalar_lea.vmem %s0, %s489
      %s491 = smul.u32 8, %s26
      %s492 = smul.u32 8, %s26
      %p493 = scmp.lt.s32.totalorder %s492, 15
      %s494 = scalar_select %p493, %s492, 15
      %s495 = smul.addr %s494, 8
      %s496 = scalar_lea.vmem %s15, %s495
      %s497 = smul.u32 8, %s26
      %v498 = vld [vmem:[%s490] sm:$0xff]
      %v499 = vld [vmem:[%s490 + $0x8] sm:$0xff]
      %v500 = vld [vmem:[%s490 + $0x10] sm:$0xff]
      %v501 = vld [vmem:[%s490 + $0x18] sm:$0xff]
      %v502 = vld [vmem:[%s490 + $0x20] sm:$0xff]
      %v503 = vld [vmem:[%s490 + $0x28] sm:$0xff]
      %v504 = vld [vmem:[%s490 + $0x30] sm:$0xff]
      %v505 = vld [vmem:[%s490 + $0x38] sm:$0xff]
      %v506 = vld [vmem:[%s1] sm:$0x1]
      %v507 = vld [vmem:[%s2] sm:$0x1]
      %vm508 = vcmask 261120
      %v509 = vsel %vm508, %v498, 0.0
      %510 = vadd.xlane.f32.xlu0 %v509
      %v511 = vpop.xlane.xlu0 %510
      %v512 = vsel %vm508, %v499, 0.0
      %513 = vadd.xlane.f32.xlu0 %v512
      %v514 = vpop.xlane.xlu0 %513
      %v515 = vsel %vm508, %v500, 0.0
      %516 = vadd.xlane.f32.xlu0 %v515
      %v517 = vpop.xlane.xlu0 %516
      %v518 = vsel %vm508, %v501, 0.0
      %519 = vadd.xlane.f32.xlu0 %v518
      %v520 = vpop.xlane.xlu0 %519
      %v521 = vsel %vm508, %v502, 0.0
      %522 = vadd.xlane.f32.xlu0 %v521
      %v523 = vpop.xlane.xlu0 %522
      %v524 = vsel %vm508, %v503, 0.0
      %525 = vadd.xlane.f32.xlu0 %v524
      %v526 = vpop.xlane.xlu0 %525
      %v527 = vsel %vm508, %v504, 0.0
      %528 = vadd.xlane.f32.xlu0 %v527
      %v529 = vpop.xlane.xlu0 %528
      %v530 = vsel %vm508, %v505, 0.0
      %531 = vadd.xlane.f32.xlu0 %v530
      %v532 = vpop.xlane.xlu0 %531
      %v533 = vrcp.pop 32.0
      %v534 = vmul.f32 %v511, %v533
      %v535 = vmul.f32 %v514, %v533
      %v536 = vmul.f32 %v517, %v533
      %v537 = vmul.f32 %v520, %v533
      %v538 = vmul.f32 %v523, %v533
      %v539 = vmul.f32 %v526, %v533
      %v540 = vmul.f32 %v529, %v533
      %v541 = vmul.f32 %v532, %v533
      %v542 = vsub.f32 %v498, %v534
      %v543 = vsub.f32 %v499, %v535
      %v544 = vsub.f32 %v500, %v536
      %v545 = vsub.f32 %v501, %v537
      %v546 = vsub.f32 %v502, %v538
      %v547 = vsub.f32 %v503, %v539
      %v548 = vsub.f32 %v504, %v540
      %v549 = vsub.f32 %v505, %v541
      %v550 = vmul.f32 %v542, %v542
      %v551 = vmul.f32 %v543, %v543
      %v552 = vmul.f32 %v544, %v544
      %v553 = vmul.f32 %v545, %v545
      %v554 = vmul.f32 %v546, %v546
      %v555 = vmul.f32 %v547, %v547
      %v556 = vmul.f32 %v548, %v548
      %v557 = vmul.f32 %v549, %v549
      %v558 = vsel %vm508, %v550, 0.0
      %559 = vadd.xlane.f32.xlu0 %v558
      %v560 = vpop.xlane.xlu0 %559
      %v561 = vsel %vm508, %v551, 0.0
      %562 = vadd.xlane.f32.xlu0 %v561
      %v563 = vpop.xlane.xlu0 %562
      %v564 = vsel %vm508, %v552, 0.0
      %565 = vadd.xlane.f32.xlu0 %v564
      %v566 = vpop.xlane.xlu0 %565
      %v567 = vsel %vm508, %v553, 0.0
      %568 = vadd.xlane.f32.xlu0 %v567
      %v569 = vpop.xlane.xlu0 %568
      %v570 = vsel %vm508, %v554, 0.0
      %571 = vadd.xlane.f32.xlu0 %v570
      %v572 = vpop.xlane.xlu0 %571
      %v573 = vsel %vm508, %v555, 0.0
      %574 = vadd.xlane.f32.xlu0 %v573
      %v575 = vpop.xlane.xlu0 %574
      %v576 = vsel %vm508, %v556, 0.0
      %577 = vadd.xlane.f32.xlu0 %v576
      %v578 = vpop.xlane.xlu0 %577
      %v579 = vsel %vm508, %v557, 0.0
      %580 = vadd.xlane.f32.xlu0 %v579
      %v581 = vpop.xlane.xlu0 %580
      %v582 = vmul.f32 %v560, %v533
      %v583 = vmul.f32 %v563, %v533
      %v584 = vmul.f32 %v566, %v533
      %v585 = vmul.f32 %v569, %v533
      %v586 = vmul.f32 %v572, %v533
      %v587 = vmul.f32 %v575, %v533
      %v588 = vmul.f32 %v578, %v533
      %v589 = vmul.f32 %v581, %v533
      %v590 = vadd.f32 %v582, 1e-05
      %v591 = vadd.f32 %v583, 1e-05
      %v592 = vadd.f32 %v584, 1e-05
      %v593 = vadd.f32 %v585, 1e-05
      %v594 = vadd.f32 %v586, 1e-05
      %v595 = vadd.f32 %v587, 1e-05
      %v596 = vadd.f32 %v588, 1e-05
      %v597 = vadd.f32 %v589, 1e-05
      %v598 = vrsqrt.pop %v590
      %v599 = vrsqrt.pop %v591
      %v600 = vrsqrt.pop %v592
      %v601 = vrsqrt.pop %v593
      %v602 = vrsqrt.pop %v594
      %v603 = vrsqrt.pop %v595
      %v604 = vrsqrt.pop %v596
      %v605 = vrsqrt.pop %v597
      %v606 = vmul.f32 %v542, %v598
      %v607 = vmul.f32 %v543, %v599
      %v608 = vmul.f32 %v544, %v600
      %v609 = vmul.f32 %v545, %v601
      %v610 = vmul.f32 %v546, %v602
      %v611 = vmul.f32 %v547, %v603
      %v612 = vmul.f32 %v548, %v604
      %v613 = vmul.f32 %v549, %v605
      %v615 = vlaneseq
      %v616 = vshrl.u32 %v615, 7
      %v617 = vsub.s32 0, %v616
      %v618 = vrot.slane %v506, %v617
      %v620 = vmul.f32 %v606, %v618
      %v621 = vmul.f32 %v607, %v618
      %v622 = vmul.f32 %v608, %v618
      %v623 = vmul.f32 %v609, %v618
      %v624 = vmul.f32 %v610, %v618
      %v625 = vmul.f32 %v611, %v618
      %v626 = vmul.f32 %v612, %v618
      %v627 = vmul.f32 %v613, %v618
      %v629 = vlaneseq
      %v630 = vshrl.u32 %v629, 7
      %v631 = vsub.s32 0, %v630
      %v632 = vrot.slane %v507, %v631
      %v634 = vadd.f32 %v620, %v632
      %v635 = vadd.f32 %v621, %v632
      %v636 = vadd.f32 %v622, %v632
      %v637 = vadd.f32 %v623, %v632
      %v638 = vadd.f32 %v624, %v632
      %v639 = vadd.f32 %v625, %v632
      %v640 = vadd.f32 %v626, %v632
      %v641 = vadd.f32 %v627, %v632
      %v642 = vld [vmem:[%s3] sm:$0xff]
      %v643 = vld [vmem:[%s3 + $0x8] sm:$0xff]
      %v644 = vld [vmem:[%s3 + $0x10] sm:$0xff]
      %v645 = vld [vmem:[%s3 + $0x18] sm:$0xff]
      %v646 = vld [vmem:[%s4] sm:$0x1]
      %v648 = vlaneseq
      %v649 = vshrl.u32 %v648, 7
      %v650 = vsub.s32 0, %v649
      %v651 = vrot.slane %v646, %v650
      %v654 = vsel %vm508, %v634, 0
      %v657 = vsel %vm508, %v635, 0
      %v660 = vsel %vm508, %v636, 0
      %v663 = vsel %vm508, %v637, 0
      %v666 = vsel %vm508, %v638, 0
      %v669 = vsel %vm508, %v639, 0
      %v672 = vsel %vm508, %v640, 0
      %v675 = vsel %vm508, %v641, 0
      %677 = vmatprep.subr.mxu0 0.0
      %678 = vmatpush1.msra.mxu0 %v642
      %679 = vmatprep.subr.mxu0 0.0
      %680 = vmatpush1.msra.mxu0 %v643
      %681 = vmatprep.subr.mxu0 0.0
      %682 = vmatpush1.msra.mxu0 %v644
      %683 = vmatprep.subr.mxu0 0.0
      %684 = vmatpush1.msra.mxu0 %v645
      %685 = vmatprep.subr.mxu0 0.0
      %686 = vmatpush1.msra.mxu0 0.0
      %687 = vmatprep.subr.mxu0 0.0
      %688 = vmatpush1.msra.mxu0 0.0
      %689 = vmatprep.subr.mxu0 0.0
      %690 = vmatpush1.msra.mxu0 0.0
      %691 = vmatprep.subr.mxu0 0.0
      %692 = vmatpush1.msra.mxu0 0.0
      %693 = vmatprep.subr.mxu0 0.0
      %694 = vmatpush1.msra.mxu0 0.0
      %695 = vmatprep.subr.mxu0 0.0
      %696 = vmatpush1.msra.mxu0 0.0
      %697 = vmatprep.subr.mxu0 0.0
      %698 = vmatpush1.msra.mxu0 0.0
      %699 = vmatprep.subr.mxu0 0.0
      %700 = vmatpush1.msra.mxu0 0.0
      %701 = vmatprep.subr.mxu0 0.0
      %702 = vmatpush1.msra.mxu0 0.0
      %703 = vmatprep.subr.mxu0 0.0
      %704 = vmatpush1.msra.mxu0 0.0
      %705 = vmatprep.subr.mxu0 0.0
      %706 = vmatpush1.msra.mxu0 0.0
      %707 = vmatprep.subr.mxu0 0.0
      %708 = vmatpush1.msra.mxu0 0.0
      %709 = vmatprep.subr.mxu0 0.0
      %710 = vmatpush1.msra.mxu0 0.0
      %711 = vmatprep.subr.mxu0 0.0
      %712 = vmatpush1.msra.mxu0 0.0
      %713 = vmatprep.subr.mxu0 0.0
      %714 = vmatpush1.msra.mxu0 0.0
      %715 = vmatprep.subr.mxu0 0.0
      %716 = vmatpush1.msra.mxu0 0.0
      %717 = vmatprep.subr.mxu0 0.0
      %718 = vmatpush1.msra.mxu0 0.0
      %719 = vmatprep.subr.mxu0 0.0
      %720 = vmatpush1.msra.mxu0 0.0
      %721 = vmatprep.subr.mxu0 0.0
      %722 = vmatpush1.msra.mxu0 0.0
      %723 = vmatprep.subr.mxu0 0.0
      %724 = vmatpush1.msra.mxu0 0.0
      %725 = vmatprep.subr.mxu0 0.0
      %726 = vmatpush1.msra.mxu0 0.0
      %727 = vmatprep.subr.mxu0 0.0
      %728 = vmatpush1.msra.mxu0 0.0
      %729 = vmatprep.subr.mxu0 0.0
      %730 = vmatpush1.msra.mxu0 0.0
      %731 = vmatprep.subr.mxu0 0.0
      %732 = vmatpush1.msra.mxu0 0.0
      %733 = vmatprep.subr.mxu0 0.0
      %734 = vmatpush1.msra.mxu0 0.0
      %735 = vmatprep.subr.mxu0 0.0
      %736 = vmatpush1.msra.mxu0 0.0
      %737 = vmatprep.subr.mxu0 0.0
      %738 = vmatpush1.msra.mxu0 0.0
      %739 = vmatprep.subr.mxu0 0.0
      %740 = vmatpush1.msra.mxu0 0.0
      %741 = vmatprep.mubr.f32.mxu0 0.0
      %742 = vmatmul.mubr.f32.gmra.mrb[0].mxu0 %v654
      %v743 = vpop.f32.mrb[0].mxu0
      %v744 = vadd.f32 %v651, %v743
      %v745 = vpop.f32.mrb[0].mxu0
      %746 = vmatprep.mubr.f32.mxu0 0.0
      %747 = vmatmul.mubr.f32.gmra.mrb[0].mxu0 %v657
      %v748 = vpop.f32.mrb[0].mxu0
      %v749 = vadd.f32 %v651, %v748
      %v750 = vpop.f32.mrb[0].mxu0
      %751 = vmatprep.mubr.f32.mxu0 0.0
      %752 = vmatmul.mubr.f32.gmra.mrb[0].mxu0 %v660
      %v753 = vpop.f32.mrb[0].mxu0
      %v754 = vadd.f32 %v651, %v753
      %v755 = vpop.f32.mrb[0].mxu0
      %756 = vmatprep.mubr.f32.mxu0 0.0
      %757 = vmatmul.mubr.f32.gmra.mrb[0].mxu0 %v663
      %v758 = vpop.f32.mrb[0].mxu0
      %v759 = vadd.f32 %v651, %v758
      %v760 = vpop.f32.mrb[0].mxu0
      %761 = vmatprep.mubr.f32.mxu0 0.0
      %762 = vmatmul.mubr.f32.gmra.mrb[0].mxu0 %v666
      %v763 = vpop.f32.mrb[0].mxu0
      %v764 = vadd.f32 %v651, %v763
      %v765 = vpop.f32.mrb[0].mxu0
      %766 = vmatprep.mubr.f32.mxu0 0.0
      %767 = vmatmul.mubr.f32.gmra.mrb[0].mxu0 %v669
      %v768 = vpop.f32.mrb[0].mxu0
      %v769 = vadd.f32 %v651, %v768
      %v770 = vpop.f32.mrb[0].mxu0
      %771 = vmatprep.mubr.f32.mxu0 0.0
      %772 = vmatmul.mubr.f32.gmra.mrb[0].mxu0 %v672
      %v773 = vpop.f32.mrb[0].mxu0
      %v774 = vadd.f32 %v651, %v773
      %v775 = vpop.f32.mrb[0].mxu0
      %776 = vmatprep.mubr.f32.mxu0 0.0
      %777 = vmatmul.mubr.f32.gmra.mrb[0].mxu0 %v675
      %v778 = vpop.f32.mrb[0].mxu0
      %v779 = vadd.f32 %v651, %v778
      %v780 = vpop.f32.mrb[0].mxu0
      %781 = vdwg.mxu0
      %790 = vrot.lane.b32.xlu0 %v744, 120
      %v791 = vpop.permute.xlu0 %790
      %792 = vrot.lane.b32.xlu0 %v749, 120
      %v793 = vpop.permute.xlu0 %792
      %794 = vrot.lane.b32.xlu0 %v754, 120
      %v795 = vpop.permute.xlu0 %794
      %796 = vrot.lane.b32.xlu0 %v759, 120
      %v797 = vpop.permute.xlu0 %796
      %798 = vrot.lane.b32.xlu0 %v764, 120
      %v799 = vpop.permute.xlu0 %798
      %800 = vrot.lane.b32.xlu0 %v769, 120
      %v801 = vpop.permute.xlu0 %800
      %802 = vrot.lane.b32.xlu0 %v774, 120
      %v803 = vpop.permute.xlu0 %802
      %804 = vrot.lane.b32.xlu0 %v779, 120
      %v805 = vpop.permute.xlu0 %804
      %806 = vrot.lane.b32.xlu0 %v744, 112
      %v807 = vpop.permute.xlu0 %806
      %808 = vrot.lane.b32.xlu0 %v749, 112
      %v809 = vpop.permute.xlu0 %808
      %810 = vrot.lane.b32.xlu0 %v754, 112
      %v811 = vpop.permute.xlu0 %810
      %812 = vrot.lane.b32.xlu0 %v759, 112
      %v813 = vpop.permute.xlu0 %812
      %814 = vrot.lane.b32.xlu0 %v764, 112
      %v815 = vpop.permute.xlu0 %814
      %816 = vrot.lane.b32.xlu0 %v769, 112
      %v817 = vpop.permute.xlu0 %816
      %818 = vrot.lane.b32.xlu0 %v774, 112
      %v819 = vpop.permute.xlu0 %818
      %820 = vrot.lane.b32.xlu0 %v779, 112
      %v821 = vpop.permute.xlu0 %820
      %822 = vrot.lane.b32.xlu0 %v744, 104
      %v823 = vpop.permute.xlu0 %822
      %824 = vrot.lane.b32.xlu0 %v749, 104
      %v825 = vpop.permute.xlu0 %824
      %826 = vrot.lane.b32.xlu0 %v754, 104
      %v827 = vpop.permute.xlu0 %826
      %828 = vrot.lane.b32.xlu0 %v759, 104
      %v829 = vpop.permute.xlu0 %828
      %830 = vrot.lane.b32.xlu0 %v764, 104
      %v831 = vpop.permute.xlu0 %830
      %832 = vrot.lane.b32.xlu0 %v769, 104
      %v833 = vpop.permute.xlu0 %832
      %834 = vrot.lane.b32.xlu0 %v774, 104
      %v835 = vpop.permute.xlu0 %834
      %836 = vrot.lane.b32.xlu0 %v779, 104
      %v837 = vpop.permute.xlu0 %836
      %v838 = vld [vmem:[%s7] sm:$0xff]
      %v839 = vld [vmem:[%s7 + $0x8] sm:$0xff]
      %v840 = vld [vmem:[%s7 + $0x10] sm:$0xff]
      %v841 = vld [vmem:[%s7 + $0x18] sm:$0xff]
      %v842 = vld [vmem:[%s7 + $0x20] sm:$0xff]
      %v843 = vld [vmem:[%s7 + $0x28] sm:$0xff]
      %v844 = vld [vmem:[%s7 + $0x30] sm:$0xff]
      %v845 = vld [vmem:[%s7 + $0x38] sm:$0xff]
      %v846 = vld [vmem:[%s8] sm:$0xff]
      %v847 = vld [vmem:[%s8 + $0x8] sm:$0xff]
      %v848 = vld [vmem:[%s8 + $0x10] sm:$0xff]
      %v849 = vld [vmem:[%s8 + $0x18] sm:$0xff]
      %v850 = vld [vmem:[%s8 + $0x20] sm:$0xff]
      %v851 = vld [vmem:[%s8 + $0x28] sm:$0xff]
      %v852 = vld [vmem:[%s8 + $0x30] sm:$0xff]
      %v853 = vld [vmem:[%s8 + $0x38] sm:$0xff]
      %v854 = vadd.f32 %v838, %v846
      %v855 = vadd.f32 %v839, %v847
      %v856 = vadd.f32 %v838, %v848
      %v857 = vadd.f32 %v839, %v849
      %v858 = vadd.f32 %v838, %v850
      %v859 = vadd.f32 %v839, %v851
      %v860 = vadd.f32 %v838, %v852
      %v861 = vadd.f32 %v839, %v853
      %v862 = vadd.f32 %v840, %v846
      %v863 = vadd.f32 %v841, %v847
      %v864 = vadd.f32 %v840, %v848
      %v865 = vadd.f32 %v841, %v849
      %v866 = vadd.f32 %v840, %v850
      %v867 = vadd.f32 %v841, %v851
      %v868 = vadd.f32 %v840, %v852
      %v869 = vadd.f32 %v841, %v853
      %v870 = vadd.f32 %v842, %v846
      %v871 = vadd.f32 %v843, %v847
      %v872 = vadd.f32 %v842, %v848
      %v873 = vadd.f32 %v843, %v849
      %v874 = vadd.f32 %v842, %v850
      %v875 = vadd.f32 %v843, %v851
      %v876 = vadd.f32 %v842, %v852
      %v877 = vadd.f32 %v843, %v853
      %v878 = vadd.f32 %v844, %v846
      %v879 = vadd.f32 %v845, %v847
      %v880 = vadd.f32 %v844, %v848
      %v881 = vadd.f32 %v845, %v849
      %v882 = vadd.f32 %v844, %v850
      %v883 = vadd.f32 %v845, %v851
      %v884 = vadd.f32 %v844, %v852
      %v885 = vadd.f32 %v845, %v853
      %886 = vrot.lane.b32.xlu0 %v744, 96
      %v887 = vpop.permute.xlu0 %886
      %888 = vrot.lane.b32.xlu0 %v749, 96
      %v889 = vpop.permute.xlu0 %888
      %vm890 = vcmask 64512
      %v891 = vsel %vm890, %v744, 0
      %v893 = vsel %vm890, %v749, 0
      %v895 = vsel %vm890, %v887, 0
      %v897 = vsel %vm890, %v889, 0
      %899 = vmatprep.subr.mxu0 0.0
      %900 = vmatpush1.xpose.msra.mxu0 %v895
      %901 = vmatprep.subr.mxu0 0.0
      %902 = vmatpush1.xpose.msra.mxu0 %v897
      %903 = vmatprep.subr.mxu0 0.0
      %904 = vmatpush1.xpose.msra.mxu0 0.0
      %905 = vmatprep.subr.mxu0 0.0
      %906 = vmatpush1.xpose.msra.mxu0 0.0
      %907 = vmatprep.subr.mxu0 0.0
      %908 = vmatpush1.xpose.msra.mxu0 0.0
      %909 = vmatprep.subr.mxu0 0.0
      %910 = vmatpush1.xpose.msra.mxu0 0.0
      %911 = vmatprep.subr.mxu0 0.0
      %912 = vmatpush1.xpose.msra.mxu0 0.0
      %913 = vmatprep.subr.mxu0 0.0
      %914 = vmatpush1.xpose.msra.mxu0 0.0
      %915 = vmatprep.subr.mxu0 0.0
      %916 = vmatpush1.xpose.msra.mxu0 0.0
      %917 = vmatprep.subr.mxu0 0.0
      %918 = vmatpush1.xpose.msra.mxu0 0.0
      %919 = vmatprep.subr.mxu0 0.0
      %920 = vmatpush1.xpose.msra.mxu0 0.0
      %921 = vmatprep.subr.mxu0 0.0
      %922 = vmatpush1.xpose.msra.mxu0 0.0
      %923 = vmatprep.subr.mxu0 0.0
      %924 = vmatpush1.xpose.msra.mxu0 0.0
      %925 = vmatprep.subr.mxu0 0.0
      %926 = vmatpush1.xpose.msra.mxu0 0.0
      %927 = vmatprep.subr.mxu0 0.0
      %928 = vmatpush1.xpose.msra.mxu0 0.0
      %929 = vmatprep.subr.mxu0 0.0
      %930 = vmatpush1.xpose.msra.mxu0 0.0
      %931 = vmatprep.subr.mxu0 0.0
      %932 = vmatpush1.xpose.msra.mxu0 0.0
      %933 = vmatprep.subr.mxu0 0.0
      %934 = vmatpush1.xpose.msra.mxu0 0.0
      %935 = vmatprep.subr.mxu0 0.0
      %936 = vmatpush1.xpose.msra.mxu0 0.0
      %937 = vmatprep.subr.mxu0 0.0
      %938 = vmatpush1.xpose.msra.mxu0 0.0
      %939 = vmatprep.subr.mxu0 0.0
      %940 = vmatpush1.xpose.msra.mxu0 0.0
      %941 = vmatprep.subr.mxu0 0.0
      %942 = vmatpush1.xpose.msra.mxu0 0.0
      %943 = vmatprep.subr.mxu0 0.0
      %944 = vmatpush1.xpose.msra.mxu0 0.0
      %945 = vmatprep.subr.mxu0 0.0
      %946 = vmatpush1.xpose.msra.mxu0 0.0
      %947 = vmatprep.subr.mxu0 0.0
      %948 = vmatpush1.xpose.msra.mxu0 0.0
      %949 = vmatprep.subr.mxu0 0.0
      %950 = vmatpush1.xpose.msra.mxu0 0.0
      %951 = vmatprep.subr.mxu0 0.0
      %952 = vmatpush1.xpose.msra.mxu0 0.0
      %953 = vmatprep.subr.mxu0 0.0
      %954 = vmatpush1.xpose.msra.mxu0 0.0
      %955 = vmatprep.subr.mxu0 0.0
      %956 = vmatpush1.xpose.msra.mxu0 0.0
      %957 = vmatprep.subr.mxu0 0.0
      %958 = vmatpush1.xpose.msra.mxu0 0.0
      %959 = vmatprep.subr.mxu0 0.0
      %960 = vmatpush1.xpose.msra.mxu0 0.0
      %961 = vmatprep.subr.mxu0 0.0
      %962 = vmatpush1.xpose.msra.mxu0 0.0
      %963 = vmatprep.mubr.f32.mxu0 0.0
      %964 = vmatmul.mubr.f32.gmra.mrb[0].mxu0 %v891
      %v965 = vpop.f32.mrb[0].mxu0
      %v966 = vadd.f32 0.0, %v965
      %v967 = vpop.f32.mrb[0].mxu0
      %968 = vmatprep.mubr.f32.mxu0 0.0
      %969 = vmatmul.mubr.f32.gmra.mrb[0].mxu0 %v893
      %v970 = vpop.f32.mrb[0].mxu0
      %v971 = vadd.f32 0.0, %v970
      %v972 = vpop.f32.mrb[0].mxu0
      %973 = vdwg.mxu0
      %974 = vrot.lane.b32.xlu0 %v754, 96
      %v975 = vpop.permute.xlu0 %974
      %976 = vrot.lane.b32.xlu0 %v759, 96
      %v977 = vpop.permute.xlu0 %976
      %v978 = vsel %vm890, %v754, 0
      %v980 = vsel %vm890, %v759, 0
      %v982 = vsel %vm890, %v975, 0
      %v984 = vsel %vm890, %v977, 0
      %986 = vmatprep.subr.mxu0 0.0
      %987 = vmatpush1.xpose.msra.mxu0 %v982
      %988 = vmatprep.subr.mxu0 0.0
      %989 = vmatpush1.xpose.msra.mxu0 %v984
      %990 = vmatprep.subr.mxu0 0.0
      %991 = vmatpush1.xpose.msra.mxu0 0.0
      %992 = vmatprep.subr.mxu0 0.0
      %993 = vmatpush1.xpose.msra.mxu0 0.0
      %994 = vmatprep.subr.mxu0 0.0
      %995 = vmatpush1.xpose.msra.mxu0 0.0
      %996 = vmatprep.subr.mxu0 0.0
      %997 = vmatpush1.xpose.msra.mxu0 0.0
      %998 = vmatprep.subr.mxu0 0.0
      %999 = vmatpush1.xpose.msra.mxu0 0.0
      %1000 = vmatprep.subr.mxu0 0.0
      %1001 = vmatpush1.xpose.msra.mxu0 0.0
      %1002 = vmatprep.subr.mxu0 0.0
      %1003 = vmatpush1.xpose.msra.mxu0 0.0
      %1004 = vmatprep.subr.mxu0 0.0
      %1005 = vmatpush1.xpose.msra.mxu0 0.0
      %1006 = vmatprep.subr.mxu0 0.0
      %1007 = vmatpush1.xpose.msra.mxu0 0.0
      %1008 = vmatprep.subr.mxu0 0.0
      %1009 = vmatpush1.xpose.msra.mxu0 0.0
      %1010 = vmatprep.subr.mxu0 0.0
      %1011 = vmatpush1.xpose.msra.mxu0 0.0
      %1012 = vmatprep.subr.mxu0 0.0
      %1013 = vmatpush1.xpose.msra.mxu0 0.0
      %1014 = vmatprep.subr.mxu0 0.0
      %1015 = vmatpush1.xpose.msra.mxu0 0.0
      %1016 = vmatprep.subr.mxu0 0.0
      %1017 = vmatpush1.xpose.msra.mxu0 0.0
      %1018 = vmatprep.subr.mxu0 0.0
      %1019 = vmatpush1.xpose.msra.mxu0 0.0
      %1020 = vmatprep.subr.mxu0 0.0
      %1021 = vmatpush1.xpose.msra.mxu0 0.0
      %1022 = vmatprep.subr.mxu0 0.0
      %1023 = vmatpush1.xpose.msra.mxu0 0.0
      %1024 = vmatprep.subr.mxu0 0.0
      %1025 = vmatpush1.xpose.msra.mxu0 0.0
      %1026 = vmatprep.subr.mxu0 0.0
      %1027 = vmatpush1.xpose.msra.mxu0 0.0
      %1028 = vmatprep.subr.mxu0 0.0
      %1029 = vmatpush1.xpose.msra.mxu0 0.0
      %1030 = vmatprep.subr.mxu0 0.0
      %1031 = vmatpush1.xpose.msra.mxu0 0.0
      %1032 = vmatprep.subr.mxu0 0.0
      %1033 = vmatpush1.xpose.msra.mxu0 0.0
      %1034 = vmatprep.subr.mxu0 0.0
      %1035 = vmatpush1.xpose.msra.mxu0 0.0
      %1036 = vmatprep.subr.mxu0 0.0
      %1037 = vmatpush1.xpose.msra.mxu0 0.0
      %1038 = vmatprep.subr.mxu0 0.0
      %1039 = vmatpush1.xpose.msra.mxu0 0.0
      %1040 = vmatprep.subr.mxu0 0.0
      %1041 = vmatpush1.xpose.msra.mxu0 0.0
      %1042 = vmatprep.subr.mxu0 0.0
      %1043 = vmatpush1.xpose.msra.mxu0 0.0
      %1044 = vmatprep.subr.mxu0 0.0
      %1045 = vmatpush1.xpose.msra.mxu0 0.0
      %1046 = vmatprep.subr.mxu0 0.0
      %1047 = vmatpush1.xpose.msra.mxu0 0.0
      %1048 = vmatprep.subr.mxu0 0.0
      %1049 = vmatpush1.xpose.msra.mxu0 0.0
      %1050 = vmatprep.mubr.f32.mxu0 0.0
      %1051 = vmatmul.mubr.f32.gmra.mrb[0].mxu0 %v978
      %v1052 = vpop.f32.mrb[0].mxu0
      %v1053 = vadd.f32 0.0, %v1052
      %v1054 = vpop.f32.mrb[0].mxu0
      %1055 = vmatprep.mubr.f32.mxu0 0.0
      %1056 = vmatmul.mubr.f32.gmra.mrb[0].mxu0 %v980
      %v1057 = vpop.f32.mrb[0].mxu0
      %v1058 = vadd.f32 0.0, %v1057
      %v1059 = vpop.f32.mrb[0].mxu0
      %1060 = vdwg.mxu0
      %1061 = vrot.lane.b32.xlu0 %v764, 96
      %v1062 = vpop.permute.xlu0 %1061
      %1063 = vrot.lane.b32.xlu0 %v769, 96
      %v1064 = vpop.permute.xlu0 %1063
      %v1065 = vsel %vm890, %v764, 0
      %v1067 = vsel %vm890, %v769, 0
      %v1069 = vsel %vm890, %v1062, 0
      %v1071 = vsel %vm890, %v1064, 0
      %1073 = vmatprep.subr.mxu0 0.0
      %1074 = vmatpush1.xpose.msra.mxu0 %v1069
      %1075 = vmatprep.subr.mxu0 0.0
      %1076 = vmatpush1.xpose.msra.mxu0 %v1071
      %1077 = vmatprep.subr.mxu0 0.0
      %1078 = vmatpush1.xpose.msra.mxu0 0.0
      %1079 = vmatprep.subr.mxu0 0.0
      %1080 = vmatpush1.xpose.msra.mxu0 0.0
      %1081 = vmatprep.subr.mxu0 0.0
      %1082 = vmatpush1.xpose.msra.mxu0 0.0
      %1083 = vmatprep.subr.mxu0 0.0
      %1084 = vmatpush1.xpose.msra.mxu0 0.0
      %1085 = vmatprep.subr.mxu0 0.0
      %1086 = vmatpush1.xpose.msra.mxu0 0.0
      %1087 = vmatprep.subr.mxu0 0.0
      %1088 = vmatpush1.xpose.msra.mxu0 0.0
      %1089 = vmatprep.subr.mxu0 0.0
      %1090 = vmatpush1.xpose.msra.mxu0 0.0
      %1091 = vmatprep.subr.mxu0 0.0
      %1092 = vmatpush1.xpose.msra.mxu0 0.0
      %1093 = vmatprep.subr.mxu0 0.0
      %1094 = vmatpush1.xpose.msra.mxu0 0.0
      %1095 = vmatprep.subr.mxu0 0.0
      %1096 = vmatpush1.xpose.msra.mxu0 0.0
      %1097 = vmatprep.subr.mxu0 0.0
      %1098 = vmatpush1.xpose.msra.mxu0 0.0
      %1099 = vmatprep.subr.mxu0 0.0
      %1100 = vmatpush1.xpose.msra.mxu0 0.0
      %1101 = vmatprep.subr.mxu0 0.0
      %1102 = vmatpush1.xpose.msra.mxu0 0.0
      %1103 = vmatprep.subr.mxu0 0.0
      %1104 = vmatpush1.xpose.msra.mxu0 0.0
      %1105 = vmatprep.subr.mxu0 0.0
      %1106 = vmatpush1.xpose.msra.mxu0 0.0
      %1107 = vmatprep.subr.mxu0 0.0
      %1108 = vmatpush1.xpose.msra.mxu0 0.0
      %1109 = vmatprep.subr.mxu0 0.0
      %1110 = vmatpush1.xpose.msra.mxu0 0.0
      %1111 = vmatprep.subr.mxu0 0.0
      %1112 = vmatpush1.xpose.msra.mxu0 0.0
      %1113 = vmatprep.subr.mxu0 0.0
      %1114 = vmatpush1.xpose.msra.mxu0 0.0
      %1115 = vmatprep.subr.mxu0 0.0
      %1116 = vmatpush1.xpose.msra.mxu0 0.0
      %1117 = vmatprep.subr.mxu0 0.0
      %1118 = vmatpush1.xpose.msra.mxu0 0.0
      %1119 = vmatprep.subr.mxu0 0.0
      %1120 = vmatpush1.xpose.msra.mxu0 0.0
      %1121 = vmatprep.subr.mxu0 0.0
      %1122 = vmatpush1.xpose.msra.mxu0 0.0
      %1123 = vmatprep.subr.mxu0 0.0
      %1124 = vmatpush1.xpose.msra.mxu0 0.0
      %1125 = vmatprep.subr.mxu0 0.0
      %1126 = vmatpush1.xpose.msra.mxu0 0.0
      %1127 = vmatprep.subr.mxu0 0.0
      %1128 = vmatpush1.xpose.msra.mxu0 0.0
      %1129 = vmatprep.subr.mxu0 0.0
      %1130 = vmatpush1.xpose.msra.mxu0 0.0
      %1131 = vmatprep.subr.mxu0 0.0
      %1132 = vmatpush1.xpose.msra.mxu0 0.0
      %1133 = vmatprep.subr.mxu0 0.0
      %1134 = vmatpush1.xpose.msra.mxu0 0.0
      %1135 = vmatprep.subr.mxu0 0.0
      %1136 = vmatpush1.xpose.msra.mxu0 0.0
      %1137 = vmatprep.mubr.f32.mxu0 0.0
      %1138 = vmatmul.mubr.f32.gmra.mrb[0].mxu0 %v1065
      %v1139 = vpop.f32.mrb[0].mxu0
      %v1140 = vadd.f32 0.0, %v1139
      %v1141 = vpop.f32.mrb[0].mxu0
      %1142 = vmatprep.mubr.f32.mxu0 0.0
      %1143 = vmatmul.mubr.f32.gmra.mrb[0].mxu0 %v1067
      %v1144 = vpop.f32.mrb[0].mxu0
      %v1145 = vadd.f32 0.0, %v1144
      %v1146 = vpop.f32.mrb[0].mxu0
      %1147 = vdwg.mxu0
      %1148 = vrot.lane.b32.xlu0 %v774, 96
      %v1149 = vpop.permute.xlu0 %1148
      %1150 = vrot.lane.b32.xlu0 %v779, 96
      %v1151 = vpop.permute.xlu0 %1150
      %v1152 = vsel %vm890, %v774, 0
      %v1154 = vsel %vm890, %v779, 0
      %v1156 = vsel %vm890, %v1149, 0
      %v1158 = vsel %vm890, %v1151, 0
      %1160 = vmatprep.subr.mxu0 0.0
      %1161 = vmatpush1.xpose.msra.mxu0 %v1156
      %1162 = vmatprep.subr.mxu0 0.0
      %1163 = vmatpush1.xpose.msra.mxu0 %v1158
      %1164 = vmatprep.subr.mxu0 0.0
      %1165 = vmatpush1.xpose.msra.mxu0 0.0
      %1166 = vmatprep.subr.mxu0 0.0
      %1167 = vmatpush1.xpose.msra.mxu0 0.0
      %1168 = vmatprep.subr.mxu0 0.0
      %1169 = vmatpush1.xpose.msra.mxu0 0.0
      %1170 = vmatprep.subr.mxu0 0.0
      %1171 = vmatpush1.xpose.msra.mxu0 0.0
      %1172 = vmatprep.subr.mxu0 0.0
      %1173 = vmatpush1.xpose.msra.mxu0 0.0
      %1174 = vmatprep.subr.mxu0 0.0
      %1175 = vmatpush1.xpose.msra.mxu0 0.0
      %1176 = vmatprep.subr.mxu0 0.0
      %1177 = vmatpush1.xpose.msra.mxu0 0.0
      %1178 = vmatprep.subr.mxu0 0.0
      %1179 = vmatpush1.xpose.msra.mxu0 0.0
      %1180 = vmatprep.subr.mxu0 0.0
      %1181 = vmatpush1.xpose.msra.mxu0 0.0
      %1182 = vmatprep.subr.mxu0 0.0
      %1183 = vmatpush1.xpose.msra.mxu0 0.0
      %1184 = vmatprep.subr.mxu0 0.0
      %1185 = vmatpush1.xpose.msra.mxu0 0.0
      %1186 = vmatprep.subr.mxu0 0.0
      %1187 = vmatpush1.xpose.msra.mxu0 0.0
      %1188 = vmatprep.subr.mxu0 0.0
      %1189 = vmatpush1.xpose.msra.mxu0 0.0
      %1190 = vmatprep.subr.mxu0 0.0
      %1191 = vmatpush1.xpose.msra.mxu0 0.0
      %1192 = vmatprep.subr.mxu0 0.0
      %1193 = vmatpush1.xpose.msra.mxu0 0.0
      %1194 = vmatprep.subr.mxu0 0.0
      %1195 = vmatpush1.xpose.msra.mxu0 0.0
      %1196 = vmatprep.subr.mxu0 0.0
      %1197 = vmatpush1.xpose.msra.mxu0 0.0
      %1198 = vmatprep.subr.mxu0 0.0
      %1199 = vmatpush1.xpose.msra.mxu0 0.0
      %1200 = vmatprep.subr.mxu0 0.0
      %1201 = vmatpush1.xpose.msra.mxu0 0.0
      %1202 = vmatprep.subr.mxu0 0.0
      %1203 = vmatpush1.xpose.msra.mxu0 0.0
      %1204 = vmatprep.subr.mxu0 0.0
      %1205 = vmatpush1.xpose.msra.mxu0 0.0
      %1206 = vmatprep.subr.mxu0 0.0
      %1207 = vmatpush1.xpose.msra.mxu0 0.0
      %1208 = vmatprep.subr.mxu0 0.0
      %1209 = vmatpush1.xpose.msra.mxu0 0.0
      %1210 = vmatprep.subr.mxu0 0.0
      %1211 = vmatpush1.xpose.msra.mxu0 0.0
      %1212 = vmatprep.subr.mxu0 0.0
      %1213 = vmatpush1.xpose.msra.mxu0 0.0
      %1214 = vmatprep.subr.mxu0 0.0
      %1215 = vmatpush1.xpose.msra.mxu0 0.0
      %1216 = vmatprep.subr.mxu0 0.0
      %1217 = vmatpush1.xpose.msra.mxu0 0.0
      %1218 = vmatprep.subr.mxu0 0.0
      %1219 = vmatpush1.xpose.msra.mxu0 0.0
      %1220 = vmatprep.subr.mxu0 0.0
      %1221 = vmatpush1.xpose.msra.mxu0 0.0
      %1222 = vmatprep.subr.mxu0 0.0
      %1223 = vmatpush1.xpose.msra.mxu0 0.0
      %1224 = vmatprep.mubr.f32.mxu0 0.0
      %1225 = vmatmul.mubr.f32.gmra.mrb[0].mxu0 %v1152
      %v1226 = vpop.f32.mrb[0].mxu0
      %v1227 = vadd.f32 0.0, %v1226
      %v1228 = vpop.f32.mrb[0].mxu0
      %1229 = vmatprep.mubr.f32.mxu0 0.0
      %1230 = vmatmul.mubr.f32.gmra.mrb[0].mxu0 %v1154
      %v1231 = vpop.f32.mrb[0].mxu0
      %v1232 = vadd.f32 0.0, %v1231
      %v1233 = vpop.f32.mrb[0].mxu0
      %1234 = vdwg.mxu0
      %1235 = vrot.lane.b32.xlu0 %v791, 96
      %v1236 = vpop.permute.xlu0 %1235
      %1237 = vrot.lane.b32.xlu0 %v793, 96
      %v1238 = vpop.permute.xlu0 %1237
      %v1239 = vsel %vm890, %v791, 0
      %v1241 = vsel %vm890, %v793, 0
      %v1243 = vsel %vm890, %v1236, 0
      %v1245 = vsel %vm890, %v1238, 0
      %1247 = vmatprep.subr.mxu0 0.0
      %1248 = vmatpush1.xpose.msra.mxu0 %v1243
      %1249 = vmatprep.subr.mxu0 0.0
      %1250 = vmatpush1.xpose.msra.mxu0 %v1245
      %1251 = vmatprep.subr.mxu0 0.0
      %1252 = vmatpush1.xpose.msra.mxu0 0.0
      %1253 = vmatprep.subr.mxu0 0.0
      %1254 = vmatpush1.xpose.msra.mxu0 0.0
      %1255 = vmatprep.subr.mxu0 0.0
      %1256 = vmatpush1.xpose.msra.mxu0 0.0
      %1257 = vmatprep.subr.mxu0 0.0
      %1258 = vmatpush1.xpose.msra.mxu0 0.0
      %1259 = vmatprep.subr.mxu0 0.0
      %1260 = vmatpush1.xpose.msra.mxu0 0.0
      %1261 = vmatprep.subr.mxu0 0.0
      %1262 = vmatpush1.xpose.msra.mxu0 0.0
      %1263 = vmatprep.subr.mxu0 0.0
      %1264 = vmatpush1.xpose.msra.mxu0 0.0
      %1265 = vmatprep.subr.mxu0 0.0
      %1266 = vmatpush1.xpose.msra.mxu0 0.0
      %1267 = vmatprep.subr.mxu0 0.0
      %1268 = vmatpush1.xpose.msra.mxu0 0.0
      %1269 = vmatprep.subr.mxu0 0.0
      %1270 = vmatpush1.xpose.msra.mxu0 0.0
      %1271 = vmatprep.subr.mxu0 0.0
      %1272 = vmatpush1.xpose.msra.mxu0 0.0
      %1273 = vmatprep.subr.mxu0 0.0
      %1274 = vmatpush1.xpose.msra.mxu0 0.0
      %1275 = vmatprep.subr.mxu0 0.0
      %1276 = vmatpush1.xpose.msra.mxu0 0.0
      %1277 = vmatprep.subr.mxu0 0.0
      %1278 = vmatpush1.xpose.msra.mxu0 0.0
      %1279 = vmatprep.subr.mxu0 0.0
      %1280 = vmatpush1.xpose.msra.mxu0 0.0
      %1281 = vmatprep.subr.mxu0 0.0
      %1282 = vmatpush1.xpose.msra.mxu0 0.0
      %1283 = vmatprep.subr.mxu0 0.0
      %1284 = vmatpush1.xpose.msra.mxu0 0.0
      %1285 = vmatprep.subr.mxu0 0.0
      %1286 = vmatpush1.xpose.msra.mxu0 0.0
      %1287 = vmatprep.subr.mxu0 0.0
      %1288 = vmatpush1.xpose.msra.mxu0 0.0
      %1289 = vmatprep.subr.mxu0 0.0
      %1290 = vmatpush1.xpose.msra.mxu0 0.0
      %1291 = vmatprep.subr.mxu0 0.0
      %1292 = vmatpush1.xpose.msra.mxu0 0.0
      %1293 = vmatprep.subr.mxu0 0.0
      %1294 = vmatpush1.xpose.msra.mxu0 0.0
      %1295 = vmatprep.subr.mxu0 0.0
      %1296 = vmatpush1.xpose.msra.mxu0 0.0
      %1297 = vmatprep.subr.mxu0 0.0
      %1298 = vmatpush1.xpose.msra.mxu0 0.0
      %1299 = vmatprep.subr.mxu0 0.0
      %1300 = vmatpush1.xpose.msra.mxu0 0.0
      %1301 = vmatprep.subr.mxu0 0.0
      %1302 = vmatpush1.xpose.msra.mxu0 0.0
      %1303 = vmatprep.subr.mxu0 0.0
      %1304 = vmatpush1.xpose.msra.mxu0 0.0
      %1305 = vmatprep.subr.mxu0 0.0
      %1306 = vmatpush1.xpose.msra.mxu0 0.0
      %1307 = vmatprep.subr.mxu0 0.0
      %1308 = vmatpush1.xpose.msra.mxu0 0.0
      %1309 = vmatprep.subr.mxu0 0.0
      %1310 = vmatpush1.xpose.msra.mxu0 0.0
      %1311 = vmatprep.mubr.f32.mxu0 0.0
      %1312 = vmatmul.mubr.f32.gmra.mrb[0].mxu0 %v1239
      %v1313 = vpop.f32.mrb[0].mxu0
      %v1314 = vadd.f32 0.0, %v1313
      %v1315 = vpop.f32.mrb[0].mxu0
      %1316 = vmatprep.mubr.f32.mxu0 0.0
      %1317 = vmatmul.mubr.f32.gmra.mrb[0].mxu0 %v1241
      %v1318 = vpop.f32.mrb[0].mxu0
      %v1319 = vadd.f32 0.0, %v1318
      %v1320 = vpop.f32.mrb[0].mxu0
      %1321 = vdwg.mxu0
      %1322 = vrot.lane.b32.xlu0 %v795, 96
      %v1323 = vpop.permute.xlu0 %1322
      %1324 = vrot.lane.b32.xlu0 %v797, 96
      %v1325 = vpop.permute.xlu0 %1324
      %v1326 = vsel %vm890, %v795, 0
      %v1328 = vsel %vm890, %v797, 0
      %v1330 = vsel %vm890, %v1323, 0
      %v1332 = vsel %vm890, %v1325, 0
      %1334 = vmatprep.subr.mxu0 0.0
      %1335 = vmatpush1.xpose.msra.mxu0 %v1330
      %1336 = vmatprep.subr.mxu0 0.0
      %1337 = vmatpush1.xpose.msra.mxu0 %v1332
      %1338 = vmatprep.subr.mxu0 0.0
      %1339 = vmatpush1.xpose.msra.mxu0 0.0
      %1340 = vmatprep.subr.mxu0 0.0
      %1341 = vmatpush1.xpose.msra.mxu0 0.0
      %1342 = vmatprep.subr.mxu0 0.0
      %1343 = vmatpush1.xpose.msra.mxu0 0.0
      %1344 = vmatprep.subr.mxu0 0.0
      %1345 = vmatpush1.xpose.msra.mxu0 0.0
      %1346 = vmatprep.subr.mxu0 0.0
      %1347 = vmatpush1.xpose.msra.mxu0 0.0
      %1348 = vmatprep.subr.mxu0 0.0
      %1349 = vmatpush1.xpose.msra.mxu0 0.0
      %1350 = vmatprep.subr.mxu0 0.0
      %1351 = vmatpush1.xpose.msra.mxu0 0.0
      %1352 = vmatprep.subr.mxu0 0.0
      %1353 = vmatpush1.xpose.msra.mxu0 0.0
      %1354 = vmatprep.subr.mxu0 0.0
      %1355 = vmatpush1.xpose.msra.mxu0 0.0
      %1356 = vmatprep.subr.mxu0 0.0
      %1357 = vmatpush1.xpose.msra.mxu0 0.0
      %1358 = vmatprep.subr.mxu0 0.0
      %1359 = vmatpush1.xpose.msra.mxu0 0.0
      %1360 = vmatprep.subr.mxu0 0.0
      %1361 = vmatpush1.xpose.msra.mxu0 0.0
      %1362 = vmatprep.subr.mxu0 0.0
      %1363 = vmatpush1.xpose.msra.mxu0 0.0
      %1364 = vmatprep.subr.mxu0 0.0
      %1365 = vmatpush1.xpose.msra.mxu0 0.0
      %1366 = vmatprep.subr.mxu0 0.0
      %1367 = vmatpush1.xpose.msra.mxu0 0.0
      %1368 = vmatprep.subr.mxu0 0.0
      %1369 = vmatpush1.xpose.msra.mxu0 0.0
      %1370 = vmatprep.subr.mxu0 0.0
      %1371 = vmatpush1.xpose.msra.mxu0 0.0
      %1372 = vmatprep.subr.mxu0 0.0
      %1373 = vmatpush1.xpose.msra.mxu0 0.0
      %1374 = vmatprep.subr.mxu0 0.0
      %1375 = vmatpush1.xpose.msra.mxu0 0.0
      %1376 = vmatprep.subr.mxu0 0.0
      %1377 = vmatpush1.xpose.msra.mxu0 0.0
      %1378 = vmatprep.subr.mxu0 0.0
      %1379 = vmatpush1.xpose.msra.mxu0 0.0
      %1380 = vmatprep.subr.mxu0 0.0
      %1381 = vmatpush1.xpose.msra.mxu0 0.0
      %1382 = vmatprep.subr.mxu0 0.0
      %1383 = vmatpush1.xpose.msra.mxu0 0.0
      %1384 = vmatprep.subr.mxu0 0.0
      %1385 = vmatpush1.xpose.msra.mxu0 0.0
      %1386 = vmatprep.subr.mxu0 0.0
      %1387 = vmatpush1.xpose.msra.mxu0 0.0
      %1388 = vmatprep.subr.mxu0 0.0
      %1389 = vmatpush1.xpose.msra.mxu0 0.0
      %1390 = vmatprep.subr.mxu0 0.0
      %1391 = vmatpush1.xpose.msra.mxu0 0.0
      %1392 = vmatprep.subr.mxu0 0.0
      %1393 = vmatpush1.xpose.msra.mxu0 0.0
      %1394 = vmatprep.subr.mxu0 0.0
      %1395 = vmatpush1.xpose.msra.mxu0 0.0
      %1396 = vmatprep.subr.mxu0 0.0
      %1397 = vmatpush1.xpose.msra.mxu0 0.0
      %1398 = vmatprep.mubr.f32.mxu0 0.0
      %1399 = vmatmul.mubr.f32.gmra.mrb[0].mxu0 %v1326
      %v1400 = vpop.f32.mrb[0].mxu0
      %v1401 = vadd.f32 0.0, %v1400
      %v1402 = vpop.f32.mrb[0].mxu0
      %1403 = vmatprep.mubr.f32.mxu0 0.0
      %1404 = vmatmul.mubr.f32.gmra.mrb[0].mxu0 %v1328
      %v1405 = vpop.f32.mrb[0].mxu0
      %v1406 = vadd.f32 0.0, %v1405
      %v1407 = vpop.f32.mrb[0].mxu0
      %1408 = vdwg.mxu0
      %1409 = vrot.lane.b32.xlu0 %v799, 96
      %v1410 = vpop.permute.xlu0 %1409
      %1411 = vrot.lane.b32.xlu0 %v801, 96
      %v1412 = vpop.permute.xlu0 %1411
      %v1413 = vsel %vm890, %v799, 0
      %v1415 = vsel %vm890, %v801, 0
      %v1417 = vsel %vm890, %v1410, 0
      %v1419 = vsel %vm890, %v1412, 0
      %1421 = vmatprep.subr.mxu0 0.0
      %1422 = vmatpush1.xpose.msra.mxu0 %v1417
      %1423 = vmatprep.subr.mxu0 0.0
      %1424 = vmatpush1.xpose.msra.mxu0 %v1419
      %1425 = vmatprep.subr.mxu0 0.0
      %1426 = vmatpush1.xpose.msra.mxu0 0.0
      %1427 = vmatprep.subr.mxu0 0.0
      %1428 = vmatpush1.xpose.msra.mxu0 0.0
      %1429 = vmatprep.subr.mxu0 0.0
      %1430 = vmatpush1.xpose.msra.mxu0 0.0
      %1431 = vmatprep.subr.mxu0 0.0
      %1432 = vmatpush1.xpose.msra.mxu0 0.0
      %1433 = vmatprep.subr.mxu0 0.0
      %1434 = vmatpush1.xpose.msra.mxu0 0.0
      %1435 = vmatprep.subr.mxu0 0.0
      %1436 = vmatpush1.xpose.msra.mxu0 0.0
      %1437 = vmatprep.subr.mxu0 0.0
      %1438 = vmatpush1.xpose.msra.mxu0 0.0
      %1439 = vmatprep.subr.mxu0 0.0
      %1440 = vmatpush1.xpose.msra.mxu0 0.0
      %1441 = vmatprep.subr.mxu0 0.0
      %1442 = vmatpush1.xpose.msra.mxu0 0.0
      %1443 = vmatprep.subr.mxu0 0.0
      %1444 = vmatpush1.xpose.msra.mxu0 0.0
      %1445 = vmatprep.subr.mxu0 0.0
      %1446 = vmatpush1.xpose.msra.mxu0 0.0
      %1447 = vmatprep.subr.mxu0 0.0
      %1448 = vmatpush1.xpose.msra.mxu0 0.0
      %1449 = vmatprep.subr.mxu0 0.0
      %1450 = vmatpush1.xpose.msra.mxu0 0.0
      %1451 = vmatprep.subr.mxu0 0.0
      %1452 = vmatpush1.xpose.msra.mxu0 0.0
      %1453 = vmatprep.subr.mxu0 0.0
      %1454 = vmatpush1.xpose.msra.mxu0 0.0
      %1455 = vmatprep.subr.mxu0 0.0
      %1456 = vmatpush1.xpose.msra.mxu0 0.0
      %1457 = vmatprep.subr.mxu0 0.0
      %1458 = vmatpush1.xpose.msra.mxu0 0.0
      %1459 = vmatprep.subr.mxu0 0.0
      %1460 = vmatpush1.xpose.msra.mxu0 0.0
      %1461 = vmatprep.subr.mxu0 0.0
      %1462 = vmatpush1.xpose.msra.mxu0 0.0
      %1463 = vmatprep.subr.mxu0 0.0
      %1464 = vmatpush1.xpose.msra.mxu0 0.0
      %1465 = vmatprep.subr.mxu0 0.0
      %1466 = vmatpush1.xpose.msra.mxu0 0.0
      %1467 = vmatprep.subr.mxu0 0.0
      %1468 = vmatpush1.xpose.msra.mxu0 0.0
      %1469 = vmatprep.subr.mxu0 0.0
      %1470 = vmatpush1.xpose.msra.mxu0 0.0
      %1471 = vmatprep.subr.mxu0 0.0
      %1472 = vmatpush1.xpose.msra.mxu0 0.0
      %1473 = vmatprep.subr.mxu0 0.0
      %1474 = vmatpush1.xpose.msra.mxu0 0.0
      %1475 = vmatprep.subr.mxu0 0.0
      %1476 = vmatpush1.xpose.msra.mxu0 0.0
      %1477 = vmatprep.subr.mxu0 0.0
      %1478 = vmatpush1.xpose.msra.mxu0 0.0
      %1479 = vmatprep.subr.mxu0 0.0
      %1480 = vmatpush1.xpose.msra.mxu0 0.0
      %1481 = vmatprep.subr.mxu0 0.0
      %1482 = vmatpush1.xpose.msra.mxu0 0.0
      %1483 = vmatprep.subr.mxu0 0.0
      %1484 = vmatpush1.xpose.msra.mxu0 0.0
      %1485 = vmatprep.mubr.f32.mxu0 0.0
      %1486 = vmatmul.mubr.f32.gmra.mrb[0].mxu0 %v1413
      %v1487 = vpop.f32.mrb[0].mxu0
      %v1488 = vadd.f32 0.0, %v1487
      %v1489 = vpop.f32.mrb[0].mxu0
      %1490 = vmatprep.mubr.f32.mxu0 0.0
      %1491 = vmatmul.mubr.f32.gmra.mrb[0].mxu0 %v1415
      %v1492 = vpop.f32.mrb[0].mxu0
      %v1493 = vadd.f32 0.0, %v1492
      %v1494 = vpop.f32.mrb[0].mxu0
      %1495 = vdwg.mxu0
      %1496 = vrot.lane.b32.xlu0 %v803, 96
      %v1497 = vpop.permute.xlu0 %1496
      %1498 = vrot.lane.b32.xlu0 %v805, 96
      %v1499 = vpop.permute.xlu0 %1498
      %v1500 = vsel %vm890, %v803, 0
      %v1502 = vsel %vm890, %v805, 0
      %v1504 = vsel %vm890, %v1497, 0
      %v1506 = vsel %vm890, %v1499, 0
      %1508 = vmatprep.subr.mxu0 0.0
      %1509 = vmatpush1.xpose.msra.mxu0 %v1504
      %1510 = vmatprep.subr.mxu0 0.0
      %1511 = vmatpush1.xpose.msra.mxu0 %v1506
      %1512 = vmatprep.subr.mxu0 0.0
      %1513 = vmatpush1.xpose.msra.mxu0 0.0
      %1514 = vmatprep.subr.mxu0 0.0
      %1515 = vmatpush1.xpose.msra.mxu0 0.0
      %1516 = vmatprep.subr.mxu0 0.0
      %1517 = vmatpush1.xpose.msra.mxu0 0.0
      %1518 = vmatprep.subr.mxu0 0.0
      %1519 = vmatpush1.xpose.msra.mxu0 0.0
      %1520 = vmatprep.subr.mxu0 0.0
      %1521 = vmatpush1.xpose.msra.mxu0 0.0
      %1522 = vmatprep.subr.mxu0 0.0
      %1523 = vmatpush1.xpose.msra.mxu0 0.0
      %1524 = vmatprep.subr.mxu0 0.0
      %1525 = vmatpush1.xpose.msra.mxu0 0.0
      %1526 = vmatprep.subr.mxu0 0.0
      %1527 = vmatpush1.xpose.msra.mxu0 0.0
      %1528 = vmatprep.subr.mxu0 0.0
      %1529 = vmatpush1.xpose.msra.mxu0 0.0
      %1530 = vmatprep.subr.mxu0 0.0
      %1531 = vmatpush1.xpose.msra.mxu0 0.0
      %1532 = vmatprep.subr.mxu0 0.0
      %1533 = vmatpush1.xpose.msra.mxu0 0.0
      %1534 = vmatprep.subr.mxu0 0.0
      %1535 = vmatpush1.xpose.msra.mxu0 0.0
      %1536 = vmatprep.subr.mxu0 0.0
      %1537 = vmatpush1.xpose.msra.mxu0 0.0
      %1538 = vmatprep.subr.mxu0 0.0
      %1539 = vmatpush1.xpose.msra.mxu0 0.0
      %1540 = vmatprep.subr.mxu0 0.0
      %1541 = vmatpush1.xpose.msra.mxu0 0.0
      %1542 = vmatprep.subr.mxu0 0.0
      %1543 = vmatpush1.xpose.msra.mxu0 0.0
      %1544 = vmatprep.subr.mxu0 0.0
      %1545 = vmatpush1.xpose.msra.mxu0 0.0
      %1546 = vmatprep.subr.mxu0 0.0
      %1547 = vmatpush1.xpose.msra.mxu0 0.0
      %1548 = vmatprep.subr.mxu0 0.0
      %1549 = vmatpush1.xpose.msra.mxu0 0.0
      %1550 = vmatprep.subr.mxu0 0.0
      %1551 = vmatpush1.xpose.msra.mxu0 0.0
      %1552 = vmatprep.subr.mxu0 0.0
      %1553 = vmatpush1.xpose.msra.mxu0 0.0
      %1554 = vmatprep.subr.mxu0 0.0
      %1555 = vmatpush1.xpose.msra.mxu0 0.0
      %1556 = vmatprep.subr.mxu0 0.0
      %1557 = vmatpush1.xpose.msra.mxu0 0.0
      %1558 = vmatprep.subr.mxu0 0.0
      %1559 = vmatpush1.xpose.msra.mxu0 0.0
      %1560 = vmatprep.subr.mxu0 0.0
      %1561 = vmatpush1.xpose.msra.mxu0 0.0
      %1562 = vmatprep.subr.mxu0 0.0
      %1563 = vmatpush1.xpose.msra.mxu0 0.0
      %1564 = vmatprep.subr.mxu0 0.0
      %1565 = vmatpush1.xpose.msra.mxu0 0.0
      %1566 = vmatprep.subr.mxu0 0.0
      %1567 = vmatpush1.xpose.msra.mxu0 0.0
      %1568 = vmatprep.subr.mxu0 0.0
      %1569 = vmatpush1.xpose.msra.mxu0 0.0
      %1570 = vmatprep.subr.mxu0 0.0
      %1571 = vmatpush1.xpose.msra.mxu0 0.0
      %1572 = vmatprep.mubr.f32.mxu0 0.0
      %1573 = vmatmul.mubr.f32.gmra.mrb[0].mxu0 %v1500
      %v1574 = vpop.f32.mrb[0].mxu0
      %v1575 = vadd.f32 0.0, %v1574
      %v1576 = vpop.f32.mrb[0].mxu0
      %1577 = vmatprep.mubr.f32.mxu0 0.0
      %1578 = vmatmul.mubr.f32.gmra.mrb[0].mxu0 %v1502
      %v1579 = vpop.f32.mrb[0].mxu0
      %v1580 = vadd.f32 0.0, %v1579
      %v1581 = vpop.f32.mrb[0].mxu0
      %1582 = vdwg.mxu0
      %1583 = vrot.lane.b32.xlu0 %v807, 96
      %v1584 = vpop.permute.xlu0 %1583
      %1585 = vrot.lane.b32.xlu0 %v809, 96
      %v1586 = vpop.permute.xlu0 %1585
      %v1587 = vsel %vm890, %v807, 0
      %v1589 = vsel %vm890, %v809, 0
      %v1591 = vsel %vm890, %v1584, 0
      %v1593 = vsel %vm890, %v1586, 0
      %1595 = vmatprep.subr.mxu0 0.0
      %1596 = vmatpush1.xpose.msra.mxu0 %v1591
      %1597 = vmatprep.subr.mxu0 0.0
      %1598 = vmatpush1.xpose.msra.mxu0 %v1593
      %1599 = vmatprep.subr.mxu0 0.0
      %1600 = vmatpush1.xpose.msra.mxu0 0.0
      %1601 = vmatprep.subr.mxu0 0.0
      %1602 = vmatpush1.xpose.msra.mxu0 0.0
      %1603 = vmatprep.subr.mxu0 0.0
      %1604 = vmatpush1.xpose.msra.mxu0 0.0
      %1605 = vmatprep.subr.mxu0 0.0
      %1606 = vmatpush1.xpose.msra.mxu0 0.0
      %1607 = vmatprep.subr.mxu0 0.0
      %1608 = vmatpush1.xpose.msra.mxu0 0.0
      %1609 = vmatprep.subr.mxu0 0.0
      %1610 = vmatpush1.xpose.msra.mxu0 0.0
      %1611 = vmatprep.subr.mxu0 0.0
      %1612 = vmatpush1.xpose.msra.mxu0 0.0
      %1613 = vmatprep.subr.mxu0 0.0
      %1614 = vmatpush1.xpose.msra.mxu0 0.0
      %1615 = vmatprep.subr.mxu0 0.0
      %1616 = vmatpush1.xpose.msra.mxu0 0.0
      %1617 = vmatprep.subr.mxu0 0.0
      %1618 = vmatpush1.xpose.msra.mxu0 0.0
      %1619 = vmatprep.subr.mxu0 0.0
      %1620 = vmatpush1.xpose.msra.mxu0 0.0
      %1621 = vmatprep.subr.mxu0 0.0
      %1622 = vmatpush1.xpose.msra.mxu0 0.0
      %1623 = vmatprep.subr.mxu0 0.0
      %1624 = vmatpush1.xpose.msra.mxu0 0.0
      %1625 = vmatprep.subr.mxu0 0.0
      %1626 = vmatpush1.xpose.msra.mxu0 0.0
      %1627 = vmatprep.subr.mxu0 0.0
      %1628 = vmatpush1.xpose.msra.mxu0 0.0
      %1629 = vmatprep.subr.mxu0 0.0
      %1630 = vmatpush1.xpose.msra.mxu0 0.0
      %1631 = vmatprep.subr.mxu0 0.0
      %1632 = vmatpush1.xpose.msra.mxu0 0.0
      %1633 = vmatprep.subr.mxu0 0.0
      %1634 = vmatpush1.xpose.msra.mxu0 0.0
      %1635 = vmatprep.subr.mxu0 0.0
      %1636 = vmatpush1.xpose.msra.mxu0 0.0
      %1637 = vmatprep.subr.mxu0 0.0
      %1638 = vmatpush1.xpose.msra.mxu0 0.0
      %1639 = vmatprep.subr.mxu0 0.0
      %1640 = vmatpush1.xpose.msra.mxu0 0.0
      %1641 = vmatprep.subr.mxu0 0.0
      %1642 = vmatpush1.xpose.msra.mxu0 0.0
      %1643 = vmatprep.subr.mxu0 0.0
      %1644 = vmatpush1.xpose.msra.mxu0 0.0
      %1645 = vmatprep.subr.mxu0 0.0
      %1646 = vmatpush1.xpose.msra.mxu0 0.0
      %1647 = vmatprep.subr.mxu0 0.0
      %1648 = vmatpush1.xpose.msra.mxu0 0.0
      %1649 = vmatprep.subr.mxu0 0.0
      %1650 = vmatpush1.xpose.msra.mxu0 0.0
      %1651 = vmatprep.subr.mxu0 0.0
      %1652 = vmatpush1.xpose.msra.mxu0 0.0
      %1653 = vmatprep.subr.mxu0 0.0
      %1654 = vmatpush1.xpose.msra.mxu0 0.0
      %1655 = vmatprep.subr.mxu0 0.0
      %1656 = vmatpush1.xpose.msra.mxu0 0.0
      %1657 = vmatprep.subr.mxu0 0.0
      %1658 = vmatpush1.xpose.msra.mxu0 0.0
      %1659 = vmatprep.mubr.f32.mxu0 0.0
      %1660 = vmatmul.mubr.f32.gmra.mrb[0].mxu0 %v1587
      %v1661 = vpop.f32.mrb[0].mxu0
      %v1662 = vadd.f32 0.0, %v1661
      %v1663 = vpop.f32.mrb[0].mxu0
      %1664 = vmatprep.mubr.f32.mxu0 0.0
      %1665 = vmatmul.mubr.f32.gmra.mrb[0].mxu0 %v1589
      %v1666 = vpop.f32.mrb[0].mxu0
      %v1667 = vadd.f32 0.0, %v1666
      %v1668 = vpop.f32.mrb[0].mxu0
      %1669 = vdwg.mxu0
      %1670 = vrot.lane.b32.xlu0 %v811, 96
      %v1671 = vpop.permute.xlu0 %1670
      %1672 = vrot.lane.b32.xlu0 %v813, 96
      %v1673 = vpop.permute.xlu0 %1672
      %v1674 = vsel %vm890, %v811, 0
      %v1676 = vsel %vm890, %v813, 0
      %v1678 = vsel %vm890, %v1671, 0
      %v1680 = vsel %vm890, %v1673, 0
      %1682 = vmatprep.subr.mxu0 0.0
      %1683 = vmatpush1.xpose.msra.mxu0 %v1678
      %1684 = vmatprep.subr.mxu0 0.0
      %1685 = vmatpush1.xpose.msra.mxu0 %v1680
      %1686 = vmatprep.subr.mxu0 0.0
      %1687 = vmatpush1.xpose.msra.mxu0 0.0
      %1688 = vmatprep.subr.mxu0 0.0
      %1689 = vmatpush1.xpose.msra.mxu0 0.0
      %1690 = vmatprep.subr.mxu0 0.0
      %1691 = vmatpush1.xpose.msra.mxu0 0.0
      %1692 = vmatprep.subr.mxu0 0.0
      %1693 = vmatpush1.xpose.msra.mxu0 0.0
      %1694 = vmatprep.subr.mxu0 0.0
      %1695 = vmatpush1.xpose.msra.mxu0 0.0
      %1696 = vmatprep.subr.mxu0 0.0
      %1697 = vmatpush1.xpose.msra.mxu0 0.0
      %1698 = vmatprep.subr.mxu0 0.0
      %1699 = vmatpush1.xpose.msra.mxu0 0.0
      %1700 = vmatprep.subr.mxu0 0.0
      %1701 = vmatpush1.xpose.msra.mxu0 0.0
      %1702 = vmatprep.subr.mxu0 0.0
      %1703 = vmatpush1.xpose.msra.mxu0 0.0
      %1704 = vmatprep.subr.mxu0 0.0
      %1705 = vmatpush1.xpose.msra.mxu0 0.0
      %1706 = vmatprep.subr.mxu0 0.0
      %1707 = vmatpush1.xpose.msra.mxu0 0.0
      %1708 = vmatprep.subr.mxu0 0.0
      %1709 = vmatpush1.xpose.msra.mxu0 0.0
      %1710 = vmatprep.subr.mxu0 0.0
      %1711 = vmatpush1.xpose.msra.mxu0 0.0
      %1712 = vmatprep.subr.mxu0 0.0
      %1713 = vmatpush1.xpose.msra.mxu0 0.0
      %1714 = vmatprep.subr.mxu0 0.0
      %1715 = vmatpush1.xpose.msra.mxu0 0.0
      %1716 = vmatprep.subr.mxu0 0.0
      %1717 = vmatpush1.xpose.msra.mxu0 0.0
      %1718 = vmatprep.subr.mxu0 0.0
      %1719 = vmatpush1.xpose.msra.mxu0 0.0
      %1720 = vmatprep.subr.mxu0 0.0
      %1721 = vmatpush1.xpose.msra.mxu0 0.0
      %1722 = vmatprep.subr.mxu0 0.0
      %1723 = vmatpush1.xpose.msra.mxu0 0.0
      %1724 = vmatprep.subr.mxu0 0.0
      %1725 = vmatpush1.xpose.msra.mxu0 0.0
      %1726 = vmatprep.subr.mxu0 0.0
      %1727 = vmatpush1.xpose.msra.mxu0 0.0
      %1728 = vmatprep.subr.mxu0 0.0
      %1729 = vmatpush1.xpose.msra.mxu0 0.0
      %1730 = vmatprep.subr.mxu0 0.0
      %1731 = vmatpush1.xpose.msra.mxu0 0.0
      %1732 = vmatprep.subr.mxu0 0.0
      %1733 = vmatpush1.xpose.msra.mxu0 0.0
      %1734 = vmatprep.subr.mxu0 0.0
      %1735 = vmatpush1.xpose.msra.mxu0 0.0
      %1736 = vmatprep.subr.mxu0 0.0
      %1737 = vmatpush1.xpose.msra.mxu0 0.0
      %1738 = vmatprep.subr.mxu0 0.0
      %1739 = vmatpush1.xpose.msra.mxu0 0.0
      %1740 = vmatprep.subr.mxu0 0.0
      %1741 = vmatpush1.xpose.msra.mxu0 0.0
      %1742 = vmatprep.subr.mxu0 0.0
      %1743 = vmatpush1.xpose.msra.mxu0 0.0
      %1744 = vmatprep.subr.mxu0 0.0
      %1745 = vmatpush1.xpose.msra.mxu0 0.0
      %1746 = vmatprep.mubr.f32.mxu0 0.0
      %1747 = vmatmul.mubr.f32.gmra.mrb[0].mxu0 %v1674
      %v1748 = vpop.f32.mrb[0].mxu0
      %v1749 = vadd.f32 0.0, %v1748
      %v1750 = vpop.f32.mrb[0].mxu0
      %1751 = vmatprep.mubr.f32.mxu0 0.0
      %1752 = vmatmul.mubr.f32.gmra.mrb[0].mxu0 %v1676
      %v1753 = vpop.f32.mrb[0].mxu0
      %v1754 = vadd.f32 0.0, %v1753
      %v1755 = vpop.f32.mrb[0].mxu0
      %1756 = vdwg.mxu0
      %1757 = vrot.lane.b32.xlu0 %v815, 96
      %v1758 = vpop.permute.xlu0 %1757
      %1759 = vrot.lane.b32.xlu0 %v817, 96
      %v1760 = vpop.permute.xlu0 %1759
      %v1761 = vsel %vm890, %v815, 0
      %v1763 = vsel %vm890, %v817, 0
      %v1765 = vsel %vm890, %v1758, 0
      %v1767 = vsel %vm890, %v1760, 0
      %1769 = vmatprep.subr.mxu0 0.0
      %1770 = vmatpush1.xpose.msra.mxu0 %v1765
      %1771 = vmatprep.subr.mxu0 0.0
      %1772 = vmatpush1.xpose.msra.mxu0 %v1767
      %1773 = vmatprep.subr.mxu0 0.0
      %1774 = vmatpush1.xpose.msra.mxu0 0.0
      %1775 = vmatprep.subr.mxu0 0.0
      %1776 = vmatpush1.xpose.msra.mxu0 0.0
      %1777 = vmatprep.subr.mxu0 0.0
      %1778 = vmatpush1.xpose.msra.mxu0 0.0
      %1779 = vmatprep.subr.mxu0 0.0
      %1780 = vmatpush1.xpose.msra.mxu0 0.0
      %1781 = vmatprep.subr.mxu0 0.0
      %1782 = vmatpush1.xpose.msra.mxu0 0.0
      %1783 = vmatprep.subr.mxu0 0.0
      %1784 = vmatpush1.xpose.msra.mxu0 0.0
      %1785 = vmatprep.subr.mxu0 0.0
      %1786 = vmatpush1.xpose.msra.mxu0 0.0
      %1787 = vmatprep.subr.mxu0 0.0
      %1788 = vmatpush1.xpose.msra.mxu0 0.0
      %1789 = vmatprep.subr.mxu0 0.0
      %1790 = vmatpush1.xpose.msra.mxu0 0.0
      %1791 = vmatprep.subr.mxu0 0.0
      %1792 = vmatpush1.xpose.msra.mxu0 0.0
      %1793 = vmatprep.subr.mxu0 0.0
      %1794 = vmatpush1.xpose.msra.mxu0 0.0
      %1795 = vmatprep.subr.mxu0 0.0
      %1796 = vmatpush1.xpose.msra.mxu0 0.0
      %1797 = vmatprep.subr.mxu0 0.0
      %1798 = vmatpush1.xpose.msra.mxu0 0.0
      %1799 = vmatprep.subr.mxu0 0.0
      %1800 = vmatpush1.xpose.msra.mxu0 0.0
      %1801 = vmatprep.subr.mxu0 0.0
      %1802 = vmatpush1.xpose.msra.mxu0 0.0
      %1803 = vmatprep.subr.mxu0 0.0
      %1804 = vmatpush1.xpose.msra.mxu0 0.0
      %1805 = vmatprep.subr.mxu0 0.0
      %1806 = vmatpush1.xpose.msra.mxu0 0.0
      %1807 = vmatprep.subr.mxu0 0.0
      %1808 = vmatpush1.xpose.msra.mxu0 0.0
      %1809 = vmatprep.subr.mxu0 0.0
      %1810 = vmatpush1.xpose.msra.mxu0 0.0
      %1811 = vmatprep.subr.mxu0 0.0
      %1812 = vmatpush1.xpose.msra.mxu0 0.0
      %1813 = vmatprep.subr.mxu0 0.0
      %1814 = vmatpush1.xpose.msra.mxu0 0.0
      %1815 = vmatprep.subr.mxu0 0.0
      %1816 = vmatpush1.xpose.msra.mxu0 0.0
      %1817 = vmatprep.subr.mxu0 0.0
      %1818 = vmatpush1.xpose.msra.mxu0 0.0
      %1819 = vmatprep.subr.mxu0 0.0
      %1820 = vmatpush1.xpose.msra.mxu0 0.0
      %1821 = vmatprep.subr.mxu0 0.0
      %1822 = vmatpush1.xpose.msra.mxu0 0.0
      %1823 = vmatprep.subr.mxu0 0.0
      %1824 = vmatpush1.xpose.msra.mxu0 0.0
      %1825 = vmatprep.subr.mxu0 0.0
      %1826 = vmatpush1.xpose.msra.mxu0 0.0
      %1827 = vmatprep.subr.mxu0 0.0
      %1828 = vmatpush1.xpose.msra.mxu0 0.0
      %1829 = vmatprep.subr.mxu0 0.0
      %1830 = vmatpush1.xpose.msra.mxu0 0.0
      %1831 = vmatprep.subr.mxu0 0.0
      %1832 = vmatpush1.xpose.msra.mxu0 0.0
      %1833 = vmatprep.mubr.f32.mxu0 0.0
      %1834 = vmatmul.mubr.f32.gmra.mrb[0].mxu0 %v1761
      %v1835 = vpop.f32.mrb[0].mxu0
      %v1836 = vadd.f32 0.0, %v1835
      %v1837 = vpop.f32.mrb[0].mxu0
      %1838 = vmatprep.mubr.f32.mxu0 0.0
      %1839 = vmatmul.mubr.f32.gmra.mrb[0].mxu0 %v1763
      %v1840 = vpop.f32.mrb[0].mxu0
      %v1841 = vadd.f32 0.0, %v1840
      %v1842 = vpop.f32.mrb[0].mxu0
      %1843 = vdwg.mxu0
      %1844 = vrot.lane.b32.xlu0 %v819, 96
      %v1845 = vpop.permute.xlu0 %1844
      %1846 = vrot.lane.b32.xlu0 %v821, 96
      %v1847 = vpop.permute.xlu0 %1846
      %v1848 = vsel %vm890, %v819, 0
      %v1850 = vsel %vm890, %v821, 0
      %v1852 = vsel %vm890, %v1845, 0
      %v1854 = vsel %vm890, %v1847, 0
      %1856 = vmatprep.subr.mxu0 0.0
      %1857 = vmatpush1.xpose.msra.mxu0 %v1852
      %1858 = vmatprep.subr.mxu0 0.0
      %1859 = vmatpush1.xpose.msra.mxu0 %v1854
      %1860 = vmatprep.subr.mxu0 0.0
      %1861 = vmatpush1.xpose.msra.mxu0 0.0
      %1862 = vmatprep.subr.mxu0 0.0
      %1863 = vmatpush1.xpose.msra.mxu0 0.0
      %1864 = vmatprep.subr.mxu0 0.0
      %1865 = vmatpush1.xpose.msra.mxu0 0.0
      %1866 = vmatprep.subr.mxu0 0.0
      %1867 = vmatpush1.xpose.msra.mxu0 0.0
      %1868 = vmatprep.subr.mxu0 0.0
      %1869 = vmatpush1.xpose.msra.mxu0 0.0
      %1870 = vmatprep.subr.mxu0 0.0
      %1871 = vmatpush1.xpose.msra.mxu0 0.0
      %1872 = vmatprep.subr.mxu0 0.0
      %1873 = vmatpush1.xpose.msra.mxu0 0.0
      %1874 = vmatprep.subr.mxu0 0.0
      %1875 = vmatpush1.xpose.msra.mxu0 0.0
      %1876 = vmatprep.subr.mxu0 0.0
      %1877 = vmatpush1.xpose.msra.mxu0 0.0
      %1878 = vmatprep.subr.mxu0 0.0
      %1879 = vmatpush1.xpose.msra.mxu0 0.0
      %1880 = vmatprep.subr.mxu0 0.0
      %1881 = vmatpush1.xpose.msra.mxu0 0.0
      %1882 = vmatprep.subr.mxu0 0.0
      %1883 = vmatpush1.xpose.msra.mxu0 0.0
      %1884 = vmatprep.subr.mxu0 0.0
      %1885 = vmatpush1.xpose.msra.mxu0 0.0
      %1886 = vmatprep.subr.mxu0 0.0
      %1887 = vmatpush1.xpose.msra.mxu0 0.0
      %1888 = vmatprep.subr.mxu0 0.0
      %1889 = vmatpush1.xpose.msra.mxu0 0.0
      %1890 = vmatprep.subr.mxu0 0.0
      %1891 = vmatpush1.xpose.msra.mxu0 0.0
      %1892 = vmatprep.subr.mxu0 0.0
      %1893 = vmatpush1.xpose.msra.mxu0 0.0
      %1894 = vmatprep.subr.mxu0 0.0
      %1895 = vmatpush1.xpose.msra.mxu0 0.0
      %1896 = vmatprep.subr.mxu0 0.0
      %1897 = vmatpush1.xpose.msra.mxu0 0.0
      %1898 = vmatprep.subr.mxu0 0.0
      %1899 = vmatpush1.xpose.msra.mxu0 0.0
      %1900 = vmatprep.subr.mxu0 0.0
      %1901 = vmatpush1.xpose.msra.mxu0 0.0
      %1902 = vmatprep.subr.mxu0 0.0
      %1903 = vmatpush1.xpose.msra.mxu0 0.0
      %1904 = vmatprep.subr.mxu0 0.0
      %1905 = vmatpush1.xpose.msra.mxu0 0.0
      %1906 = vmatprep.subr.mxu0 0.0
      %1907 = vmatpush1.xpose.msra.mxu0 0.0
      %1908 = vmatprep.subr.mxu0 0.0
      %1909 = vmatpush1.xpose.msra.mxu0 0.0
      %1910 = vmatprep.subr.mxu0 0.0
      %1911 = vmatpush1.xpose.msra.mxu0 0.0
      %1912 = vmatprep.subr.mxu0 0.0
      %1913 = vmatpush1.xpose.msra.mxu0 0.0
      %1914 = vmatprep.subr.mxu0 0.0
      %1915 = vmatpush1.xpose.msra.mxu0 0.0
      %1916 = vmatprep.subr.mxu0 0.0
      %1917 = vmatpush1.xpose.msra.mxu0 0.0
      %1918 = vmatprep.subr.mxu0 0.0
      %1919 = vmatpush1.xpose.msra.mxu0 0.0
      %1920 = vmatprep.mubr.f32.mxu0 0.0
      %1921 = vmatmul.mubr.f32.gmra.mrb[0].mxu0 %v1848
      %v1922 = vpop.f32.mrb[0].mxu0
      %v1923 = vadd.f32 0.0, %v1922
      %v1924 = vpop.f32.mrb[0].mxu0
      %1925 = vmatprep.mubr.f32.mxu0 0.0
      %1926 = vmatmul.mubr.f32.gmra.mrb[0].mxu0 %v1850
      %v1927 = vpop.f32.mrb[0].mxu0
      %v1928 = vadd.f32 0.0, %v1927
      %v1929 = vpop.f32.mrb[0].mxu0
      %1930 = vdwg.mxu0
      %1931 = vrot.lane.b32.xlu0 %v823, 96
      %v1932 = vpop.permute.xlu0 %1931
      %1933 = vrot.lane.b32.xlu0 %v825, 96
      %v1934 = vpop.permute.xlu0 %1933
      %v1935 = vsel %vm890, %v823, 0
      %v1937 = vsel %vm890, %v825, 0
      %v1939 = vsel %vm890, %v1932, 0
      %v1941 = vsel %vm890, %v1934, 0
      %1943 = vmatprep.subr.mxu0 0.0
      %1944 = vmatpush1.xpose.msra.mxu0 %v1939
      %1945 = vmatprep.subr.mxu0 0.0
      %1946 = vmatpush1.xpose.msra.mxu0 %v1941
      %1947 = vmatprep.subr.mxu0 0.0
      %1948 = vmatpush1.xpose.msra.mxu0 0.0
      %1949 = vmatprep.subr.mxu0 0.0
      %1950 = vmatpush1.xpose.msra.mxu0 0.0
      %1951 = vmatprep.subr.mxu0 0.0
      %1952 = vmatpush1.xpose.msra.mxu0 0.0
      %1953 = vmatprep.subr.mxu0 0.0
      %1954 = vmatpush1.xpose.msra.mxu0 0.0
      %1955 = vmatprep.subr.mxu0 0.0
      %1956 = vmatpush1.xpose.msra.mxu0 0.0
      %1957 = vmatprep.subr.mxu0 0.0
      %1958 = vmatpush1.xpose.msra.mxu0 0.0
      %1959 = vmatprep.subr.mxu0 0.0
      %1960 = vmatpush1.xpose.msra.mxu0 0.0
      %1961 = vmatprep.subr.mxu0 0.0
      %1962 = vmatpush1.xpose.msra.mxu0 0.0
      %1963 = vmatprep.subr.mxu0 0.0
      %1964 = vmatpush1.xpose.msra.mxu0 0.0
      %1965 = vmatprep.subr.mxu0 0.0
      %1966 = vmatpush1.xpose.msra.mxu0 0.0
      %1967 = vmatprep.subr.mxu0 0.0
      %1968 = vmatpush1.xpose.msra.mxu0 0.0
      %1969 = vmatprep.subr.mxu0 0.0
      %1970 = vmatpush1.xpose.msra.mxu0 0.0
      %1971 = vmatprep.subr.mxu0 0.0
      %1972 = vmatpush1.xpose.msra.mxu0 0.0
      %1973 = vmatprep.subr.mxu0 0.0
      %1974 = vmatpush1.xpose.msra.mxu0 0.0
      %1975 = vmatprep.subr.mxu0 0.0
      %1976 = vmatpush1.xpose.msra.mxu0 0.0
      %1977 = vmatprep.subr.mxu0 0.0
      %1978 = vmatpush1.xpose.msra.mxu0 0.0
      %1979 = vmatprep.subr.mxu0 0.0
      %1980 = vmatpush1.xpose.msra.mxu0 0.0
      %1981 = vmatprep.subr.mxu0 0.0
      %1982 = vmatpush1.xpose.msra.mxu0 0.0
      %1983 = vmatprep.subr.mxu0 0.0
      %1984 = vmatpush1.xpose.msra.mxu0 0.0
      %1985 = vmatprep.subr.mxu0 0.0
      %1986 = vmatpush1.xpose.msra.mxu0 0.0
      %1987 = vmatprep.subr.mxu0 0.0
      %1988 = vmatpush1.xpose.msra.mxu0 0.0
      %1989 = vmatprep.subr.mxu0 0.0
      %1990 = vmatpush1.xpose.msra.mxu0 0.0
      %1991 = vmatprep.subr.mxu0 0.0
      %1992 = vmatpush1.xpose.msra.mxu0 0.0
      %1993 = vmatprep.subr.mxu0 0.0
      %1994 = vmatpush1.xpose.msra.mxu0 0.0
      %1995 = vmatprep.subr.mxu0 0.0
      %1996 = vmatpush1.xpose.msra.mxu0 0.0
      %1997 = vmatprep.subr.mxu0 0.0
      %1998 = vmatpush1.xpose.msra.mxu0 0.0
      %1999 = vmatprep.subr.mxu0 0.0
      %2000 = vmatpush1.xpose.msra.mxu0 0.0
      %2001 = vmatprep.subr.mxu0 0.0
      %2002 = vmatpush1.xpose.msra.mxu0 0.0
      %2003 = vmatprep.subr.mxu0 0.0
      %2004 = vmatpush1.xpose.msra.mxu0 0.0
      %2005 = vmatprep.subr.mxu0 0.0
      %2006 = vmatpush1.xpose.msra.mxu0 0.0
      %2007 = vmatprep.mubr.f32.mxu0 0.0
      %2008 = vmatmul.mubr.f32.gmra.mrb[0].mxu0 %v1935
      %v2009 = vpop.f32.mrb[0].mxu0
      %v2010 = vadd.f32 0.0, %v2009
      %v2011 = vpop.f32.mrb[0].mxu0
      %2012 = vmatprep.mubr.f32.mxu0 0.0
      %2013 = vmatmul.mubr.f32.gmra.mrb[0].mxu0 %v1937
      %v2014 = vpop.f32.mrb[0].mxu0
      %v2015 = vadd.f32 0.0, %v2014
      %v2016 = vpop.f32.mrb[0].mxu0
      %2017 = vdwg.mxu0
      %2018 = vrot.lane.b32.xlu0 %v827, 96
      %v2019 = vpop.permute.xlu0 %2018
      %2020 = vrot.lane.b32.xlu0 %v829, 96
      %v2021 = vpop.permute.xlu0 %2020
      %v2022 = vsel %vm890, %v827, 0
      %v2024 = vsel %vm890, %v829, 0
      %v2026 = vsel %vm890, %v2019, 0
      %v2028 = vsel %vm890, %v2021, 0
      %2030 = vmatprep.subr.mxu0 0.0
      %2031 = vmatpush1.xpose.msra.mxu0 %v2026
      %2032 = vmatprep.subr.mxu0 0.0
      %2033 = vmatpush1.xpose.msra.mxu0 %v2028
      %2034 = vmatprep.subr.mxu0 0.0
      %2035 = vmatpush1.xpose.msra.mxu0 0.0
      %2036 = vmatprep.subr.mxu0 0.0
      %2037 = vmatpush1.xpose.msra.mxu0 0.0
      %2038 = vmatprep.subr.mxu0 0.0
      %2039 = vmatpush1.xpose.msra.mxu0 0.0
      %2040 = vmatprep.subr.mxu0 0.0
      %2041 = vmatpush1.xpose.msra.mxu0 0.0
      %2042 = vmatprep.subr.mxu0 0.0
      %2043 = vmatpush1.xpose.msra.mxu0 0.0
      %2044 = vmatprep.subr.mxu0 0.0
      %2045 = vmatpush1.xpose.msra.mxu0 0.0
      %2046 = vmatprep.subr.mxu0 0.0
      %2047 = vmatpush1.xpose.msra.mxu0 0.0
      %2048 = vmatprep.subr.mxu0 0.0
      %2049 = vmatpush1.xpose.msra.mxu0 0.0
      %2050 = vmatprep.subr.mxu0 0.0
      %2051 = vmatpush1.xpose.msra.mxu0 0.0
      %2052 = vmatprep.subr.mxu0 0.0
      %2053 = vmatpush1.xpose.msra.mxu0 0.0
      %2054 = vmatprep.subr.mxu0 0.0
      %2055 = vmatpush1.xpose.msra.mxu0 0.0
      %2056 = vmatprep.subr.mxu0 0.0
      %2057 = vmatpush1.xpose.msra.mxu0 0.0
      %2058 = vmatprep.subr.mxu0 0.0
      %2059 = vmatpush1.xpose.msra.mxu0 0.0
      %2060 = vmatprep.subr.mxu0 0.0
      %2061 = vmatpush1.xpose.msra.mxu0 0.0
      %2062 = vmatprep.subr.mxu0 0.0
      %2063 = vmatpush1.xpose.msra.mxu0 0.0
      %2064 = vmatprep.subr.mxu0 0.0
      %2065 = vmatpush1.xpose.msra.mxu0 0.0
      %2066 = vmatprep.subr.mxu0 0.0
      %2067 = vmatpush1.xpose.msra.mxu0 0.0
      %2068 = vmatprep.subr.mxu0 0.0
      %2069 = vmatpush1.xpose.msra.mxu0 0.0
      %2070 = vmatprep.subr.mxu0 0.0
      %2071 = vmatpush1.xpose.msra.mxu0 0.0
      %2072 = vmatprep.subr.mxu0 0.0
      %2073 = vmatpush1.xpose.msra.mxu0 0.0
      %2074 = vmatprep.subr.mxu0 0.0
      %2075 = vmatpush1.xpose.msra.mxu0 0.0
      %2076 = vmatprep.subr.mxu0 0.0
      %2077 = vmatpush1.xpose.msra.mxu0 0.0
      %2078 = vmatprep.subr.mxu0 0.0
      %2079 = vmatpush1.xpose.msra.mxu0 0.0
      %2080 = vmatprep.subr.mxu0 0.0
      %2081 = vmatpush1.xpose.msra.mxu0 0.0
      %2082 = vmatprep.subr.mxu0 0.0
      %2083 = vmatpush1.xpose.msra.mxu0 0.0
      %2084 = vmatprep.subr.mxu0 0.0
      %2085 = vmatpush1.xpose.msra.mxu0 0.0
      %2086 = vmatprep.subr.mxu0 0.0
      %2087 = vmatpush1.xpose.msra.mxu0 0.0
      %2088 = vmatprep.subr.mxu0 0.0
      %2089 = vmatpush1.xpose.msra.mxu0 0.0
      %2090 = vmatprep.subr.mxu0 0.0
      %2091 = vmatpush1.xpose.msra.mxu0 0.0
      %2092 = vmatprep.subr.mxu0 0.0
      %2093 = vmatpush1.xpose.msra.mxu0 0.0
      %2094 = vmatprep.mubr.f32.mxu0 0.0
      %2095 = vmatmul.mubr.f32.gmra.mrb[0].mxu0 %v2022
      %v2096 = vpop.f32.mrb[0].mxu0
      %v2097 = vadd.f32 0.0, %v2096
      %v2098 = vpop.f32.mrb[0].mxu0
      %2099 = vmatprep.mubr.f32.mxu0 0.0
      %2100 = vmatmul.mubr.f32.gmra.mrb[0].mxu0 %v2024
      %v2101 = vpop.f32.mrb[0].mxu0
      %v2102 = vadd.f32 0.0, %v2101
      %v2103 = vpop.f32.mrb[0].mxu0
      %2104 = vdwg.mxu0
      %2105 = vrot.lane.b32.xlu0 %v831, 96
      %v2106 = vpop.permute.xlu0 %2105
      %2107 = vrot.lane.b32.xlu0 %v833, 96
      %v2108 = vpop.permute.xlu0 %2107
      %v2109 = vsel %vm890, %v831, 0
      %v2111 = vsel %vm890, %v833, 0
      %v2113 = vsel %vm890, %v2106, 0
      %v2115 = vsel %vm890, %v2108, 0
      %2117 = vmatprep.subr.mxu0 0.0
      %2118 = vmatpush1.xpose.msra.mxu0 %v2113
      %2119 = vmatprep.subr.mxu0 0.0
      %2120 = vmatpush1.xpose.msra.mxu0 %v2115
      %2121 = vmatprep.subr.mxu0 0.0
      %2122 = vmatpush1.xpose.msra.mxu0 0.0
      %2123 = vmatprep.subr.mxu0 0.0
      %2124 = vmatpush1.xpose.msra.mxu0 0.0
      %2125 = vmatprep.subr.mxu0 0.0
      %2126 = vmatpush1.xpose.msra.mxu0 0.0
      %2127 = vmatprep.subr.mxu0 0.0
      %2128 = vmatpush1.xpose.msra.mxu0 0.0
      %2129 = vmatprep.subr.mxu0 0.0
      %2130 = vmatpush1.xpose.msra.mxu0 0.0
      %2131 = vmatprep.subr.mxu0 0.0
      %2132 = vmatpush1.xpose.msra.mxu0 0.0
      %2133 = vmatprep.subr.mxu0 0.0
      %2134 = vmatpush1.xpose.msra.mxu0 0.0
      %2135 = vmatprep.subr.mxu0 0.0
      %2136 = vmatpush1.xpose.msra.mxu0 0.0
      %2137 = vmatprep.subr.mxu0 0.0
      %2138 = vmatpush1.xpose.msra.mxu0 0.0
      %2139 = vmatprep.subr.mxu0 0.0
      %2140 = vmatpush1.xpose.msra.mxu0 0.0
      %2141 = vmatprep.subr.mxu0 0.0
      %2142 = vmatpush1.xpose.msra.mxu0 0.0
      %2143 = vmatprep.subr.mxu0 0.0
      %2144 = vmatpush1.xpose.msra.mxu0 0.0
      %2145 = vmatprep.subr.mxu0 0.0
      %2146 = vmatpush1.xpose.msra.mxu0 0.0
      %2147 = vmatprep.subr.mxu0 0.0
      %2148 = vmatpush1.xpose.msra.mxu0 0.0
      %2149 = vmatprep.subr.mxu0 0.0
      %2150 = vmatpush1.xpose.msra.mxu0 0.0
      %2151 = vmatprep.subr.mxu0 0.0
      %2152 = vmatpush1.xpose.msra.mxu0 0.0
      %2153 = vmatprep.subr.mxu0 0.0
      %2154 = vmatpush1.xpose.msra.mxu0 0.0
      %2155 = vmatprep.subr.mxu0 0.0
      %2156 = vmatpush1.xpose.msra.mxu0 0.0
      %2157 = vmatprep.subr.mxu0 0.0
      %2158 = vmatpush1.xpose.msra.mxu0 0.0
      %2159 = vmatprep.subr.mxu0 0.0
      %2160 = vmatpush1.xpose.msra.mxu0 0.0
      %2161 = vmatprep.subr.mxu0 0.0
      %2162 = vmatpush1.xpose.msra.mxu0 0.0
      %2163 = vmatprep.subr.mxu0 0.0
      %2164 = vmatpush1.xpose.msra.mxu0 0.0
      %2165 = vmatprep.subr.mxu0 0.0
      %2166 = vmatpush1.xpose.msra.mxu0 0.0
      %2167 = vmatprep.subr.mxu0 0.0
      %2168 = vmatpush1.xpose.msra.mxu0 0.0
      %2169 = vmatprep.subr.mxu0 0.0
      %2170 = vmatpush1.xpose.msra.mxu0 0.0
      %2171 = vmatprep.subr.mxu0 0.0
      %2172 = vmatpush1.xpose.msra.mxu0 0.0
      %2173 = vmatprep.subr.mxu0 0.0
      %2174 = vmatpush1.xpose.msra.mxu0 0.0
      %2175 = vmatprep.subr.mxu0 0.0
      %2176 = vmatpush1.xpose.msra.mxu0 0.0
      %2177 = vmatprep.subr.mxu0 0.0
      %2178 = vmatpush1.xpose.msra.mxu0 0.0
      %2179 = vmatprep.subr.mxu0 0.0
      %2180 = vmatpush1.xpose.msra.mxu0 0.0
      %2181 = vmatprep.mubr.f32.mxu0 0.0
      %2182 = vmatmul.mubr.f32.gmra.mrb[0].mxu0 %v2109
      %v2183 = vpop.f32.mrb[0].mxu0
      %v2184 = vadd.f32 0.0, %v2183
      %v2185 = vpop.f32.mrb[0].mxu0
      %2186 = vmatprep.mubr.f32.mxu0 0.0
      %2187 = vmatmul.mubr.f32.gmra.mrb[0].mxu0 %v2111
      %v2188 = vpop.f32.mrb[0].mxu0
      %v2189 = vadd.f32 0.0, %v2188
      %v2190 = vpop.f32.mrb[0].mxu0
      %2191 = vdwg.mxu0
      %2192 = vrot.lane.b32.xlu0 %v835, 96
      %v2193 = vpop.permute.xlu0 %2192
      %2194 = vrot.lane.b32.xlu0 %v837, 96
      %v2195 = vpop.permute.xlu0 %2194
      %v2196 = vsel %vm890, %v835, 0
      %v2198 = vsel %vm890, %v837, 0
      %v2200 = vsel %vm890, %v2193, 0
      %v2202 = vsel %vm890, %v2195, 0
      %2204 = vmatprep.subr.mxu0 0.0
      %2205 = vmatpush1.xpose.msra.mxu0 %v2200
      %2206 = vmatprep.subr.mxu0 0.0
      %2207 = vmatpush1.xpose.msra.mxu0 %v2202
      %2208 = vmatprep.subr.mxu0 0.0
      %2209 = vmatpush1.xpose.msra.mxu0 0.0
      %2210 = vmatprep.subr.mxu0 0.0
      %2211 = vmatpush1.xpose.msra.mxu0 0.0
      %2212 = vmatprep.subr.mxu0 0.0
      %2213 = vmatpush1.xpose.msra.mxu0 0.0
      %2214 = vmatprep.subr.mxu0 0.0
      %2215 = vmatpush1.xpose.msra.mxu0 0.0
      %2216 = vmatprep.subr.mxu0 0.0
      %2217 = vmatpush1.xpose.msra.mxu0 0.0
      %2218 = vmatprep.subr.mxu0 0.0
      %2219 = vmatpush1.xpose.msra.mxu0 0.0
      %2220 = vmatprep.subr.mxu0 0.0
      %2221 = vmatpush1.xpose.msra.mxu0 0.0
      %2222 = vmatprep.subr.mxu0 0.0
      %2223 = vmatpush1.xpose.msra.mxu0 0.0
      %2224 = vmatprep.subr.mxu0 0.0
      %2225 = vmatpush1.xpose.msra.mxu0 0.0
      %2226 = vmatprep.subr.mxu0 0.0
      %2227 = vmatpush1.xpose.msra.mxu0 0.0
      %2228 = vmatprep.subr.mxu0 0.0
      %2229 = vmatpush1.xpose.msra.mxu0 0.0
      %2230 = vmatprep.subr.mxu0 0.0
      %2231 = vmatpush1.xpose.msra.mxu0 0.0
      %2232 = vmatprep.subr.mxu0 0.0
      %2233 = vmatpush1.xpose.msra.mxu0 0.0
      %2234 = vmatprep.subr.mxu0 0.0
      %2235 = vmatpush1.xpose.msra.mxu0 0.0
      %2236 = vmatprep.subr.mxu0 0.0
      %2237 = vmatpush1.xpose.msra.mxu0 0.0
      %2238 = vmatprep.subr.mxu0 0.0
      %2239 = vmatpush1.xpose.msra.mxu0 0.0
      %2240 = vmatprep.subr.mxu0 0.0
      %2241 = vmatpush1.xpose.msra.mxu0 0.0
      %2242 = vmatprep.subr.mxu0 0.0
      %2243 = vmatpush1.xpose.msra.mxu0 0.0
      %2244 = vmatprep.subr.mxu0 0.0
      %2245 = vmatpush1.xpose.msra.mxu0 0.0
      %2246 = vmatprep.subr.mxu0 0.0
      %2247 = vmatpush1.xpose.msra.mxu0 0.0
      %2248 = vmatprep.subr.mxu0 0.0
      %2249 = vmatpush1.xpose.msra.mxu0 0.0
      %2250 = vmatprep.subr.mxu0 0.0
      %2251 = vmatpush1.xpose.msra.mxu0 0.0
      %2252 = vmatprep.subr.mxu0 0.0
      %2253 = vmatpush1.xpose.msra.mxu0 0.0
      %2254 = vmatprep.subr.mxu0 0.0
      %2255 = vmatpush1.xpose.msra.mxu0 0.0
      %2256 = vmatprep.subr.mxu0 0.0
      %2257 = vmatpush1.xpose.msra.mxu0 0.0
      %2258 = vmatprep.subr.mxu0 0.0
      %2259 = vmatpush1.xpose.msra.mxu0 0.0
      %2260 = vmatprep.subr.mxu0 0.0
      %2261 = vmatpush1.xpose.msra.mxu0 0.0
      %2262 = vmatprep.subr.mxu0 0.0
      %2263 = vmatpush1.xpose.msra.mxu0 0.0
      %2264 = vmatprep.subr.mxu0 0.0
      %2265 = vmatpush1.xpose.msra.mxu0 0.0
      %2266 = vmatprep.subr.mxu0 0.0
      %2267 = vmatpush1.xpose.msra.mxu0 0.0
      %2268 = vmatprep.mubr.f32.mxu0 0.0
      %2269 = vmatmul.mubr.f32.gmra.mrb[0].mxu0 %v2196
      %v2270 = vpop.f32.mrb[0].mxu0
      %v2271 = vadd.f32 0.0, %v2270
      %v2272 = vpop.f32.mrb[0].mxu0
      %2273 = vmatprep.mubr.f32.mxu0 0.0
      %2274 = vmatmul.mubr.f32.gmra.mrb[0].mxu0 %v2198
      %v2275 = vpop.f32.mrb[0].mxu0
      %v2276 = vadd.f32 0.0, %v2275
      %v2277 = vpop.f32.mrb[0].mxu0
      %2278 = vdwg.mxu0
      %v2279 = vmul.f32 %v966, 0.35355338
      %v2280 = vmul.f32 %v971, 0.35355338
      %v2281 = vmul.f32 %v1053, 0.35355338
      %v2282 = vmul.f32 %v1058, 0.35355338
      %v2283 = vmul.f32 %v1140, 0.35355338
      %v2284 = vmul.f32 %v1145, 0.35355338
      %v2285 = vmul.f32 %v1227, 0.35355338
      %v2286 = vmul.f32 %v1232, 0.35355338
      %v2287 = vmul.f32 %v1314, 0.35355338
      %v2288 = vmul.f32 %v1319, 0.35355338
      %v2289 = vmul.f32 %v1401, 0.35355338
      %v2290 = vmul.f32 %v1406, 0.35355338
      %v2291 = vmul.f32 %v1488, 0.35355338
      %v2292 = vmul.f32 %v1493, 0.35355338
      %v2293 = vmul.f32 %v1575, 0.35355338
      %v2294 = vmul.f32 %v1580, 0.35355338
      %v2295 = vmul.f32 %v1662, 0.35355338
      %v2296 = vmul.f32 %v1667, 0.35355338
      %v2297 = vmul.f32 %v1749, 0.35355338
      %v2298 = vmul.f32 %v1754, 0.35355338
      %v2299 = vmul.f32 %v1836, 0.35355338
      %v2300 = vmul.f32 %v1841, 0.35355338
      %v2301 = vmul.f32 %v1923, 0.35355338
      %v2302 = vmul.f32 %v1928, 0.35355338
      %v2303 = vmul.f32 %v2010, 0.35355338
      %v2304 = vmul.f32 %v2015, 0.35355338
      %v2305 = vmul.f32 %v2097, 0.35355338
      %v2306 = vmul.f32 %v2102, 0.35355338
      %v2307 = vmul.f32 %v2184, 0.35355338
      %v2308 = vmul.f32 %v2189, 0.35355338
      %v2309 = vmul.f32 %v2271, 0.35355338
      %v2310 = vmul.f32 %v2276, 0.35355338
      %v2311 = vadd.f32 %v2279, %v854
      %v2312 = vadd.f32 %v2280, %v855
      %v2313 = vadd.f32 %v2281, %v856
      %v2314 = vadd.f32 %v2282, %v857
      %v2315 = vadd.f32 %v2283, %v858
      %v2316 = vadd.f32 %v2284, %v859
      %v2317 = vadd.f32 %v2285, %v860
      %v2318 = vadd.f32 %v2286, %v861
      %v2319 = vadd.f32 %v2287, %v862
      %v2320 = vadd.f32 %v2288, %v863
      %v2321 = vadd.f32 %v2289, %v864
      %v2322 = vadd.f32 %v2290, %v865
      %v2323 = vadd.f32 %v2291, %v866
      %v2324 = vadd.f32 %v2292, %v867
      %v2325 = vadd.f32 %v2293, %v868
      %v2326 = vadd.f32 %v2294, %v869
      %v2327 = vadd.f32 %v2295, %v870
      %v2328 = vadd.f32 %v2296, %v871
      %v2329 = vadd.f32 %v2297, %v872
      %v2330 = vadd.f32 %v2298, %v873
      %v2331 = vadd.f32 %v2299, %v874
      %v2332 = vadd.f32 %v2300, %v875
      %v2333 = vadd.f32 %v2301, %v876
      %v2334 = vadd.f32 %v2302, %v877
      %v2335 = vadd.f32 %v2303, %v878
      %v2336 = vadd.f32 %v2304, %v879
      %v2337 = vadd.f32 %v2305, %v880
      %v2338 = vadd.f32 %v2306, %v881
      %v2339 = vadd.f32 %v2307, %v882
      %v2340 = vadd.f32 %v2308, %v883
      %v2341 = vadd.f32 %v2309, %v884
      %v2342 = vadd.f32 %v2310, %v885
      %vm2343 = vcmask 130048
      %v2344 = vsel %vm2343, %v2311, -inf
      %2345 = vmax.xlane.f32.xlu0 %v2344
      %v2346 = vpop.xlane.xlu0 %2345
      %v2347 = vsel %vm2343, %v2312, -inf
      %2348 = vmax.xlane.f32.xlu0 %v2347
      %v2349 = vpop.xlane.xlu0 %2348
      %v2350 = vsel %vm2343, %v2313, -inf
      %2351 = vmax.xlane.f32.xlu0 %v2350
      %v2352 = vpop.xlane.xlu0 %2351
      %v2353 = vsel %vm2343, %v2314, -inf
      %2354 = vmax.xlane.f32.xlu0 %v2353
      %v2355 = vpop.xlane.xlu0 %2354
      %v2356 = vsel %vm2343, %v2315, -inf
      %2357 = vmax.xlane.f32.xlu0 %v2356
      %v2358 = vpop.xlane.xlu0 %2357
      %v2359 = vsel %vm2343, %v2316, -inf
      %2360 = vmax.xlane.f32.xlu0 %v2359
      %v2361 = vpop.xlane.xlu0 %2360
      %v2362 = vsel %vm2343, %v2317, -inf
      %2363 = vmax.xlane.f32.xlu0 %v2362
      %v2364 = vpop.xlane.xlu0 %2363
      %v2365 = vsel %vm2343, %v2318, -inf
      %2366 = vmax.xlane.f32.xlu0 %v2365
      %v2367 = vpop.xlane.xlu0 %2366
      %v2368 = vsel %vm2343, %v2319, -inf
      %2369 = vmax.xlane.f32.xlu0 %v2368
      %v2370 = vpop.xlane.xlu0 %2369
      %v2371 = vsel %vm2343, %v2320, -inf
      %2372 = vmax.xlane.f32.xlu0 %v2371
      %v2373 = vpop.xlane.xlu0 %2372
      %v2374 = vsel %vm2343, %v2321, -inf
      %2375 = vmax.xlane.f32.xlu0 %v2374
      %v2376 = vpop.xlane.xlu0 %2375
      %v2377 = vsel %vm2343, %v2322, -inf
      %2378 = vmax.xlane.f32.xlu0 %v2377
      %v2379 = vpop.xlane.xlu0 %2378
      %v2380 = vsel %vm2343, %v2323, -inf
      %2381 = vmax.xlane.f32.xlu0 %v2380
      %v2382 = vpop.xlane.xlu0 %2381
      %v2383 = vsel %vm2343, %v2324, -inf
      %2384 = vmax.xlane.f32.xlu0 %v2383
      %v2385 = vpop.xlane.xlu0 %2384
      %v2386 = vsel %vm2343, %v2325, -inf
      %2387 = vmax.xlane.f32.xlu0 %v2386
      %v2388 = vpop.xlane.xlu0 %2387
      %v2389 = vsel %vm2343, %v2326, -inf
      %2390 = vmax.xlane.f32.xlu0 %v2389
      %v2391 = vpop.xlane.xlu0 %2390
      %v2392 = vsel %vm2343, %v2327, -inf
      %2393 = vmax.xlane.f32.xlu0 %v2392
      %v2394 = vpop.xlane.xlu0 %2393
      %v2395 = vsel %vm2343, %v2328, -inf
      %2396 = vmax.xlane.f32.xlu0 %v2395
      %v2397 = vpop.xlane.xlu0 %2396
      %v2398 = vsel %vm2343, %v2329, -inf
      %2399 = vmax.xlane.f32.xlu0 %v2398
      %v2400 = vpop.xlane.xlu0 %2399
      %v2401 = vsel %vm2343, %v2330, -inf
      %2402 = vmax.xlane.f32.xlu0 %v2401
      %v2403 = vpop.xlane.xlu0 %2402
      %v2404 = vsel %vm2343, %v2331, -inf
      %2405 = vmax.xlane.f32.xlu0 %v2404
      %v2406 = vpop.xlane.xlu0 %2405
      %v2407 = vsel %vm2343, %v2332, -inf
      %2408 = vmax.xlane.f32.xlu0 %v2407
      %v2409 = vpop.xlane.xlu0 %2408
      %v2410 = vsel %vm2343, %v2333, -inf
      %2411 = vmax.xlane.f32.xlu0 %v2410
      %v2412 = vpop.xlane.xlu0 %2411
      %v2413 = vsel %vm2343, %v2334, -inf
      %2414 = vmax.xlane.f32.xlu0 %v2413
      %v2415 = vpop.xlane.xlu0 %2414
      %v2416 = vsel %vm2343, %v2335, -inf
      %2417 = vmax.xlane.f32.xlu0 %v2416
      %v2418 = vpop.xlane.xlu0 %2417
      %v2419 = vsel %vm2343, %v2336, -inf
      %2420 = vmax.xlane.f32.xlu0 %v2419
      %v2421 = vpop.xlane.xlu0 %2420
      %v2422 = vsel %vm2343, %v2337, -inf
      %2423 = vmax.xlane.f32.xlu0 %v2422
      %v2424 = vpop.xlane.xlu0 %2423
      %v2425 = vsel %vm2343, %v2338, -inf
      %2426 = vmax.xlane.f32.xlu0 %v2425
      %v2427 = vpop.xlane.xlu0 %2426
      %v2428 = vsel %vm2343, %v2339, -inf
      %2429 = vmax.xlane.f32.xlu0 %v2428
      %v2430 = vpop.xlane.xlu0 %2429
      %v2431 = vsel %vm2343, %v2340, -inf
      %2432 = vmax.xlane.f32.xlu0 %v2431
      %v2433 = vpop.xlane.xlu0 %2432
      %v2434 = vsel %vm2343, %v2341, -inf
      %2435 = vmax.xlane.f32.xlu0 %v2434
      %v2436 = vpop.xlane.xlu0 %2435
      %v2437 = vsel %vm2343, %v2342, -inf
      %2438 = vmax.xlane.f32.xlu0 %v2437
      %v2439 = vpop.xlane.xlu0 %2438
      %v2440 = vsub.f32 %v2311, %v2346
      %v2441 = vsub.f32 %v2312, %v2349
      %v2442 = vsub.f32 %v2313, %v2352
      %v2443 = vsub.f32 %v2314, %v2355
      %v2444 = vsub.f32 %v2315, %v2358
      %v2445 = vsub.f32 %v2316, %v2361
      %v2446 = vsub.f32 %v2317, %v2364
      %v2447 = vsub.f32 %v2318, %v2367
      %v2448 = vsub.f32 %v2319, %v2370
      %v2449 = vsub.f32 %v2320, %v2373
      %v2450 = vsub.f32 %v2321, %v2376
      %v2451 = vsub.f32 %v2322, %v2379
      %v2452 = vsub.f32 %v2323, %v2382
      %v2453 = vsub.f32 %v2324, %v2385
      %v2454 = vsub.f32 %v2325, %v2388
      %v2455 = vsub.f32 %v2326, %v2391
      %v2456 = vsub.f32 %v2327, %v2394
      %v2457 = vsub.f32 %v2328, %v2397
      %v2458 = vsub.f32 %v2329, %v2400
      %v2459 = vsub.f32 %v2330, %v2403
      %v2460 = vsub.f32 %v2331, %v2406
      %v2461 = vsub.f32 %v2332, %v2409
      %v2462 = vsub.f32 %v2333, %v2412
      %v2463 = vsub.f32 %v2334, %v2415
      %v2464 = vsub.f32 %v2335, %v2418
      %v2465 = vsub.f32 %v2336, %v2421
      %v2466 = vsub.f32 %v2337, %v2424
      %v2467 = vsub.f32 %v2338, %v2427
      %v2468 = vsub.f32 %v2339, %v2430
      %v2469 = vsub.f32 %v2340, %v2433
      %v2470 = vsub.f32 %v2341, %v2436
      %v2471 = vsub.f32 %v2342, %v2439
      %v2472 = vmul.f32 %v2440, 1.442695
      %v2473 = vpow.pop %v2472
      %v2474 = vmul.f32 %v2441, 1.442695
      %v2475 = vpow.pop %v2474
      %v2476 = vmul.f32 %v2442, 1.442695
      %v2477 = vpow.pop %v2476
      %v2478 = vmul.f32 %v2443, 1.442695
      %v2479 = vpow.pop %v2478
      %v2480 = vmul.f32 %v2444, 1.442695
      %v2481 = vpow.pop %v2480
      %v2482 = vmul.f32 %v2445, 1.442695
      %v2483 = vpow.pop %v2482
      %v2484 = vmul.f32 %v2446, 1.442695
      %v2485 = vpow.pop %v2484
      %v2486 = vmul.f32 %v2447, 1.442695
      %v2487 = vpow.pop %v2486
      %v2488 = vmul.f32 %v2448, 1.442695
      %v2489 = vpow.pop %v2488
      %v2490 = vmul.f32 %v2449, 1.442695
      %v2491 = vpow.pop %v2490
      %v2492 = vmul.f32 %v2450, 1.442695
      %v2493 = vpow.pop %v2492
      %v2494 = vmul.f32 %v2451, 1.442695
      %v2495 = vpow.pop %v2494
      %v2496 = vmul.f32 %v2452, 1.442695
      %v2497 = vpow.pop %v2496
      %v2498 = vmul.f32 %v2453, 1.442695
      %v2499 = vpow.pop %v2498
      %v2500 = vmul.f32 %v2454, 1.442695
      %v2501 = vpow.pop %v2500
      %v2502 = vmul.f32 %v2455, 1.442695
      %v2503 = vpow.pop %v2502
      %v2504 = vmul.f32 %v2456, 1.442695
      %v2505 = vpow.pop %v2504
      %v2506 = vmul.f32 %v2457, 1.442695
      %v2507 = vpow.pop %v2506
      %v2508 = vmul.f32 %v2458, 1.442695
      %v2509 = vpow.pop %v2508
      %v2510 = vmul.f32 %v2459, 1.442695
      %v2511 = vpow.pop %v2510
      %v2512 = vmul.f32 %v2460, 1.442695
      %v2513 = vpow.pop %v2512
      %v2514 = vmul.f32 %v2461, 1.442695
      %v2515 = vpow.pop %v2514
      %v2516 = vmul.f32 %v2462, 1.442695
      %v2517 = vpow.pop %v2516
      %v2518 = vmul.f32 %v2463, 1.442695
      %v2519 = vpow.pop %v2518
      %v2520 = vmul.f32 %v2464, 1.442695
      %v2521 = vpow.pop %v2520
      %v2522 = vmul.f32 %v2465, 1.442695
      %v2523 = vpow.pop %v2522
      %v2524 = vmul.f32 %v2466, 1.442695
      %v2525 = vpow.pop %v2524
      %v2526 = vmul.f32 %v2467, 1.442695
      %v2527 = vpow.pop %v2526
      %v2528 = vmul.f32 %v2468, 1.442695
      %v2529 = vpow.pop %v2528
      %v2530 = vmul.f32 %v2469, 1.442695
      %v2531 = vpow.pop %v2530
      %v2532 = vmul.f32 %v2470, 1.442695
      %v2533 = vpow.pop %v2532
      %v2534 = vmul.f32 %v2471, 1.442695
      %v2535 = vpow.pop %v2534
      %v2536 = vsel %vm2343, %v2473, 0.0
      %2537 = vadd.xlane.f32.xlu0 %v2536
      %v2538 = vpop.xlane.xlu0 %2537
      %v2539 = vsel %vm2343, %v2475, 0.0
      %2540 = vadd.xlane.f32.xlu0 %v2539
      %v2541 = vpop.xlane.xlu0 %2540
      %v2542 = vsel %vm2343, %v2477, 0.0
      %2543 = vadd.xlane.f32.xlu0 %v2542
      %v2544 = vpop.xlane.xlu0 %2543
      %v2545 = vsel %vm2343, %v2479, 0.0
      %2546 = vadd.xlane.f32.xlu0 %v2545
      %v2547 = vpop.xlane.xlu0 %2546
      %v2548 = vsel %vm2343, %v2481, 0.0
      %2549 = vadd.xlane.f32.xlu0 %v2548
      %v2550 = vpop.xlane.xlu0 %2549
      %v2551 = vsel %vm2343, %v2483, 0.0
      %2552 = vadd.xlane.f32.xlu0 %v2551
      %v2553 = vpop.xlane.xlu0 %2552
      %v2554 = vsel %vm2343, %v2485, 0.0
      %2555 = vadd.xlane.f32.xlu0 %v2554
      %v2556 = vpop.xlane.xlu0 %2555
      %v2557 = vsel %vm2343, %v2487, 0.0
      %2558 = vadd.xlane.f32.xlu0 %v2557
      %v2559 = vpop.xlane.xlu0 %2558
      %v2560 = vsel %vm2343, %v2489, 0.0
      %2561 = vadd.xlane.f32.xlu0 %v2560
      %v2562 = vpop.xlane.xlu0 %2561
      %v2563 = vsel %vm2343, %v2491, 0.0
      %2564 = vadd.xlane.f32.xlu0 %v2563
      %v2565 = vpop.xlane.xlu0 %2564
      %v2566 = vsel %vm2343, %v2493, 0.0
      %2567 = vadd.xlane.f32.xlu0 %v2566
      %v2568 = vpop.xlane.xlu0 %2567
      %v2569 = vsel %vm2343, %v2495, 0.0
      %2570 = vadd.xlane.f32.xlu0 %v2569
      %v2571 = vpop.xlane.xlu0 %2570
      %v2572 = vsel %vm2343, %v2497, 0.0
      %2573 = vadd.xlane.f32.xlu0 %v2572
      %v2574 = vpop.xlane.xlu0 %2573
      %v2575 = vsel %vm2343, %v2499, 0.0
      %2576 = vadd.xlane.f32.xlu0 %v2575
      %v2577 = vpop.xlane.xlu0 %2576
      %v2578 = vsel %vm2343, %v2501, 0.0
      %2579 = vadd.xlane.f32.xlu0 %v2578
      %v2580 = vpop.xlane.xlu0 %2579
      %v2581 = vsel %vm2343, %v2503, 0.0
      %2582 = vadd.xlane.f32.xlu0 %v2581
      %v2583 = vpop.xlane.xlu0 %2582
      %v2584 = vsel %vm2343, %v2505, 0.0
      %2585 = vadd.xlane.f32.xlu0 %v2584
      %v2586 = vpop.xlane.xlu0 %2585
      %v2587 = vsel %vm2343, %v2507, 0.0
      %2588 = vadd.xlane.f32.xlu0 %v2587
      %v2589 = vpop.xlane.xlu0 %2588
      %v2590 = vsel %vm2343, %v2509, 0.0
      %2591 = vadd.xlane.f32.xlu0 %v2590
      %v2592 = vpop.xlane.xlu0 %2591
      %v2593 = vsel %vm2343, %v2511, 0.0
      %2594 = vadd.xlane.f32.xlu0 %v2593
      %v2595 = vpop.xlane.xlu0 %2594
      %v2596 = vsel %vm2343, %v2513, 0.0
      %2597 = vadd.xlane.f32.xlu0 %v2596
      %v2598 = vpop.xlane.xlu0 %2597
      %v2599 = vsel %vm2343, %v2515, 0.0
      %2600 = vadd.xlane.f32.xlu0 %v2599
      %v2601 = vpop.xlane.xlu0 %2600
      %v2602 = vsel %vm2343, %v2517, 0.0
      %2603 = vadd.xlane.f32.xlu0 %v2602
      %v2604 = vpop.xlane.xlu0 %2603
      %v2605 = vsel %vm2343, %v2519, 0.0
      %2606 = vadd.xlane.f32.xlu0 %v2605
      %v2607 = vpop.xlane.xlu0 %2606
      %v2608 = vsel %vm2343, %v2521, 0.0
      %2609 = vadd.xlane.f32.xlu0 %v2608
      %v2610 = vpop.xlane.xlu0 %2609
      %v2611 = vsel %vm2343, %v2523, 0.0
      %2612 = vadd.xlane.f32.xlu0 %v2611
      %v2613 = vpop.xlane.xlu0 %2612
      %v2614 = vsel %vm2343, %v2525, 0.0
      %2615 = vadd.xlane.f32.xlu0 %v2614
      %v2616 = vpop.xlane.xlu0 %2615
      %v2617 = vsel %vm2343, %v2527, 0.0
      %2618 = vadd.xlane.f32.xlu0 %v2617
      %v2619 = vpop.xlane.xlu0 %2618
      %v2620 = vsel %vm2343, %v2529, 0.0
      %2621 = vadd.xlane.f32.xlu0 %v2620
      %v2622 = vpop.xlane.xlu0 %2621
      %v2623 = vsel %vm2343, %v2531, 0.0
      %2624 = vadd.xlane.f32.xlu0 %v2623
      %v2625 = vpop.xlane.xlu0 %2624
      %v2626 = vsel %vm2343, %v2533, 0.0
      %2627 = vadd.xlane.f32.xlu0 %v2626
      %v2628 = vpop.xlane.xlu0 %2627
      %v2629 = vsel %vm2343, %v2535, 0.0
      %2630 = vadd.xlane.f32.xlu0 %v2629
      %v2631 = vpop.xlane.xlu0 %2630
      %v2632 = vrcp.pop %v2538
      %v2633 = vrcp.pop %v2541
      %v2634 = vrcp.pop %v2544
      %v2635 = vrcp.pop %v2547
      %v2636 = vrcp.pop %v2550
      %v2637 = vrcp.pop %v2553
      %v2638 = vrcp.pop %v2556
      %v2639 = vrcp.pop %v2559
      %v2640 = vrcp.pop %v2562
      %v2641 = vrcp.pop %v2565
      %v2642 = vrcp.pop %v2568
      %v2643 = vrcp.pop %v2571
      %v2644 = vrcp.pop %v2574
      %v2645 = vrcp.pop %v2577
      %v2646 = vrcp.pop %v2580
      %v2647 = vrcp.pop %v2583
      %v2648 = vrcp.pop %v2586
      %v2649 = vrcp.pop %v2589
      %v2650 = vrcp.pop %v2592
      %v2651 = vrcp.pop %v2595
      %v2652 = vrcp.pop %v2598
      %v2653 = vrcp.pop %v2601
      %v2654 = vrcp.pop %v2604
      %v2655 = vrcp.pop %v2607
      %v2656 = vrcp.pop %v2610
      %v2657 = vrcp.pop %v2613
      %v2658 = vrcp.pop %v2616
      %v2659 = vrcp.pop %v2619
      %v2660 = vrcp.pop %v2622
      %v2661 = vrcp.pop %v2625
      %v2662 = vrcp.pop %v2628
      %v2663 = vrcp.pop %v2631
      %v2664 = vmul.f32 %v2473, %v2632
      %v2665 = vmul.f32 %v2475, %v2633
      %v2666 = vmul.f32 %v2477, %v2634
      %v2667 = vmul.f32 %v2479, %v2635
      %v2668 = vmul.f32 %v2481, %v2636
      %v2669 = vmul.f32 %v2483, %v2637
      %v2670 = vmul.f32 %v2485, %v2638
      %v2671 = vmul.f32 %v2487, %v2639
      %v2672 = vmul.f32 %v2489, %v2640
      %v2673 = vmul.f32 %v2491, %v2641
      %v2674 = vmul.f32 %v2493, %v2642
      %v2675 = vmul.f32 %v2495, %v2643
      %v2676 = vmul.f32 %v2497, %v2644
      %v2677 = vmul.f32 %v2499, %v2645
      %v2678 = vmul.f32 %v2501, %v2646
      %v2679 = vmul.f32 %v2503, %v2647
      %v2680 = vmul.f32 %v2505, %v2648
      %v2681 = vmul.f32 %v2507, %v2649
      %v2682 = vmul.f32 %v2509, %v2650
      %v2683 = vmul.f32 %v2511, %v2651
      %v2684 = vmul.f32 %v2513, %v2652
      %v2685 = vmul.f32 %v2515, %v2653
      %v2686 = vmul.f32 %v2517, %v2654
      %v2687 = vmul.f32 %v2519, %v2655
      %v2688 = vmul.f32 %v2521, %v2656
      %v2689 = vmul.f32 %v2523, %v2657
      %v2690 = vmul.f32 %v2525, %v2658
      %v2691 = vmul.f32 %v2527, %v2659
      %v2692 = vmul.f32 %v2529, %v2660
      %v2693 = vmul.f32 %v2531, %v2661
      %v2694 = vmul.f32 %v2533, %v2662
      %v2695 = vmul.f32 %v2535, %v2663
      %2696 = vrot.lane.b32.xlu0 %v744, 64
      %v2697 = vpop.permute.xlu0 %2696
      %2698 = vrot.lane.b32.xlu0 %v749, 64
      %v2699 = vpop.permute.xlu0 %2698
      %v2703 = vsel %vm2343, %v2664, 0
      %v2706 = vsel %vm2343, %v2665, 0
      %2708 = vmatprep.subr.mxu0 0.0
      %2709 = vmatpush1.msra.mxu0 %v2697
      %2710 = vmatprep.subr.mxu0 0.0
      %2711 = vmatpush1.msra.mxu0 %v2699
      %2712 = vmatprep.subr.mxu0 0.0
      %2713 = vmatpush1.msra.mxu0 0.0
      %2714 = vmatprep.subr.mxu0 0.0
      %2715 = vmatpush1.msra.mxu0 0.0
      %2716 = vmatprep.subr.mxu0 0.0
      %2717 = vmatpush1.msra.mxu0 0.0
      %2718 = vmatprep.subr.mxu0 0.0
      %2719 = vmatpush1.msra.mxu0 0.0
      %2720 = vmatprep.subr.mxu0 0.0
      %2721 = vmatpush1.msra.mxu0 0.0
      %2722 = vmatprep.subr.mxu0 0.0
      %2723 = vmatpush1.msra.mxu0 0.0
      %2724 = vmatprep.subr.mxu0 0.0
      %2725 = vmatpush1.msra.mxu0 0.0
      %2726 = vmatprep.subr.mxu0 0.0
      %2727 = vmatpush1.msra.mxu0 0.0
      %2728 = vmatprep.subr.mxu0 0.0
      %2729 = vmatpush1.msra.mxu0 0.0
      %2730 = vmatprep.subr.mxu0 0.0
      %2731 = vmatpush1.msra.mxu0 0.0
      %2732 = vmatprep.subr.mxu0 0.0
      %2733 = vmatpush1.msra.mxu0 0.0
      %2734 = vmatprep.subr.mxu0 0.0
      %2735 = vmatpush1.msra.mxu0 0.0
      %2736 = vmatprep.subr.mxu0 0.0
      %2737 = vmatpush1.msra.mxu0 0.0
      %2738 = vmatprep.subr.mxu0 0.0
      %2739 = vmatpush1.msra.mxu0 0.0
      %2740 = vmatprep.subr.mxu0 0.0
      %2741 = vmatpush1.msra.mxu0 0.0
      %2742 = vmatprep.subr.mxu0 0.0
      %2743 = vmatpush1.msra.mxu0 0.0
      %2744 = vmatprep.subr.mxu0 0.0
      %2745 = vmatpush1.msra.mxu0 0.0
      %2746 = vmatprep.subr.mxu0 0.0
      %2747 = vmatpush1.msra.mxu0 0.0
      %2748 = vmatprep.subr.mxu0 0.0
      %2749 = vmatpush1.msra.mxu0 0.0
      %2750 = vmatprep.subr.mxu0 0.0
      %2751 = vmatpush1.msra.mxu0 0.0
      %2752 = vmatprep.subr.mxu0 0.0
      %2753 = vmatpush1.msra.mxu0 0.0
      %2754 = vmatprep.subr.mxu0 0.0
      %2755 = vmatpush1.msra.mxu0 0.0
      %2756 = vmatprep.subr.mxu0 0.0
      %2757 = vmatpush1.msra.mxu0 0.0
      %2758 = vmatprep.subr.mxu0 0.0
      %2759 = vmatpush1.msra.mxu0 0.0
      %2760 = vmatprep.subr.mxu0 0.0
      %2761 = vmatpush1.msra.mxu0 0.0
      %2762 = vmatprep.subr.mxu0 0.0
      %2763 = vmatpush1.msra.mxu0 0.0
      %2764 = vmatprep.subr.mxu0 0.0
      %2765 = vmatpush1.msra.mxu0 0.0
      %2766 = vmatprep.subr.mxu0 0.0
      %2767 = vmatpush1.msra.mxu0 0.0
      %2768 = vmatprep.subr.mxu0 0.0
      %2769 = vmatpush1.msra.mxu0 0.0
      %2770 = vmatprep.subr.mxu0 0.0
      %2771 = vmatpush1.msra.mxu0 0.0
      %2772 = vmatprep.mubr.f32.mxu0 0.0
      %2773 = vmatmul.mubr.f32.gmra.mrb[0].mxu0 %v2703
      %v2774 = vpop.f32.mrb[0].mxu0
      %v2775 = vadd.f32 0.0, %v2774
      %v2776 = vpop.f32.mrb[0].mxu0
      %2777 = vmatprep.mubr.f32.mxu0 0.0
      %2778 = vmatmul.mubr.f32.gmra.mrb[0].mxu0 %v2706
      %v2779 = vpop.f32.mrb[0].mxu0
      %v2780 = vadd.f32 0.0, %v2779
      %v2781 = vpop.f32.mrb[0].mxu0
      %2782 = vdwg.mxu0
      %2783 = vrot.lane.b32.xlu0 %v754, 64
      %v2784 = vpop.permute.xlu0 %2783
      %2785 = vrot.lane.b32.xlu0 %v759, 64
      %v2786 = vpop.permute.xlu0 %2785
      %v2790 = vsel %vm2343, %v2666, 0
      %v2793 = vsel %vm2343, %v2667, 0
      %2795 = vmatprep.subr.mxu0 0.0
      %2796 = vmatpush1.msra.mxu0 %v2784
      %2797 = vmatprep.subr.mxu0 0.0
      %2798 = vmatpush1.msra.mxu0 %v2786
      %2799 = vmatprep.subr.mxu0 0.0
      %2800 = vmatpush1.msra.mxu0 0.0
      %2801 = vmatprep.subr.mxu0 0.0
      %2802 = vmatpush1.msra.mxu0 0.0
      %2803 = vmatprep.subr.mxu0 0.0
      %2804 = vmatpush1.msra.mxu0 0.0
      %2805 = vmatprep.subr.mxu0 0.0
      %2806 = vmatpush1.msra.mxu0 0.0
      %2807 = vmatprep.subr.mxu0 0.0
      %2808 = vmatpush1.msra.mxu0 0.0
      %2809 = vmatprep.subr.mxu0 0.0
      %2810 = vmatpush1.msra.mxu0 0.0
      %2811 = vmatprep.subr.mxu0 0.0
      %2812 = vmatpush1.msra.mxu0 0.0
      %2813 = vmatprep.subr.mxu0 0.0
      %2814 = vmatpush1.msra.mxu0 0.0
      %2815 = vmatprep.subr.mxu0 0.0
      %2816 = vmatpush1.msra.mxu0 0.0
      %2817 = vmatprep.subr.mxu0 0.0
      %2818 = vmatpush1.msra.mxu0 0.0
      %2819 = vmatprep.subr.mxu0 0.0
      %2820 = vmatpush1.msra.mxu0 0.0
      %2821 = vmatprep.subr.mxu0 0.0
      %2822 = vmatpush1.msra.mxu0 0.0
      %2823 = vmatprep.subr.mxu0 0.0
      %2824 = vmatpush1.msra.mxu0 0.0
      %2825 = vmatprep.subr.mxu0 0.0
      %2826 = vmatpush1.msra.mxu0 0.0
      %2827 = vmatprep.subr.mxu0 0.0
      %2828 = vmatpush1.msra.mxu0 0.0
      %2829 = vmatprep.subr.mxu0 0.0
      %2830 = vmatpush1.msra.mxu0 0.0
      %2831 = vmatprep.subr.mxu0 0.0
      %2832 = vmatpush1.msra.mxu0 0.0
      %2833 = vmatprep.subr.mxu0 0.0
      %2834 = vmatpush1.msra.mxu0 0.0
      %2835 = vmatprep.subr.mxu0 0.0
      %2836 = vmatpush1.msra.mxu0 0.0
      %2837 = vmatprep.subr.mxu0 0.0
      %2838 = vmatpush1.msra.mxu0 0.0
      %2839 = vmatprep.subr.mxu0 0.0
      %2840 = vmatpush1.msra.mxu0 0.0
      %2841 = vmatprep.subr.mxu0 0.0
      %2842 = vmatpush1.msra.mxu0 0.0
      %2843 = vmatprep.subr.mxu0 0.0
      %2844 = vmatpush1.msra.mxu0 0.0
      %2845 = vmatprep.subr.mxu0 0.0
      %2846 = vmatpush1.msra.mxu0 0.0
      %2847 = vmatprep.subr.mxu0 0.0
      %2848 = vmatpush1.msra.mxu0 0.0
      %2849 = vmatprep.subr.mxu0 0.0
      %2850 = vmatpush1.msra.mxu0 0.0
      %2851 = vmatprep.subr.mxu0 0.0
      %2852 = vmatpush1.msra.mxu0 0.0
      %2853 = vmatprep.subr.mxu0 0.0
      %2854 = vmatpush1.msra.mxu0 0.0
      %2855 = vmatprep.subr.mxu0 0.0
      %2856 = vmatpush1.msra.mxu0 0.0
      %2857 = vmatprep.subr.mxu0 0.0
      %2858 = vmatpush1.msra.mxu0 0.0
      %2859 = vmatprep.mubr.f32.mxu0 0.0
      %2860 = vmatmul.mubr.f32.gmra.mrb[0].mxu0 %v2790
      %v2861 = vpop.f32.mrb[0].mxu0
      %v2862 = vadd.f32 0.0, %v2861
      %v2863 = vpop.f32.mrb[0].mxu0
      %2864 = vmatprep.mubr.f32.mxu0 0.0
      %2865 = vmatmul.mubr.f32.gmra.mrb[0].mxu0 %v2793
      %v2866 = vpop.f32.mrb[0].mxu0
      %v2867 = vadd.f32 0.0, %v2866
      %v2868 = vpop.f32.mrb[0].mxu0
      %2869 = vdwg.mxu0
      %2870 = vrot.lane.b32.xlu0 %v764, 64
      %v2871 = vpop.permute.xlu0 %2870
      %2872 = vrot.lane.b32.xlu0 %v769, 64
      %v2873 = vpop.permute.xlu0 %2872
      %v2877 = vsel %vm2343, %v2668, 0
      %v2880 = vsel %vm2343, %v2669, 0
      %2882 = vmatprep.subr.mxu0 0.0
      %2883 = vmatpush1.msra.mxu0 %v2871
      %2884 = vmatprep.subr.mxu0 0.0
      %2885 = vmatpush1.msra.mxu0 %v2873
      %2886 = vmatprep.subr.mxu0 0.0
      %2887 = vmatpush1.msra.mxu0 0.0
      %2888 = vmatprep.subr.mxu0 0.0
      %2889 = vmatpush1.msra.mxu0 0.0
      %2890 = vmatprep.subr.mxu0 0.0
      %2891 = vmatpush1.msra.mxu0 0.0
      %2892 = vmatprep.subr.mxu0 0.0
      %2893 = vmatpush1.msra.mxu0 0.0
      %2894 = vmatprep.subr.mxu0 0.0
      %2895 = vmatpush1.msra.mxu0 0.0
      %2896 = vmatprep.subr.mxu0 0.0
      %2897 = vmatpush1.msra.mxu0 0.0
      %2898 = vmatprep.subr.mxu0 0.0
      %2899 = vmatpush1.msra.mxu0 0.0
      %2900 = vmatprep.subr.mxu0 0.0
      %2901 = vmatpush1.msra.mxu0 0.0
      %2902 = vmatprep.subr.mxu0 0.0
      %2903 = vmatpush1.msra.mxu0 0.0
      %2904 = vmatprep.subr.mxu0 0.0
      %2905 = vmatpush1.msra.mxu0 0.0
      %2906 = vmatprep.subr.mxu0 0.0
      %2907 = vmatpush1.msra.mxu0 0.0
      %2908 = vmatprep.subr.mxu0 0.0
      %2909 = vmatpush1.msra.mxu0 0.0
      %2910 = vmatprep.subr.mxu0 0.0
      %2911 = vmatpush1.msra.mxu0 0.0
      %2912 = vmatprep.subr.mxu0 0.0
      %2913 = vmatpush1.msra.mxu0 0.0
      %2914 = vmatprep.subr.mxu0 0.0
      %2915 = vmatpush1.msra.mxu0 0.0
      %2916 = vmatprep.subr.mxu0 0.0
      %2917 = vmatpush1.msra.mxu0 0.0
      %2918 = vmatprep.subr.mxu0 0.0
      %2919 = vmatpush1.msra.mxu0 0.0
      %2920 = vmatprep.subr.mxu0 0.0
      %2921 = vmatpush1.msra.mxu0 0.0
      %2922 = vmatprep.subr.mxu0 0.0
      %2923 = vmatpush1.msra.mxu0 0.0
      %2924 = vmatprep.subr.mxu0 0.0
      %2925 = vmatpush1.msra.mxu0 0.0
      %2926 = vmatprep.subr.mxu0 0.0
      %2927 = vmatpush1.msra.mxu0 0.0
      %2928 = vmatprep.subr.mxu0 0.0
      %2929 = vmatpush1.msra.mxu0 0.0
      %2930 = vmatprep.subr.mxu0 0.0
      %2931 = vmatpush1.msra.mxu0 0.0
      %2932 = vmatprep.subr.mxu0 0.0
      %2933 = vmatpush1.msra.mxu0 0.0
      %2934 = vmatprep.subr.mxu0 0.0
      %2935 = vmatpush1.msra.mxu0 0.0
      %2936 = vmatprep.subr.mxu0 0.0
      %2937 = vmatpush1.msra.mxu0 0.0
      %2938 = vmatprep.subr.mxu0 0.0
      %2939 = vmatpush1.msra.mxu0 0.0
      %2940 = vmatprep.subr.mxu0 0.0
      %2941 = vmatpush1.msra.mxu0 0.0
      %2942 = vmatprep.subr.mxu0 0.0
      %2943 = vmatpush1.msra.mxu0 0.0
      %2944 = vmatprep.subr.mxu0 0.0
      %2945 = vmatpush1.msra.mxu0 0.0
      %2946 = vmatprep.mubr.f32.mxu0 0.0
      %2947 = vmatmul.mubr.f32.gmra.mrb[0].mxu0 %v2877
      %v2948 = vpop.f32.mrb[0].mxu0
      %v2949 = vadd.f32 0.0, %v2948
      %v2950 = vpop.f32.mrb[0].mxu0
      %2951 = vmatprep.mubr.f32.mxu0 0.0
      %2952 = vmatmul.mubr.f32.gmra.mrb[0].mxu0 %v2880
      %v2953 = vpop.f32.mrb[0].mxu0
      %v2954 = vadd.f32 0.0, %v2953
      %v2955 = vpop.f32.mrb[0].mxu0
      %2956 = vdwg.mxu0
      %2957 = vrot.lane.b32.xlu0 %v774, 64
      %v2958 = vpop.permute.xlu0 %2957
      %2959 = vrot.lane.b32.xlu0 %v779, 64
      %v2960 = vpop.permute.xlu0 %2959
      %v2964 = vsel %vm2343, %v2670, 0
      %v2967 = vsel %vm2343, %v2671, 0
      %2969 = vmatprep.subr.mxu0 0.0
      %2970 = vmatpush1.msra.mxu0 %v2958
      %2971 = vmatprep.subr.mxu0 0.0
      %2972 = vmatpush1.msra.mxu0 %v2960
      %2973 = vmatprep.subr.mxu0 0.0
      %2974 = vmatpush1.msra.mxu0 0.0
      %2975 = vmatprep.subr.mxu0 0.0
      %2976 = vmatpush1.msra.mxu0 0.0
      %2977 = vmatprep.subr.mxu0 0.0
      %2978 = vmatpush1.msra.mxu0 0.0
      %2979 = vmatprep.subr.mxu0 0.0
      %2980 = vmatpush1.msra.mxu0 0.0
      %2981 = vmatprep.subr.mxu0 0.0
      %2982 = vmatpush1.msra.mxu0 0.0
      %2983 = vmatprep.subr.mxu0 0.0
      %2984 = vmatpush1.msra.mxu0 0.0
      %2985 = vmatprep.subr.mxu0 0.0
      %2986 = vmatpush1.msra.mxu0 0.0
      %2987 = vmatprep.subr.mxu0 0.0
      %2988 = vmatpush1.msra.mxu0 0.0
      %2989 = vmatprep.subr.mxu0 0.0
      %2990 = vmatpush1.msra.mxu0 0.0
      %2991 = vmatprep.subr.mxu0 0.0
      %2992 = vmatpush1.msra.mxu0 0.0
      %2993 = vmatprep.subr.mxu0 0.0
      %2994 = vmatpush1.msra.mxu0 0.0
      %2995 = vmatprep.subr.mxu0 0.0
      %2996 = vmatpush1.msra.mxu0 0.0
      %2997 = vmatprep.subr.mxu0 0.0
      %2998 = vmatpush1.msra.mxu0 0.0
      %2999 = vmatprep.subr.mxu0 0.0
      %3000 = vmatpush1.msra.mxu0 0.0
      %3001 = vmatprep.subr.mxu0 0.0
      %3002 = vmatpush1.msra.mxu0 0.0
      %3003 = vmatprep.subr.mxu0 0.0
      %3004 = vmatpush1.msra.mxu0 0.0
      %3005 = vmatprep.subr.mxu0 0.0
      %3006 = vmatpush1.msra.mxu0 0.0
      %3007 = vmatprep.subr.mxu0 0.0
      %3008 = vmatpush1.msra.mxu0 0.0
      %3009 = vmatprep.subr.mxu0 0.0
      %3010 = vmatpush1.msra.mxu0 0.0
      %3011 = vmatprep.subr.mxu0 0.0
      %3012 = vmatpush1.msra.mxu0 0.0
      %3013 = vmatprep.subr.mxu0 0.0
      %3014 = vmatpush1.msra.mxu0 0.0
      %3015 = vmatprep.subr.mxu0 0.0
      %3016 = vmatpush1.msra.mxu0 0.0
      %3017 = vmatprep.subr.mxu0 0.0
      %3018 = vmatpush1.msra.mxu0 0.0
      %3019 = vmatprep.subr.mxu0 0.0
      %3020 = vmatpush1.msra.mxu0 0.0
      %3021 = vmatprep.subr.mxu0 0.0
      %3022 = vmatpush1.msra.mxu0 0.0
      %3023 = vmatprep.subr.mxu0 0.0
      %3024 = vmatpush1.msra.mxu0 0.0
      %3025 = vmatprep.subr.mxu0 0.0
      %3026 = vmatpush1.msra.mxu0 0.0
      %3027 = vmatprep.subr.mxu0 0.0
      %3028 = vmatpush1.msra.mxu0 0.0
      %3029 = vmatprep.subr.mxu0 0.0
      %3030 = vmatpush1.msra.mxu0 0.0
      %3031 = vmatprep.subr.mxu0 0.0
      %3032 = vmatpush1.msra.mxu0 0.0
      %3033 = vmatprep.mubr.f32.mxu0 0.0
      %3034 = vmatmul.mubr.f32.gmra.mrb[0].mxu0 %v2964
      %v3035 = vpop.f32.mrb[0].mxu0
      %v3036 = vadd.f32 0.0, %v3035
      %v3037 = vpop.f32.mrb[0].mxu0
      %3038 = vmatprep.mubr.f32.mxu0 0.0
      %3039 = vmatmul.mubr.f32.gmra.mrb[0].mxu0 %v2967
      %v3040 = vpop.f32.mrb[0].mxu0
      %v3041 = vadd.f32 0.0, %v3040
      %v3042 = vpop.f32.mrb[0].mxu0
      %3043 = vdwg.mxu0
      %3044 = vrot.lane.b32.xlu0 %v791, 64
      %v3045 = vpop.permute.xlu0 %3044
      %3046 = vrot.lane.b32.xlu0 %v793, 64
      %v3047 = vpop.permute.xlu0 %3046
      %v3051 = vsel %vm2343, %v2672, 0
      %v3054 = vsel %vm2343, %v2673, 0
      %3056 = vmatprep.subr.mxu0 0.0
      %3057 = vmatpush1.msra.mxu0 %v3045
      %3058 = vmatprep.subr.mxu0 0.0
      %3059 = vmatpush1.msra.mxu0 %v3047
      %3060 = vmatprep.subr.mxu0 0.0
      %3061 = vmatpush1.msra.mxu0 0.0
      %3062 = vmatprep.subr.mxu0 0.0
      %3063 = vmatpush1.msra.mxu0 0.0
      %3064 = vmatprep.subr.mxu0 0.0
      %3065 = vmatpush1.msra.mxu0 0.0
      %3066 = vmatprep.subr.mxu0 0.0
      %3067 = vmatpush1.msra.mxu0 0.0
      %3068 = vmatprep.subr.mxu0 0.0
      %3069 = vmatpush1.msra.mxu0 0.0
      %3070 = vmatprep.subr.mxu0 0.0
      %3071 = vmatpush1.msra.mxu0 0.0
      %3072 = vmatprep.subr.mxu0 0.0
      %3073 = vmatpush1.msra.mxu0 0.0
      %3074 = vmatprep.subr.mxu0 0.0
      %3075 = vmatpush1.msra.mxu0 0.0
      %3076 = vmatprep.subr.mxu0 0.0
      %3077 = vmatpush1.msra.mxu0 0.0
      %3078 = vmatprep.subr.mxu0 0.0
      %3079 = vmatpush1.msra.mxu0 0.0
      %3080 = vmatprep.subr.mxu0 0.0
      %3081 = vmatpush1.msra.mxu0 0.0
      %3082 = vmatprep.subr.mxu0 0.0
      %3083 = vmatpush1.msra.mxu0 0.0
      %3084 = vmatprep.subr.mxu0 0.0
      %3085 = vmatpush1.msra.mxu0 0.0
      %3086 = vmatprep.subr.mxu0 0.0
      %3087 = vmatpush1.msra.mxu0 0.0
      %3088 = vmatprep.subr.mxu0 0.0
      %3089 = vmatpush1.msra.mxu0 0.0
      %3090 = vmatprep.subr.mxu0 0.0
      %3091 = vmatpush1.msra.mxu0 0.0
      %3092 = vmatprep.subr.mxu0 0.0
      %3093 = vmatpush1.msra.mxu0 0.0
      %3094 = vmatprep.subr.mxu0 0.0
      %3095 = vmatpush1.msra.mxu0 0.0
      %3096 = vmatprep.subr.mxu0 0.0
      %3097 = vmatpush1.msra.mxu0 0.0
      %3098 = vmatprep.subr.mxu0 0.0
      %3099 = vmatpush1.msra.mxu0 0.0
      %3100 = vmatprep.subr.mxu0 0.0
      %3101 = vmatpush1.msra.mxu0 0.0
      %3102 = vmatprep.subr.mxu0 0.0
      %3103 = vmatpush1.msra.mxu0 0.0
      %3104 = vmatprep.subr.mxu0 0.0
      %3105 = vmatpush1.msra.mxu0 0.0
      %3106 = vmatprep.subr.mxu0 0.0
      %3107 = vmatpush1.msra.mxu0 0.0
      %3108 = vmatprep.subr.mxu0 0.0
      %3109 = vmatpush1.msra.mxu0 0.0
      %3110 = vmatprep.subr.mxu0 0.0
      %3111 = vmatpush1.msra.mxu0 0.0
      %3112 = vmatprep.subr.mxu0 0.0
      %3113 = vmatpush1.msra.mxu0 0.0
      %3114 = vmatprep.subr.mxu0 0.0
      %3115 = vmatpush1.msra.mxu0 0.0
      %3116 = vmatprep.subr.mxu0 0.0
      %3117 = vmatpush1.msra.mxu0 0.0
      %3118 = vmatprep.subr.mxu0 0.0
      %3119 = vmatpush1.msra.mxu0 0.0
      %3120 = vmatprep.mubr.f32.mxu0 0.0
      %3121 = vmatmul.mubr.f32.gmra.mrb[0].mxu0 %v3051
      %v3122 = vpop.f32.mrb[0].mxu0
      %v3123 = vadd.f32 0.0, %v3122
      %v3124 = vpop.f32.mrb[0].mxu0
      %3125 = vmatprep.mubr.f32.mxu0 0.0
      %3126 = vmatmul.mubr.f32.gmra.mrb[0].mxu0 %v3054
      %v3127 = vpop.f32.mrb[0].mxu0
      %v3128 = vadd.f32 0.0, %v3127
      %v3129 = vpop.f32.mrb[0].mxu0
      %3130 = vdwg.mxu0
      %3131 = vrot.lane.b32.xlu0 %v795, 64
      %v3132 = vpop.permute.xlu0 %3131
      %3133 = vrot.lane.b32.xlu0 %v797, 64
      %v3134 = vpop.permute.xlu0 %3133
      %v3138 = vsel %vm2343, %v2674, 0
      %v3141 = vsel %vm2343, %v2675, 0
      %3143 = vmatprep.subr.mxu0 0.0
      %3144 = vmatpush1.msra.mxu0 %v3132
      %3145 = vmatprep.subr.mxu0 0.0
      %3146 = vmatpush1.msra.mxu0 %v3134
      %3147 = vmatprep.subr.mxu0 0.0
      %3148 = vmatpush1.msra.mxu0 0.0
      %3149 = vmatprep.subr.mxu0 0.0
      %3150 = vmatpush1.msra.mxu0 0.0
      %3151 = vmatprep.subr.mxu0 0.0
      %3152 = vmatpush1.msra.mxu0 0.0
      %3153 = vmatprep.subr.mxu0 0.0
      %3154 = vmatpush1.msra.mxu0 0.0
      %3155 = vmatprep.subr.mxu0 0.0
      %3156 = vmatpush1.msra.mxu0 0.0
      %3157 = vmatprep.subr.mxu0 0.0
      %3158 = vmatpush1.msra.mxu0 0.0
      %3159 = vmatprep.subr.mxu0 0.0
      %3160 = vmatpush1.msra.mxu0 0.0
      %3161 = vmatprep.subr.mxu0 0.0
      %3162 = vmatpush1.msra.mxu0 0.0
      %3163 = vmatprep.subr.mxu0 0.0
      %3164 = vmatpush1.msra.mxu0 0.0
      %3165 = vmatprep.subr.mxu0 0.0
      %3166 = vmatpush1.msra.mxu0 0.0
      %3167 = vmatprep.subr.mxu0 0.0
      %3168 = vmatpush1.msra.mxu0 0.0
      %3169 = vmatprep.subr.mxu0 0.0
      %3170 = vmatpush1.msra.mxu0 0.0
      %3171 = vmatprep.subr.mxu0 0.0
      %3172 = vmatpush1.msra.mxu0 0.0
      %3173 = vmatprep.subr.mxu0 0.0
      %3174 = vmatpush1.msra.mxu0 0.0
      %3175 = vmatprep.subr.mxu0 0.0
      %3176 = vmatpush1.msra.mxu0 0.0
      %3177 = vmatprep.subr.mxu0 0.0
      %3178 = vmatpush1.msra.mxu0 0.0
      %3179 = vmatprep.subr.mxu0 0.0
      %3180 = vmatpush1.msra.mxu0 0.0
      %3181 = vmatprep.subr.mxu0 0.0
      %3182 = vmatpush1.msra.mxu0 0.0
      %3183 = vmatprep.subr.mxu0 0.0
      %3184 = vmatpush1.msra.mxu0 0.0
      %3185 = vmatprep.subr.mxu0 0.0
      %3186 = vmatpush1.msra.mxu0 0.0
      %3187 = vmatprep.subr.mxu0 0.0
      %3188 = vmatpush1.msra.mxu0 0.0
      %3189 = vmatprep.subr.mxu0 0.0
      %3190 = vmatpush1.msra.mxu0 0.0
      %3191 = vmatprep.subr.mxu0 0.0
      %3192 = vmatpush1.msra.mxu0 0.0
      %3193 = vmatprep.subr.mxu0 0.0
      %3194 = vmatpush1.msra.mxu0 0.0
      %3195 = vmatprep.subr.mxu0 0.0
      %3196 = vmatpush1.msra.mxu0 0.0
      %3197 = vmatprep.subr.mxu0 0.0
      %3198 = vmatpush1.msra.mxu0 0.0
      %3199 = vmatprep.subr.mxu0 0.0
      %3200 = vmatpush1.msra.mxu0 0.0
      %3201 = vmatprep.subr.mxu0 0.0
      %3202 = vmatpush1.msra.mxu0 0.0
      %3203 = vmatprep.subr.mxu0 0.0
      %3204 = vmatpush1.msra.mxu0 0.0
      %3205 = vmatprep.subr.mxu0 0.0
      %3206 = vmatpush1.msra.mxu0 0.0
      %3207 = vmatprep.mubr.f32.mxu0 0.0
      %3208 = vmatmul.mubr.f32.gmra.mrb[0].mxu0 %v3138
      %v3209 = vpop.f32.mrb[0].mxu0
      %v3210 = vadd.f32 0.0, %v3209
      %v3211 = vpop.f32.mrb[0].mxu0
      %3212 = vmatprep.mubr.f32.mxu0 0.0
      %3213 = vmatmul.mubr.f32.gmra.mrb[0].mxu0 %v3141
      %v3214 = vpop.f32.mrb[0].mxu0
      %v3215 = vadd.f32 0.0, %v3214
      %v3216 = vpop.f32.mrb[0].mxu0
      %3217 = vdwg.mxu0
      %3218 = vrot.lane.b32.xlu0 %v799, 64
      %v3219 = vpop.permute.xlu0 %3218
      %3220 = vrot.lane.b32.xlu0 %v801, 64
      %v3221 = vpop.permute.xlu0 %3220
      %v3225 = vsel %vm2343, %v2676, 0
      %v3228 = vsel %vm2343, %v2677, 0
      %3230 = vmatprep.subr.mxu0 0.0
      %3231 = vmatpush1.msra.mxu0 %v3219
      %3232 = vmatprep.subr.mxu0 0.0
      %3233 = vmatpush1.msra.mxu0 %v3221
      %3234 = vmatprep.subr.mxu0 0.0
      %3235 = vmatpush1.msra.mxu0 0.0
      %3236 = vmatprep.subr.mxu0 0.0
      %3237 = vmatpush1.msra.mxu0 0.0
      %3238 = vmatprep.subr.mxu0 0.0
      %3239 = vmatpush1.msra.mxu0 0.0
      %3240 = vmatprep.subr.mxu0 0.0
      %3241 = vmatpush1.msra.mxu0 0.0
      %3242 = vmatprep.subr.mxu0 0.0
      %3243 = vmatpush1.msra.mxu0 0.0
      %3244 = vmatprep.subr.mxu0 0.0
      %3245 = vmatpush1.msra.mxu0 0.0
      %3246 = vmatprep.subr.mxu0 0.0
      %3247 = vmatpush1.msra.mxu0 0.0
      %3248 = vmatprep.subr.mxu0 0.0
      %3249 = vmatpush1.msra.mxu0 0.0
      %3250 = vmatprep.subr.mxu0 0.0
      %3251 = vmatpush1.msra.mxu0 0.0
      %3252 = vmatprep.subr.mxu0 0.0
      %3253 = vmatpush1.msra.mxu0 0.0
      %3254 = vmatprep.subr.mxu0 0.0
      %3255 = vmatpush1.msra.mxu0 0.0
      %3256 = vmatprep.subr.mxu0 0.0
      %3257 = vmatpush1.msra.mxu0 0.0
      %3258 = vmatprep.subr.mxu0 0.0
      %3259 = vmatpush1.msra.mxu0 0.0
      %3260 = vmatprep.subr.mxu0 0.0
      %3261 = vmatpush1.msra.mxu0 0.0
      %3262 = vmatprep.subr.mxu0 0.0
      %3263 = vmatpush1.msra.mxu0 0.0
      %3264 = vmatprep.subr.mxu0 0.0
      %3265 = vmatpush1.msra.mxu0 0.0
      %3266 = vmatprep.subr.mxu0 0.0
      %3267 = vmatpush1.msra.mxu0 0.0
      %3268 = vmatprep.subr.mxu0 0.0
      %3269 = vmatpush1.msra.mxu0 0.0
      %3270 = vmatprep.subr.mxu0 0.0
      %3271 = vmatpush1.msra.mxu0 0.0
      %3272 = vmatprep.subr.mxu0 0.0
      %3273 = vmatpush1.msra.mxu0 0.0
      %3274 = vmatprep.subr.mxu0 0.0
      %3275 = vmatpush1.msra.mxu0 0.0
      %3276 = vmatprep.subr.mxu0 0.0
      %3277 = vmatpush1.msra.mxu0 0.0
      %3278 = vmatprep.subr.mxu0 0.0
      %3279 = vmatpush1.msra.mxu0 0.0
      %3280 = vmatprep.subr.mxu0 0.0
      %3281 = vmatpush1.msra.mxu0 0.0
      %3282 = vmatprep.subr.mxu0 0.0
      %3283 = vmatpush1.msra.mxu0 0.0
      %3284 = vmatprep.subr.mxu0 0.0
      %3285 = vmatpush1.msra.mxu0 0.0
      %3286 = vmatprep.subr.mxu0 0.0
      %3287 = vmatpush1.msra.mxu0 0.0
      %3288 = vmatprep.subr.mxu0 0.0
      %3289 = vmatpush1.msra.mxu0 0.0
      %3290 = vmatprep.subr.mxu0 0.0
      %3291 = vmatpush1.msra.mxu0 0.0
      %3292 = vmatprep.subr.mxu0 0.0
      %3293 = vmatpush1.msra.mxu0 0.0
      %3294 = vmatprep.mubr.f32.mxu0 0.0
      %3295 = vmatmul.mubr.f32.gmra.mrb[0].mxu0 %v3225
      %v3296 = vpop.f32.mrb[0].mxu0
      %v3297 = vadd.f32 0.0, %v3296
      %v3298 = vpop.f32.mrb[0].mxu0
      %3299 = vmatprep.mubr.f32.mxu0 0.0
      %3300 = vmatmul.mubr.f32.gmra.mrb[0].mxu0 %v3228
      %v3301 = vpop.f32.mrb[0].mxu0
      %v3302 = vadd.f32 0.0, %v3301
      %v3303 = vpop.f32.mrb[0].mxu0
      %3304 = vdwg.mxu0
      %3305 = vrot.lane.b32.xlu0 %v803, 64
      %v3306 = vpop.permute.xlu0 %3305
      %3307 = vrot.lane.b32.xlu0 %v805, 64
      %v3308 = vpop.permute.xlu0 %3307
      %v3312 = vsel %vm2343, %v2678, 0
      %v3315 = vsel %vm2343, %v2679, 0
      %3317 = vmatprep.subr.mxu0 0.0
      %3318 = vmatpush1.msra.mxu0 %v3306
      %3319 = vmatprep.subr.mxu0 0.0
      %3320 = vmatpush1.msra.mxu0 %v3308
      %3321 = vmatprep.subr.mxu0 0.0
      %3322 = vmatpush1.msra.mxu0 0.0
      %3323 = vmatprep.subr.mxu0 0.0
      %3324 = vmatpush1.msra.mxu0 0.0
      %3325 = vmatprep.subr.mxu0 0.0
      %3326 = vmatpush1.msra.mxu0 0.0
      %3327 = vmatprep.subr.mxu0 0.0
      %3328 = vmatpush1.msra.mxu0 0.0
      %3329 = vmatprep.subr.mxu0 0.0
      %3330 = vmatpush1.msra.mxu0 0.0
      %3331 = vmatprep.subr.mxu0 0.0
      %3332 = vmatpush1.msra.mxu0 0.0
      %3333 = vmatprep.subr.mxu0 0.0
      %3334 = vmatpush1.msra.mxu0 0.0
      %3335 = vmatprep.subr.mxu0 0.0
      %3336 = vmatpush1.msra.mxu0 0.0
      %3337 = vmatprep.subr.mxu0 0.0
      %3338 = vmatpush1.msra.mxu0 0.0
      %3339 = vmatprep.subr.mxu0 0.0
      %3340 = vmatpush1.msra.mxu0 0.0
      %3341 = vmatprep.subr.mxu0 0.0
      %3342 = vmatpush1.msra.mxu0 0.0
      %3343 = vmatprep.subr.mxu0 0.0
      %3344 = vmatpush1.msra.mxu0 0.0
      %3345 = vmatprep.subr.mxu0 0.0
      %3346 = vmatpush1.msra.mxu0 0.0
      %3347 = vmatprep.subr.mxu0 0.0
      %3348 = vmatpush1.msra.mxu0 0.0
      %3349 = vmatprep.subr.mxu0 0.0
      %3350 = vmatpush1.msra.mxu0 0.0
      %3351 = vmatprep.subr.mxu0 0.0
      %3352 = vmatpush1.msra.mxu0 0.0
      %3353 = vmatprep.subr.mxu0 0.0
      %3354 = vmatpush1.msra.mxu0 0.0
      %3355 = vmatprep.subr.mxu0 0.0
      %3356 = vmatpush1.msra.mxu0 0.0
      %3357 = vmatprep.subr.mxu0 0.0
      %3358 = vmatpush1.msra.mxu0 0.0
      %3359 = vmatprep.subr.mxu0 0.0
      %3360 = vmatpush1.msra.mxu0 0.0
      %3361 = vmatprep.subr.mxu0 0.0
      %3362 = vmatpush1.msra.mxu0 0.0
      %3363 = vmatprep.subr.mxu0 0.0
      %3364 = vmatpush1.msra.mxu0 0.0
      %3365 = vmatprep.subr.mxu0 0.0
      %3366 = vmatpush1.msra.mxu0 0.0
      %3367 = vmatprep.subr.mxu0 0.0
      %3368 = vmatpush1.msra.mxu0 0.0
      %3369 = vmatprep.subr.mxu0 0.0
      %3370 = vmatpush1.msra.mxu0 0.0
      %3371 = vmatprep.subr.mxu0 0.0
      %3372 = vmatpush1.msra.mxu0 0.0
      %3373 = vmatprep.subr.mxu0 0.0
      %3374 = vmatpush1.msra.mxu0 0.0
      %3375 = vmatprep.subr.mxu0 0.0
      %3376 = vmatpush1.msra.mxu0 0.0
      %3377 = vmatprep.subr.mxu0 0.0
      %3378 = vmatpush1.msra.mxu0 0.0
      %3379 = vmatprep.subr.mxu0 0.0
      %3380 = vmatpush1.msra.mxu0 0.0
      %3381 = vmatprep.mubr.f32.mxu0 0.0
      %3382 = vmatmul.mubr.f32.gmra.mrb[0].mxu0 %v3312
      %v3383 = vpop.f32.mrb[0].mxu0
      %v3384 = vadd.f32 0.0, %v3383
      %v3385 = vpop.f32.mrb[0].mxu0
      %3386 = vmatprep.mubr.f32.mxu0 0.0
      %3387 = vmatmul.mubr.f32.gmra.mrb[0].mxu0 %v3315
      %v3388 = vpop.f32.mrb[0].mxu0
      %v3389 = vadd.f32 0.0, %v3388
      %v3390 = vpop.f32.mrb[0].mxu0
      %3391 = vdwg.mxu0
      %3392 = vrot.lane.b32.xlu0 %v807, 64
      %v3393 = vpop.permute.xlu0 %3392
      %3394 = vrot.lane.b32.xlu0 %v809, 64
      %v3395 = vpop.permute.xlu0 %3394
      %v3399 = vsel %vm2343, %v2680, 0
      %v3402 = vsel %vm2343, %v2681, 0
      %3404 = vmatprep.subr.mxu0 0.0
      %3405 = vmatpush1.msra.mxu0 %v3393
      %3406 = vmatprep.subr.mxu0 0.0
      %3407 = vmatpush1.msra.mxu0 %v3395
      %3408 = vmatprep.subr.mxu0 0.0
      %3409 = vmatpush1.msra.mxu0 0.0
      %3410 = vmatprep.subr.mxu0 0.0
      %3411 = vmatpush1.msra.mxu0 0.0
      %3412 = vmatprep.subr.mxu0 0.0
      %3413 = vmatpush1.msra.mxu0 0.0
      %3414 = vmatprep.subr.mxu0 0.0
      %3415 = vmatpush1.msra.mxu0 0.0
      %3416 = vmatprep.subr.mxu0 0.0
      %3417 = vmatpush1.msra.mxu0 0.0
      %3418 = vmatprep.subr.mxu0 0.0
      %3419 = vmatpush1.msra.mxu0 0.0
      %3420 = vmatprep.subr.mxu0 0.0
      %3421 = vmatpush1.msra.mxu0 0.0
      %3422 = vmatprep.subr.mxu0 0.0
      %3423 = vmatpush1.msra.mxu0 0.0
      %3424 = vmatprep.subr.mxu0 0.0
      %3425 = vmatpush1.msra.mxu0 0.0
      %3426 = vmatprep.subr.mxu0 0.0
      %3427 = vmatpush1.msra.mxu0 0.0
      %3428 = vmatprep.subr.mxu0 0.0
      %3429 = vmatpush1.msra.mxu0 0.0
      %3430 = vmatprep.subr.mxu0 0.0
      %3431 = vmatpush1.msra.mxu0 0.0
      %3432 = vmatprep.subr.mxu0 0.0
      %3433 = vmatpush1.msra.mxu0 0.0
      %3434 = vmatprep.subr.mxu0 0.0
      %3435 = vmatpush1.msra.mxu0 0.0
      %3436 = vmatprep.subr.mxu0 0.0
      %3437 = vmatpush1.msra.mxu0 0.0
      %3438 = vmatprep.subr.mxu0 0.0
      %3439 = vmatpush1.msra.mxu0 0.0
      %3440 = vmatprep.subr.mxu0 0.0
      %3441 = vmatpush1.msra.mxu0 0.0
      %3442 = vmatprep.subr.mxu0 0.0
      %3443 = vmatpush1.msra.mxu0 0.0
      %3444 = vmatprep.subr.mxu0 0.0
      %3445 = vmatpush1.msra.mxu0 0.0
      %3446 = vmatprep.subr.mxu0 0.0
      %3447 = vmatpush1.msra.mxu0 0.0
      %3448 = vmatprep.subr.mxu0 0.0
      %3449 = vmatpush1.msra.mxu0 0.0
      %3450 = vmatprep.subr.mxu0 0.0
      %3451 = vmatpush1.msra.mxu0 0.0
      %3452 = vmatprep.subr.mxu0 0.0
      %3453 = vmatpush1.msra.mxu0 0.0
      %3454 = vmatprep.subr.mxu0 0.0
      %3455 = vmatpush1.msra.mxu0 0.0
      %3456 = vmatprep.subr.mxu0 0.0
      %3457 = vmatpush1.msra.mxu0 0.0
      %3458 = vmatprep.subr.mxu0 0.0
      %3459 = vmatpush1.msra.mxu0 0.0
      %3460 = vmatprep.subr.mxu0 0.0
      %3461 = vmatpush1.msra.mxu0 0.0
      %3462 = vmatprep.subr.mxu0 0.0
      %3463 = vmatpush1.msra.mxu0 0.0
      %3464 = vmatprep.subr.mxu0 0.0
      %3465 = vmatpush1.msra.mxu0 0.0
      %3466 = vmatprep.subr.mxu0 0.0
      %3467 = vmatpush1.msra.mxu0 0.0
      %3468 = vmatprep.mubr.f32.mxu0 0.0
      %3469 = vmatmul.mubr.f32.gmra.mrb[0].mxu0 %v3399
      %v3470 = vpop.f32.mrb[0].mxu0
      %v3471 = vadd.f32 0.0, %v3470
      %v3472 = vpop.f32.mrb[0].mxu0
      %3473 = vmatprep.mubr.f32.mxu0 0.0
      %3474 = vmatmul.mubr.f32.gmra.mrb[0].mxu0 %v3402
      %v3475 = vpop.f32.mrb[0].mxu0
      %v3476 = vadd.f32 0.0, %v3475
      %v3477 = vpop.f32.mrb[0].mxu0
      %3478 = vdwg.mxu0
      %3479 = vrot.lane.b32.xlu0 %v811, 64
      %v3480 = vpop.permute.xlu0 %3479
      %3481 = vrot.lane.b32.xlu0 %v813, 64
      %v3482 = vpop.permute.xlu0 %3481
      %v3486 = vsel %vm2343, %v2682, 0
      %v3489 = vsel %vm2343, %v2683, 0
      %3491 = vmatprep.subr.mxu0 0.0
      %3492 = vmatpush1.msra.mxu0 %v3480
      %3493 = vmatprep.subr.mxu0 0.0
      %3494 = vmatpush1.msra.mxu0 %v3482
      %3495 = vmatprep.subr.mxu0 0.0
      %3496 = vmatpush1.msra.mxu0 0.0
      %3497 = vmatprep.subr.mxu0 0.0
      %3498 = vmatpush1.msra.mxu0 0.0
      %3499 = vmatprep.subr.mxu0 0.0
      %3500 = vmatpush1.msra.mxu0 0.0
      %3501 = vmatprep.subr.mxu0 0.0
      %3502 = vmatpush1.msra.mxu0 0.0
      %3503 = vmatprep.subr.mxu0 0.0
      %3504 = vmatpush1.msra.mxu0 0.0
      %3505 = vmatprep.subr.mxu0 0.0
      %3506 = vmatpush1.msra.mxu0 0.0
      %3507 = vmatprep.subr.mxu0 0.0
      %3508 = vmatpush1.msra.mxu0 0.0
      %3509 = vmatprep.subr.mxu0 0.0
      %3510 = vmatpush1.msra.mxu0 0.0
      %3511 = vmatprep.subr.mxu0 0.0
      %3512 = vmatpush1.msra.mxu0 0.0
      %3513 = vmatprep.subr.mxu0 0.0
      %3514 = vmatpush1.msra.mxu0 0.0
      %3515 = vmatprep.subr.mxu0 0.0
      %3516 = vmatpush1.msra.mxu0 0.0
      %3517 = vmatprep.subr.mxu0 0.0
      %3518 = vmatpush1.msra.mxu0 0.0
      %3519 = vmatprep.subr.mxu0 0.0
      %3520 = vmatpush1.msra.mxu0 0.0
      %3521 = vmatprep.subr.mxu0 0.0
      %3522 = vmatpush1.msra.mxu0 0.0
      %3523 = vmatprep.subr.mxu0 0.0
      %3524 = vmatpush1.msra.mxu0 0.0
      %3525 = vmatprep.subr.mxu0 0.0
      %3526 = vmatpush1.msra.mxu0 0.0
      %3527 = vmatprep.subr.mxu0 0.0
      %3528 = vmatpush1.msra.mxu0 0.0
      %3529 = vmatprep.subr.mxu0 0.0
      %3530 = vmatpush1.msra.mxu0 0.0
      %3531 = vmatprep.subr.mxu0 0.0
      %3532 = vmatpush1.msra.mxu0 0.0
      %3533 = vmatprep.subr.mxu0 0.0
      %3534 = vmatpush1.msra.mxu0 0.0
      %3535 = vmatprep.subr.mxu0 0.0
      %3536 = vmatpush1.msra.mxu0 0.0
      %3537 = vmatprep.subr.mxu0 0.0
      %3538 = vmatpush1.msra.mxu0 0.0
      %3539 = vmatprep.subr.mxu0 0.0
      %3540 = vmatpush1.msra.mxu0 0.0
      %3541 = vmatprep.subr.mxu0 0.0
      %3542 = vmatpush1.msra.mxu0 0.0
      %3543 = vmatprep.subr.mxu0 0.0
      %3544 = vmatpush1.msra.mxu0 0.0
      %3545 = vmatprep.subr.mxu0 0.0
      %3546 = vmatpush1.msra.mxu0 0.0
      %3547 = vmatprep.subr.mxu0 0.0
      %3548 = vmatpush1.msra.mxu0 0.0
      %3549 = vmatprep.subr.mxu0 0.0
      %3550 = vmatpush1.msra.mxu0 0.0
      %3551 = vmatprep.subr.mxu0 0.0
      %3552 = vmatpush1.msra.mxu0 0.0
      %3553 = vmatprep.subr.mxu0 0.0
      %3554 = vmatpush1.msra.mxu0 0.0
      %3555 = vmatprep.mubr.f32.mxu0 0.0
      %3556 = vmatmul.mubr.f32.gmra.mrb[0].mxu0 %v3486
      %v3557 = vpop.f32.mrb[0].mxu0
      %v3558 = vadd.f32 0.0, %v3557
      %v3559 = vpop.f32.mrb[0].mxu0
      %3560 = vmatprep.mubr.f32.mxu0 0.0
      %3561 = vmatmul.mubr.f32.gmra.mrb[0].mxu0 %v3489
      %v3562 = vpop.f32.mrb[0].mxu0
      %v3563 = vadd.f32 0.0, %v3562
      %v3564 = vpop.f32.mrb[0].mxu0
      %3565 = vdwg.mxu0
      %3566 = vrot.lane.b32.xlu0 %v815, 64
      %v3567 = vpop.permute.xlu0 %3566
      %3568 = vrot.lane.b32.xlu0 %v817, 64
      %v3569 = vpop.permute.xlu0 %3568
      %v3573 = vsel %vm2343, %v2684, 0
      %v3576 = vsel %vm2343, %v2685, 0
      %3578 = vmatprep.subr.mxu0 0.0
      %3579 = vmatpush1.msra.mxu0 %v3567
      %3580 = vmatprep.subr.mxu0 0.0
      %3581 = vmatpush1.msra.mxu0 %v3569
      %3582 = vmatprep.subr.mxu0 0.0
      %3583 = vmatpush1.msra.mxu0 0.0
      %3584 = vmatprep.subr.mxu0 0.0
      %3585 = vmatpush1.msra.mxu0 0.0
      %3586 = vmatprep.subr.mxu0 0.0
      %3587 = vmatpush1.msra.mxu0 0.0
      %3588 = vmatprep.subr.mxu0 0.0
      %3589 = vmatpush1.msra.mxu0 0.0
      %3590 = vmatprep.subr.mxu0 0.0
      %3591 = vmatpush1.msra.mxu0 0.0
      %3592 = vmatprep.subr.mxu0 0.0
      %3593 = vmatpush1.msra.mxu0 0.0
      %3594 = vmatprep.subr.mxu0 0.0
      %3595 = vmatpush1.msra.mxu0 0.0
      %3596 = vmatprep.subr.mxu0 0.0
      %3597 = vmatpush1.msra.mxu0 0.0
      %3598 = vmatprep.subr.mxu0 0.0
      %3599 = vmatpush1.msra.mxu0 0.0
      %3600 = vmatprep.subr.mxu0 0.0
      %3601 = vmatpush1.msra.mxu0 0.0
      %3602 = vmatprep.subr.mxu0 0.0
      %3603 = vmatpush1.msra.mxu0 0.0
      %3604 = vmatprep.subr.mxu0 0.0
      %3605 = vmatpush1.msra.mxu0 0.0
      %3606 = vmatprep.subr.mxu0 0.0
      %3607 = vmatpush1.msra.mxu0 0.0
      %3608 = vmatprep.subr.mxu0 0.0
      %3609 = vmatpush1.msra.mxu0 0.0
      %3610 = vmatprep.subr.mxu0 0.0
      %3611 = vmatpush1.msra.mxu0 0.0
      %3612 = vmatprep.subr.mxu0 0.0
      %3613 = vmatpush1.msra.mxu0 0.0
      %3614 = vmatprep.subr.mxu0 0.0
      %3615 = vmatpush1.msra.mxu0 0.0
      %3616 = vmatprep.subr.mxu0 0.0
      %3617 = vmatpush1.msra.mxu0 0.0
      %3618 = vmatprep.subr.mxu0 0.0
      %3619 = vmatpush1.msra.mxu0 0.0
      %3620 = vmatprep.subr.mxu0 0.0
      %3621 = vmatpush1.msra.mxu0 0.0
      %3622 = vmatprep.subr.mxu0 0.0
      %3623 = vmatpush1.msra.mxu0 0.0
      %3624 = vmatprep.subr.mxu0 0.0
      %3625 = vmatpush1.msra.mxu0 0.0
      %3626 = vmatprep.subr.mxu0 0.0
      %3627 = vmatpush1.msra.mxu0 0.0
      %3628 = vmatprep.subr.mxu0 0.0
      %3629 = vmatpush1.msra.mxu0 0.0
      %3630 = vmatprep.subr.mxu0 0.0
      %3631 = vmatpush1.msra.mxu0 0.0
      %3632 = vmatprep.subr.mxu0 0.0
      %3633 = vmatpush1.msra.mxu0 0.0
      %3634 = vmatprep.subr.mxu0 0.0
      %3635 = vmatpush1.msra.mxu0 0.0
      %3636 = vmatprep.subr.mxu0 0.0
      %3637 = vmatpush1.msra.mxu0 0.0
      %3638 = vmatprep.subr.mxu0 0.0
      %3639 = vmatpush1.msra.mxu0 0.0
      %3640 = vmatprep.subr.mxu0 0.0
      %3641 = vmatpush1.msra.mxu0 0.0
      %3642 = vmatprep.mubr.f32.mxu0 0.0
      %3643 = vmatmul.mubr.f32.gmra.mrb[0].mxu0 %v3573
      %v3644 = vpop.f32.mrb[0].mxu0
      %v3645 = vadd.f32 0.0, %v3644
      %v3646 = vpop.f32.mrb[0].mxu0
      %3647 = vmatprep.mubr.f32.mxu0 0.0
      %3648 = vmatmul.mubr.f32.gmra.mrb[0].mxu0 %v3576
      %v3649 = vpop.f32.mrb[0].mxu0
      %v3650 = vadd.f32 0.0, %v3649
      %v3651 = vpop.f32.mrb[0].mxu0
      %3652 = vdwg.mxu0
      %3653 = vrot.lane.b32.xlu0 %v819, 64
      %v3654 = vpop.permute.xlu0 %3653
      %3655 = vrot.lane.b32.xlu0 %v821, 64
      %v3656 = vpop.permute.xlu0 %3655
      %v3660 = vsel %vm2343, %v2686, 0
      %v3663 = vsel %vm2343, %v2687, 0
      %3665 = vmatprep.subr.mxu0 0.0
      %3666 = vmatpush1.msra.mxu0 %v3654
      %3667 = vmatprep.subr.mxu0 0.0
      %3668 = vmatpush1.msra.mxu0 %v3656
      %3669 = vmatprep.subr.mxu0 0.0
      %3670 = vmatpush1.msra.mxu0 0.0
      %3671 = vmatprep.subr.mxu0 0.0
      %3672 = vmatpush1.msra.mxu0 0.0
      %3673 = vmatprep.subr.mxu0 0.0
      %3674 = vmatpush1.msra.mxu0 0.0
      %3675 = vmatprep.subr.mxu0 0.0
      %3676 = vmatpush1.msra.mxu0 0.0
      %3677 = vmatprep.subr.mxu0 0.0
      %3678 = vmatpush1.msra.mxu0 0.0
      %3679 = vmatprep.subr.mxu0 0.0
      %3680 = vmatpush1.msra.mxu0 0.0
      %3681 = vmatprep.subr.mxu0 0.0
      %3682 = vmatpush1.msra.mxu0 0.0
      %3683 = vmatprep.subr.mxu0 0.0
      %3684 = vmatpush1.msra.mxu0 0.0
      %3685 = vmatprep.subr.mxu0 0.0
      %3686 = vmatpush1.msra.mxu0 0.0
      %3687 = vmatprep.subr.mxu0 0.0
      %3688 = vmatpush1.msra.mxu0 0.0
      %3689 = vmatprep.subr.mxu0 0.0
      %3690 = vmatpush1.msra.mxu0 0.0
      %3691 = vmatprep.subr.mxu0 0.0
      %3692 = vmatpush1.msra.mxu0 0.0
      %3693 = vmatprep.subr.mxu0 0.0
      %3694 = vmatpush1.msra.mxu0 0.0
      %3695 = vmatprep.subr.mxu0 0.0
      %3696 = vmatpush1.msra.mxu0 0.0
      %3697 = vmatprep.subr.mxu0 0.0
      %3698 = vmatpush1.msra.mxu0 0.0
      %3699 = vmatprep.subr.mxu0 0.0
      %3700 = vmatpush1.msra.mxu0 0.0
      %3701 = vmatprep.subr.mxu0 0.0
      %3702 = vmatpush1.msra.mxu0 0.0
      %3703 = vmatprep.subr.mxu0 0.0
      %3704 = vmatpush1.msra.mxu0 0.0
      %3705 = vmatprep.subr.mxu0 0.0
      %3706 = vmatpush1.msra.mxu0 0.0
      %3707 = vmatprep.subr.mxu0 0.0
      %3708 = vmatpush1.msra.mxu0 0.0
      %3709 = vmatprep.subr.mxu0 0.0
      %3710 = vmatpush1.msra.mxu0 0.0
      %3711 = vmatprep.subr.mxu0 0.0
      %3712 = vmatpush1.msra.mxu0 0.0
      %3713 = vmatprep.subr.mxu0 0.0
      %3714 = vmatpush1.msra.mxu0 0.0
      %3715 = vmatprep.subr.mxu0 0.0
      %3716 = vmatpush1.msra.mxu0 0.0
      %3717 = vmatprep.subr.mxu0 0.0
      %3718 = vmatpush1.msra.mxu0 0.0
      %3719 = vmatprep.subr.mxu0 0.0
      %3720 = vmatpush1.msra.mxu0 0.0
      %3721 = vmatprep.subr.mxu0 0.0
      %3722 = vmatpush1.msra.mxu0 0.0
      %3723 = vmatprep.subr.mxu0 0.0
      %3724 = vmatpush1.msra.mxu0 0.0
      %3725 = vmatprep.subr.mxu0 0.0
      %3726 = vmatpush1.msra.mxu0 0.0
      %3727 = vmatprep.subr.mxu0 0.0
      %3728 = vmatpush1.msra.mxu0 0.0
      %3729 = vmatprep.mubr.f32.mxu0 0.0
      %3730 = vmatmul.mubr.f32.gmra.mrb[0].mxu0 %v3660
      %v3731 = vpop.f32.mrb[0].mxu0
      %v3732 = vadd.f32 0.0, %v3731
      %v3733 = vpop.f32.mrb[0].mxu0
      %3734 = vmatprep.mubr.f32.mxu0 0.0
      %3735 = vmatmul.mubr.f32.gmra.mrb[0].mxu0 %v3663
      %v3736 = vpop.f32.mrb[0].mxu0
      %v3737 = vadd.f32 0.0, %v3736
      %v3738 = vpop.f32.mrb[0].mxu0
      %3739 = vdwg.mxu0
      %3740 = vrot.lane.b32.xlu0 %v823, 64
      %v3741 = vpop.permute.xlu0 %3740
      %3742 = vrot.lane.b32.xlu0 %v825, 64
      %v3743 = vpop.permute.xlu0 %3742
      %v3747 = vsel %vm2343, %v2688, 0
      %v3750 = vsel %vm2343, %v2689, 0
      %3752 = vmatprep.subr.mxu0 0.0
      %3753 = vmatpush1.msra.mxu0 %v3741
      %3754 = vmatprep.subr.mxu0 0.0
      %3755 = vmatpush1.msra.mxu0 %v3743
      %3756 = vmatprep.subr.mxu0 0.0
      %3757 = vmatpush1.msra.mxu0 0.0
      %3758 = vmatprep.subr.mxu0 0.0
      %3759 = vmatpush1.msra.mxu0 0.0
      %3760 = vmatprep.subr.mxu0 0.0
      %3761 = vmatpush1.msra.mxu0 0.0
      %3762 = vmatprep.subr.mxu0 0.0
      %3763 = vmatpush1.msra.mxu0 0.0
      %3764 = vmatprep.subr.mxu0 0.0
      %3765 = vmatpush1.msra.mxu0 0.0
      %3766 = vmatprep.subr.mxu0 0.0
      %3767 = vmatpush1.msra.mxu0 0.0
      %3768 = vmatprep.subr.mxu0 0.0
      %3769 = vmatpush1.msra.mxu0 0.0
      %3770 = vmatprep.subr.mxu0 0.0
      %3771 = vmatpush1.msra.mxu0 0.0
      %3772 = vmatprep.subr.mxu0 0.0
      %3773 = vmatpush1.msra.mxu0 0.0
      %3774 = vmatprep.subr.mxu0 0.0
      %3775 = vmatpush1.msra.mxu0 0.0
      %3776 = vmatprep.subr.mxu0 0.0
      %3777 = vmatpush1.msra.mxu0 0.0
      %3778 = vmatprep.subr.mxu0 0.0
      %3779 = vmatpush1.msra.mxu0 0.0
      %3780 = vmatprep.subr.mxu0 0.0
      %3781 = vmatpush1.msra.mxu0 0.0
      %3782 = vmatprep.subr.mxu0 0.0
      %3783 = vmatpush1.msra.mxu0 0.0
      %3784 = vmatprep.subr.mxu0 0.0
      %3785 = vmatpush1.msra.mxu0 0.0
      %3786 = vmatprep.subr.mxu0 0.0
      %3787 = vmatpush1.msra.mxu0 0.0
      %3788 = vmatprep.subr.mxu0 0.0
      %3789 = vmatpush1.msra.mxu0 0.0
      %3790 = vmatprep.subr.mxu0 0.0
      %3791 = vmatpush1.msra.mxu0 0.0
      %3792 = vmatprep.subr.mxu0 0.0
      %3793 = vmatpush1.msra.mxu0 0.0
      %3794 = vmatprep.subr.mxu0 0.0
      %3795 = vmatpush1.msra.mxu0 0.0
      %3796 = vmatprep.subr.mxu0 0.0
      %3797 = vmatpush1.msra.mxu0 0.0
      %3798 = vmatprep.subr.mxu0 0.0
      %3799 = vmatpush1.msra.mxu0 0.0
      %3800 = vmatprep.subr.mxu0 0.0
      %3801 = vmatpush1.msra.mxu0 0.0
      %3802 = vmatprep.subr.mxu0 0.0
      %3803 = vmatpush1.msra.mxu0 0.0
      %3804 = vmatprep.subr.mxu0 0.0
      %3805 = vmatpush1.msra.mxu0 0.0
      %3806 = vmatprep.subr.mxu0 0.0
      %3807 = vmatpush1.msra.mxu0 0.0
      %3808 = vmatprep.subr.mxu0 0.0
      %3809 = vmatpush1.msra.mxu0 0.0
      %3810 = vmatprep.subr.mxu0 0.0
      %3811 = vmatpush1.msra.mxu0 0.0
      %3812 = vmatprep.subr.mxu0 0.0
      %3813 = vmatpush1.msra.mxu0 0.0
      %3814 = vmatprep.subr.mxu0 0.0
      %3815 = vmatpush1.msra.mxu0 0.0
      %3816 = vmatprep.mubr.f32.mxu0 0.0
      %3817 = vmatmul.mubr.f32.gmra.mrb[0].mxu0 %v3747
      %v3818 = vpop.f32.mrb[0].mxu0
      %v3819 = vadd.f32 0.0, %v3818
      %v3820 = vpop.f32.mrb[0].mxu0
      %3821 = vmatprep.mubr.f32.mxu0 0.0
      %3822 = vmatmul.mubr.f32.gmra.mrb[0].mxu0 %v3750
      %v3823 = vpop.f32.mrb[0].mxu0
      %v3824 = vadd.f32 0.0, %v3823
      %v3825 = vpop.f32.mrb[0].mxu0
      %3826 = vdwg.mxu0
      %3827 = vrot.lane.b32.xlu0 %v827, 64
      %v3828 = vpop.permute.xlu0 %3827
      %3829 = vrot.lane.b32.xlu0 %v829, 64
      %v3830 = vpop.permute.xlu0 %3829
      %v3834 = vsel %vm2343, %v2690, 0
      %v3837 = vsel %vm2343, %v2691, 0
      %3839 = vmatprep.subr.mxu0 0.0
      %3840 = vmatpush1.msra.mxu0 %v3828
      %3841 = vmatprep.subr.mxu0 0.0
      %3842 = vmatpush1.msra.mxu0 %v3830
      %3843 = vmatprep.subr.mxu0 0.0
      %3844 = vmatpush1.msra.mxu0 0.0
      %3845 = vmatprep.subr.mxu0 0.0
      %3846 = vmatpush1.msra.mxu0 0.0
      %3847 = vmatprep.subr.mxu0 0.0
      %3848 = vmatpush1.msra.mxu0 0.0
      %3849 = vmatprep.subr.mxu0 0.0
      %3850 = vmatpush1.msra.mxu0 0.0
      %3851 = vmatprep.subr.mxu0 0.0
      %3852 = vmatpush1.msra.mxu0 0.0
      %3853 = vmatprep.subr.mxu0 0.0
      %3854 = vmatpush1.msra.mxu0 0.0
      %3855 = vmatprep.subr.mxu0 0.0
      %3856 = vmatpush1.msra.mxu0 0.0
      %3857 = vmatprep.subr.mxu0 0.0
      %3858 = vmatpush1.msra.mxu0 0.0
      %3859 = vmatprep.subr.mxu0 0.0
      %3860 = vmatpush1.msra.mxu0 0.0
      %3861 = vmatprep.subr.mxu0 0.0
      %3862 = vmatpush1.msra.mxu0 0.0
      %3863 = vmatprep.subr.mxu0 0.0
      %3864 = vmatpush1.msra.mxu0 0.0
      %3865 = vmatprep.subr.mxu0 0.0
      %3866 = vmatpush1.msra.mxu0 0.0
      %3867 = vmatprep.subr.mxu0 0.0
      %3868 = vmatpush1.msra.mxu0 0.0
      %3869 = vmatprep.subr.mxu0 0.0
      %3870 = vmatpush1.msra.mxu0 0.0
      %3871 = vmatprep.subr.mxu0 0.0
      %3872 = vmatpush1.msra.mxu0 0.0
      %3873 = vmatprep.subr.mxu0 0.0
      %3874 = vmatpush1.msra.mxu0 0.0
      %3875 = vmatprep.subr.mxu0 0.0
      %3876 = vmatpush1.msra.mxu0 0.0
      %3877 = vmatprep.subr.mxu0 0.0
      %3878 = vmatpush1.msra.mxu0 0.0
      %3879 = vmatprep.subr.mxu0 0.0
      %3880 = vmatpush1.msra.mxu0 0.0
      %3881 = vmatprep.subr.mxu0 0.0
      %3882 = vmatpush1.msra.mxu0 0.0
      %3883 = vmatprep.subr.mxu0 0.0
      %3884 = vmatpush1.msra.mxu0 0.0
      %3885 = vmatprep.subr.mxu0 0.0
      %3886 = vmatpush1.msra.mxu0 0.0
      %3887 = vmatprep.subr.mxu0 0.0
      %3888 = vmatpush1.msra.mxu0 0.0
      %3889 = vmatprep.subr.mxu0 0.0
      %3890 = vmatpush1.msra.mxu0 0.0
      %3891 = vmatprep.subr.mxu0 0.0
      %3892 = vmatpush1.msra.mxu0 0.0
      %3893 = vmatprep.subr.mxu0 0.0
      %3894 = vmatpush1.msra.mxu0 0.0
      %3895 = vmatprep.subr.mxu0 0.0
      %3896 = vmatpush1.msra.mxu0 0.0
      %3897 = vmatprep.subr.mxu0 0.0
      %3898 = vmatpush1.msra.mxu0 0.0
      %3899 = vmatprep.subr.mxu0 0.0
      %3900 = vmatpush1.msra.mxu0 0.0
      %3901 = vmatprep.subr.mxu0 0.0
      %3902 = vmatpush1.msra.mxu0 0.0
      %3903 = vmatprep.mubr.f32.mxu0 0.0
      %3904 = vmatmul.mubr.f32.gmra.mrb[0].mxu0 %v3834
      %v3905 = vpop.f32.mrb[0].mxu0
      %v3906 = vadd.f32 0.0, %v3905
      %v3907 = vpop.f32.mrb[0].mxu0
      %3908 = vmatprep.mubr.f32.mxu0 0.0
      %3909 = vmatmul.mubr.f32.gmra.mrb[0].mxu0 %v3837
      %v3910 = vpop.f32.mrb[0].mxu0
      %v3911 = vadd.f32 0.0, %v3910
      %v3912 = vpop.f32.mrb[0].mxu0
      %3913 = vdwg.mxu0
      %3914 = vrot.lane.b32.xlu0 %v831, 64
      %v3915 = vpop.permute.xlu0 %3914
      %3916 = vrot.lane.b32.xlu0 %v833, 64
      %v3917 = vpop.permute.xlu0 %3916
      %v3921 = vsel %vm2343, %v2692, 0
      %v3924 = vsel %vm2343, %v2693, 0
      %3926 = vmatprep.subr.mxu0 0.0
      %3927 = vmatpush1.msra.mxu0 %v3915
      %3928 = vmatprep.subr.mxu0 0.0
      %3929 = vmatpush1.msra.mxu0 %v3917
      %3930 = vmatprep.subr.mxu0 0.0
      %3931 = vmatpush1.msra.mxu0 0.0
      %3932 = vmatprep.subr.mxu0 0.0
      %3933 = vmatpush1.msra.mxu0 0.0
      %3934 = vmatprep.subr.mxu0 0.0
      %3935 = vmatpush1.msra.mxu0 0.0
      %3936 = vmatprep.subr.mxu0 0.0
      %3937 = vmatpush1.msra.mxu0 0.0
      %3938 = vmatprep.subr.mxu0 0.0
      %3939 = vmatpush1.msra.mxu0 0.0
      %3940 = vmatprep.subr.mxu0 0.0
      %3941 = vmatpush1.msra.mxu0 0.0
      %3942 = vmatprep.subr.mxu0 0.0
      %3943 = vmatpush1.msra.mxu0 0.0
      %3944 = vmatprep.subr.mxu0 0.0
      %3945 = vmatpush1.msra.mxu0 0.0
      %3946 = vmatprep.subr.mxu0 0.0
      %3947 = vmatpush1.msra.mxu0 0.0
      %3948 = vmatprep.subr.mxu0 0.0
      %3949 = vmatpush1.msra.mxu0 0.0
      %3950 = vmatprep.subr.mxu0 0.0
      %3951 = vmatpush1.msra.mxu0 0.0
      %3952 = vmatprep.subr.mxu0 0.0
      %3953 = vmatpush1.msra.mxu0 0.0
      %3954 = vmatprep.subr.mxu0 0.0
      %3955 = vmatpush1.msra.mxu0 0.0
      %3956 = vmatprep.subr.mxu0 0.0
      %3957 = vmatpush1.msra.mxu0 0.0
      %3958 = vmatprep.subr.mxu0 0.0
      %3959 = vmatpush1.msra.mxu0 0.0
      %3960 = vmatprep.subr.mxu0 0.0
      %3961 = vmatpush1.msra.mxu0 0.0
      %3962 = vmatprep.subr.mxu0 0.0
      %3963 = vmatpush1.msra.mxu0 0.0
      %3964 = vmatprep.subr.mxu0 0.0
      %3965 = vmatpush1.msra.mxu0 0.0
      %3966 = vmatprep.subr.mxu0 0.0
      %3967 = vmatpush1.msra.mxu0 0.0
      %3968 = vmatprep.subr.mxu0 0.0
      %3969 = vmatpush1.msra.mxu0 0.0
      %3970 = vmatprep.subr.mxu0 0.0
      %3971 = vmatpush1.msra.mxu0 0.0
      %3972 = vmatprep.subr.mxu0 0.0
      %3973 = vmatpush1.msra.mxu0 0.0
      %3974 = vmatprep.subr.mxu0 0.0
      %3975 = vmatpush1.msra.mxu0 0.0
      %3976 = vmatprep.subr.mxu0 0.0
      %3977 = vmatpush1.msra.mxu0 0.0
      %3978 = vmatprep.subr.mxu0 0.0
      %3979 = vmatpush1.msra.mxu0 0.0
      %3980 = vmatprep.subr.mxu0 0.0
      %3981 = vmatpush1.msra.mxu0 0.0
      %3982 = vmatprep.subr.mxu0 0.0
      %3983 = vmatpush1.msra.mxu0 0.0
      %3984 = vmatprep.subr.mxu0 0.0
      %3985 = vmatpush1.msra.mxu0 0.0
      %3986 = vmatprep.subr.mxu0 0.0
      %3987 = vmatpush1.msra.mxu0 0.0
      %3988 = vmatprep.subr.mxu0 0.0
      %3989 = vmatpush1.msra.mxu0 0.0
      %3990 = vmatprep.mubr.f32.mxu0 0.0
      %3991 = vmatmul.mubr.f32.gmra.mrb[0].mxu0 %v3921
      %v3992 = vpop.f32.mrb[0].mxu0
      %v3993 = vadd.f32 0.0, %v3992
      %v3994 = vpop.f32.mrb[0].mxu0
      %3995 = vmatprep.mubr.f32.mxu0 0.0
      %3996 = vmatmul.mubr.f32.gmra.mrb[0].mxu0 %v3924
      %v3997 = vpop.f32.mrb[0].mxu0
      %v3998 = vadd.f32 0.0, %v3997
      %v3999 = vpop.f32.mrb[0].mxu0
      %4000 = vdwg.mxu0
      %4001 = vrot.lane.b32.xlu0 %v835, 64
      %v4002 = vpop.permute.xlu0 %4001
      %4003 = vrot.lane.b32.xlu0 %v837, 64
      %v4004 = vpop.permute.xlu0 %4003
      %v4008 = vsel %vm2343, %v2694, 0
      %v4011 = vsel %vm2343, %v2695, 0
      %4013 = vmatprep.subr.mxu0 0.0
      %4014 = vmatpush1.msra.mxu0 %v4002
      %4015 = vmatprep.subr.mxu0 0.0
      %4016 = vmatpush1.msra.mxu0 %v4004
      %4017 = vmatprep.subr.mxu0 0.0
      %4018 = vmatpush1.msra.mxu0 0.0
      %4019 = vmatprep.subr.mxu0 0.0
      %4020 = vmatpush1.msra.mxu0 0.0
      %4021 = vmatprep.subr.mxu0 0.0
      %4022 = vmatpush1.msra.mxu0 0.0
      %4023 = vmatprep.subr.mxu0 0.0
      %4024 = vmatpush1.msra.mxu0 0.0
      %4025 = vmatprep.subr.mxu0 0.0
      %4026 = vmatpush1.msra.mxu0 0.0
      %4027 = vmatprep.subr.mxu0 0.0
      %4028 = vmatpush1.msra.mxu0 0.0
      %4029 = vmatprep.subr.mxu0 0.0
      %4030 = vmatpush1.msra.mxu0 0.0
      %4031 = vmatprep.subr.mxu0 0.0
      %4032 = vmatpush1.msra.mxu0 0.0
      %4033 = vmatprep.subr.mxu0 0.0
      %4034 = vmatpush1.msra.mxu0 0.0
      %4035 = vmatprep.subr.mxu0 0.0
      %4036 = vmatpush1.msra.mxu0 0.0
      %4037 = vmatprep.subr.mxu0 0.0
      %4038 = vmatpush1.msra.mxu0 0.0
      %4039 = vmatprep.subr.mxu0 0.0
      %4040 = vmatpush1.msra.mxu0 0.0
      %4041 = vmatprep.subr.mxu0 0.0
      %4042 = vmatpush1.msra.mxu0 0.0
      %4043 = vmatprep.subr.mxu0 0.0
      %4044 = vmatpush1.msra.mxu0 0.0
      %4045 = vmatprep.subr.mxu0 0.0
      %4046 = vmatpush1.msra.mxu0 0.0
      %4047 = vmatprep.subr.mxu0 0.0
      %4048 = vmatpush1.msra.mxu0 0.0
      %4049 = vmatprep.subr.mxu0 0.0
      %4050 = vmatpush1.msra.mxu0 0.0
      %4051 = vmatprep.subr.mxu0 0.0
      %4052 = vmatpush1.msra.mxu0 0.0
      %4053 = vmatprep.subr.mxu0 0.0
      %4054 = vmatpush1.msra.mxu0 0.0
      %4055 = vmatprep.subr.mxu0 0.0
      %4056 = vmatpush1.msra.mxu0 0.0
      %4057 = vmatprep.subr.mxu0 0.0
      %4058 = vmatpush1.msra.mxu0 0.0
      %4059 = vmatprep.subr.mxu0 0.0
      %4060 = vmatpush1.msra.mxu0 0.0
      %4061 = vmatprep.subr.mxu0 0.0
      %4062 = vmatpush1.msra.mxu0 0.0
      %4063 = vmatprep.subr.mxu0 0.0
      %4064 = vmatpush1.msra.mxu0 0.0
      %4065 = vmatprep.subr.mxu0 0.0
      %4066 = vmatpush1.msra.mxu0 0.0
      %4067 = vmatprep.subr.mxu0 0.0
      %4068 = vmatpush1.msra.mxu0 0.0
      %4069 = vmatprep.subr.mxu0 0.0
      %4070 = vmatpush1.msra.mxu0 0.0
      %4071 = vmatprep.subr.mxu0 0.0
      %4072 = vmatpush1.msra.mxu0 0.0
      %4073 = vmatprep.subr.mxu0 0.0
      %4074 = vmatpush1.msra.mxu0 0.0
      %4075 = vmatprep.subr.mxu0 0.0
      %4076 = vmatpush1.msra.mxu0 0.0
      %4077 = vmatprep.mubr.f32.mxu0 0.0
      %4078 = vmatmul.mubr.f32.gmra.mrb[0].mxu0 %v4008
      %v4079 = vpop.f32.mrb[0].mxu0
      %v4080 = vadd.f32 0.0, %v4079
      %v4081 = vpop.f32.mrb[0].mxu0
      %4082 = vmatprep.mubr.f32.mxu0 0.0
      %4083 = vmatmul.mubr.f32.gmra.mrb[0].mxu0 %v4011
      %v4084 = vpop.f32.mrb[0].mxu0
      %v4085 = vadd.f32 0.0, %v4084
      %v4086 = vpop.f32.mrb[0].mxu0
      %4087 = vdwg.mxu0
      %4096 = vrot.lane.b32.xlu0 %v3123, 8
      %v4097 = vpop.permute.xlu0 %4096
      %4098 = vrot.lane.b32.xlu0 %v3128, 8
      %v4099 = vpop.permute.xlu0 %4098
      %4100 = vrot.lane.b32.xlu0 %v3210, 8
      %v4101 = vpop.permute.xlu0 %4100
      %4102 = vrot.lane.b32.xlu0 %v3215, 8
      %v4103 = vpop.permute.xlu0 %4102
      %4104 = vrot.lane.b32.xlu0 %v3297, 8
      %v4105 = vpop.permute.xlu0 %4104
      %4106 = vrot.lane.b32.xlu0 %v3302, 8
      %v4107 = vpop.permute.xlu0 %4106
      %4108 = vrot.lane.b32.xlu0 %v3384, 8
      %v4109 = vpop.permute.xlu0 %4108
      %4110 = vrot.lane.b32.xlu0 %v3389, 8
      %v4111 = vpop.permute.xlu0 %4110
      %4128 = vrot.lane.b32.xlu0 %v3471, 16
      %v4129 = vpop.permute.xlu0 %4128
      %4130 = vrot.lane.b32.xlu0 %v3476, 16
      %v4131 = vpop.permute.xlu0 %4130
      %4132 = vrot.lane.b32.xlu0 %v3558, 16
      %v4133 = vpop.permute.xlu0 %4132
      %4134 = vrot.lane.b32.xlu0 %v3563, 16
      %v4135 = vpop.permute.xlu0 %4134
      %4136 = vrot.lane.b32.xlu0 %v3645, 16
      %v4137 = vpop.permute.xlu0 %4136
      %4138 = vrot.lane.b32.xlu0 %v3650, 16
      %v4139 = vpop.permute.xlu0 %4138
      %4140 = vrot.lane.b32.xlu0 %v3732, 16
      %v4141 = vpop.permute.xlu0 %4140
      %4142 = vrot.lane.b32.xlu0 %v3737, 16
      %v4143 = vpop.permute.xlu0 %4142
      %4160 = vrot.lane.b32.xlu0 %v3819, 24
      %v4161 = vpop.permute.xlu0 %4160
      %4162 = vrot.lane.b32.xlu0 %v3824, 24
      %v4163 = vpop.permute.xlu0 %4162
      %4164 = vrot.lane.b32.xlu0 %v3906, 24
      %v4165 = vpop.permute.xlu0 %4164
      %4166 = vrot.lane.b32.xlu0 %v3911, 24
      %v4167 = vpop.permute.xlu0 %4166
      %4168 = vrot.lane.b32.xlu0 %v3993, 24
      %v4169 = vpop.permute.xlu0 %4168
      %4170 = vrot.lane.b32.xlu0 %v3998, 24
      %v4171 = vpop.permute.xlu0 %4170
      %4172 = vrot.lane.b32.xlu0 %v4080, 24
      %v4173 = vpop.permute.xlu0 %4172
      %4174 = vrot.lane.b32.xlu0 %v4085, 24
      %v4175 = vpop.permute.xlu0 %4174
      %v4184 = vsel %vm890, %v2775, %v4097
      %v4185 = vsel %vm890, %v2780, %v4099
      %v4186 = vsel %vm890, %v2862, %v4101
      %v4187 = vsel %vm890, %v2867, %v4103
      %v4188 = vsel %vm890, %v2949, %v4105
      %v4189 = vsel %vm890, %v2954, %v4107
      %v4190 = vsel %vm890, %v3036, %v4109
      %v4191 = vsel %vm890, %v3041, %v4111
      %v4192 = vsel %vm2343, %v4184, %v4129
      %v4193 = vsel %vm2343, %v4185, %v4131
      %v4194 = vsel %vm2343, %v4186, %v4133
      %v4195 = vsel %vm2343, %v4187, %v4135
      %v4196 = vsel %vm2343, %v4188, %v4137
      %v4197 = vsel %vm2343, %v4189, %v4139
      %v4198 = vsel %vm2343, %v4190, %v4141
      %v4199 = vsel %vm2343, %v4191, %v4143
      %vm4200 = vcmask 195584
      %v4201 = vsel %vm4200, %v4192, %v4161
      %v4202 = vsel %vm4200, %v4193, %v4163
      %v4203 = vsel %vm4200, %v4194, %v4165
      %v4204 = vsel %vm4200, %v4195, %v4167
      %v4205 = vsel %vm4200, %v4196, %v4169
      %v4206 = vsel %vm4200, %v4197, %v4171
      %v4207 = vsel %vm4200, %v4198, %v4173
      %v4208 = vsel %vm4200, %v4199, %v4175
      %v4209 = vld [vmem:[%s5] sm:$0xff]
      %v4210 = vld [vmem:[%s5 + $0x8] sm:$0xff]
      %v4211 = vld [vmem:[%s5 + $0x10] sm:$0xff]
      %v4212 = vld [vmem:[%s5 + $0x18] sm:$0xff]
      %v4213 = vld [vmem:[%s6] sm:$0x1]
      %v4215 = vlaneseq
      %v4216 = vshrl.u32 %v4215, 7
      %v4217 = vsub.s32 0, %v4216
      %v4218 = vrot.slane %v4213, %v4217
      %v4221 = vsel %vm508, %v4201, 0
      %v4224 = vsel %vm508, %v4202, 0
      %v4227 = vsel %vm508, %v4203, 0
      %v4230 = vsel %vm508, %v4204, 0
      %v4233 = vsel %vm508, %v4205, 0
      %v4236 = vsel %vm508, %v4206, 0
      %v4239 = vsel %vm508, %v4207, 0
      %v4242 = vsel %vm508, %v4208, 0
      %4244 = vmatprep.subr.mxu0 0.0
      %4245 = vmatpush1.msra.mxu0 %v4209
      %4246 = vmatprep.subr.mxu0 0.0
      %4247 = vmatpush1.msra.mxu0 %v4210
      %4248 = vmatprep.subr.mxu0 0.0
      %4249 = vmatpush1.msra.mxu0 %v4211
      %4250 = vmatprep.subr.mxu0 0.0
      %4251 = vmatpush1.msra.mxu0 %v4212
      %4252 = vmatprep.subr.mxu0 0.0
      %4253 = vmatpush1.msra.mxu0 0.0
      %4254 = vmatprep.subr.mxu0 0.0
      %4255 = vmatpush1.msra.mxu0 0.0
      %4256 = vmatprep.subr.mxu0 0.0
      %4257 = vmatpush1.msra.mxu0 0.0
      %4258 = vmatprep.subr.mxu0 0.0
      %4259 = vmatpush1.msra.mxu0 0.0
      %4260 = vmatprep.subr.mxu0 0.0
      %4261 = vmatpush1.msra.mxu0 0.0
      %4262 = vmatprep.subr.mxu0 0.0
      %4263 = vmatpush1.msra.mxu0 0.0
      %4264 = vmatprep.subr.mxu0 0.0
      %4265 = vmatpush1.msra.mxu0 0.0
      %4266 = vmatprep.subr.mxu0 0.0
      %4267 = vmatpush1.msra.mxu0 0.0
      %4268 = vmatprep.subr.mxu0 0.0
      %4269 = vmatpush1.msra.mxu0 0.0
      %4270 = vmatprep.subr.mxu0 0.0
      %4271 = vmatpush1.msra.mxu0 0.0
      %4272 = vmatprep.subr.mxu0 0.0
      %4273 = vmatpush1.msra.mxu0 0.0
      %4274 = vmatprep.subr.mxu0 0.0
      %4275 = vmatpush1.msra.mxu0 0.0
      %4276 = vmatprep.subr.mxu0 0.0
      %4277 = vmatpush1.msra.mxu0 0.0
      %4278 = vmatprep.subr.mxu0 0.0
      %4279 = vmatpush1.msra.mxu0 0.0
      %4280 = vmatprep.subr.mxu0 0.0
      %4281 = vmatpush1.msra.mxu0 0.0
      %4282 = vmatprep.subr.mxu0 0.0
      %4283 = vmatpush1.msra.mxu0 0.0
      %4284 = vmatprep.subr.mxu0 0.0
      %4285 = vmatpush1.msra.mxu0 0.0
      %4286 = vmatprep.subr.mxu0 0.0
      %4287 = vmatpush1.msra.mxu0 0.0
      %4288 = vmatprep.subr.mxu0 0.0
      %4289 = vmatpush1.msra.mxu0 0.0
      %4290 = vmatprep.subr.mxu0 0.0
      %4291 = vmatpush1.msra.mxu0 0.0
      %4292 = vmatprep.subr.mxu0 0.0
      %4293 = vmatpush1.msra.mxu0 0.0
      %4294 = vmatprep.subr.mxu0 0.0
      %4295 = vmatpush1.msra.mxu0 0.0
      %4296 = vmatprep.subr.mxu0 0.0
      %4297 = vmatpush1.msra.mxu0 0.0
      %4298 = vmatprep.subr.mxu0 0.0
      %4299 = vmatpush1.msra.mxu0 0.0
      %4300 = vmatprep.subr.mxu0 0.0
      %4301 = vmatpush1.msra.mxu0 0.0
      %4302 = vmatprep.subr.mxu0 0.0
      %4303 = vmatpush1.msra.mxu0 0.0
      %4304 = vmatprep.subr.mxu0 0.0
      %4305 = vmatpush1.msra.mxu0 0.0
      %4306 = vmatprep.subr.mxu0 0.0
      %4307 = vmatpush1.msra.mxu0 0.0
      %4308 = vmatprep.mubr.f32.mxu0 0.0
      %4309 = vmatmul.mubr.f32.gmra.mrb[0].mxu0 %v4221
      %v4310 = vpop.f32.mrb[0].mxu0
      %v4311 = vadd.f32 %v4218, %v4310
      %v4312 = vpop.f32.mrb[0].mxu0
      %4313 = vmatprep.mubr.f32.mxu0 0.0
      %4314 = vmatmul.mubr.f32.gmra.mrb[0].mxu0 %v4224
      %v4315 = vpop.f32.mrb[0].mxu0
      %v4316 = vadd.f32 %v4218, %v4315
      %v4317 = vpop.f32.mrb[0].mxu0
      %4318 = vmatprep.mubr.f32.mxu0 0.0
      %4319 = vmatmul.mubr.f32.gmra.mrb[0].mxu0 %v4227
      %v4320 = vpop.f32.mrb[0].mxu0
      %v4321 = vadd.f32 %v4218, %v4320
      %v4322 = vpop.f32.mrb[0].mxu0
      %4323 = vmatprep.mubr.f32.mxu0 0.0
      %4324 = vmatmul.mubr.f32.gmra.mrb[0].mxu0 %v4230
      %v4325 = vpop.f32.mrb[0].mxu0
      %v4326 = vadd.f32 %v4218, %v4325
      %v4327 = vpop.f32.mrb[0].mxu0
      %4328 = vmatprep.mubr.f32.mxu0 0.0
      %4329 = vmatmul.mubr.f32.gmra.mrb[0].mxu0 %v4233
      %v4330 = vpop.f32.mrb[0].mxu0
      %v4331 = vadd.f32 %v4218, %v4330
      %v4332 = vpop.f32.mrb[0].mxu0
      %4333 = vmatprep.mubr.f32.mxu0 0.0
      %4334 = vmatmul.mubr.f32.gmra.mrb[0].mxu0 %v4236
      %v4335 = vpop.f32.mrb[0].mxu0
      %v4336 = vadd.f32 %v4218, %v4335
      %v4337 = vpop.f32.mrb[0].mxu0
      %4338 = vmatprep.mubr.f32.mxu0 0.0
      %4339 = vmatmul.mubr.f32.gmra.mrb[0].mxu0 %v4239
      %v4340 = vpop.f32.mrb[0].mxu0
      %v4341 = vadd.f32 %v4218, %v4340
      %v4342 = vpop.f32.mrb[0].mxu0
      %4343 = vmatprep.mubr.f32.mxu0 0.0
      %4344 = vmatmul.mubr.f32.gmra.mrb[0].mxu0 %v4242
      %v4345 = vpop.f32.mrb[0].mxu0
      %v4346 = vadd.f32 %v4218, %v4345
      %v4347 = vpop.f32.mrb[0].mxu0
      %4348 = vdwg.mxu0
      %v4349 = vadd.f32 %v4311, %v498
      %v4350 = vadd.f32 %v4316, %v499
      %v4351 = vadd.f32 %v4321, %v500
      %v4352 = vadd.f32 %v4326, %v501
      %v4353 = vadd.f32 %v4331, %v502
      %v4354 = vadd.f32 %v4336, %v503
      %v4355 = vadd.f32 %v4341, %v504
      %v4356 = vadd.f32 %v4346, %v505
      %v4357 = vld [vmem:[%s9] sm:$0x1]
      %v4358 = vld [vmem:[%s10] sm:$0x1]
      %v4359 = vsel %vm508, %v4349, 0.0
      %4360 = vadd.xlane.f32.xlu0 %v4359
      %v4361 = vpop.xlane.xlu0 %4360
      %v4362 = vsel %vm508, %v4350, 0.0
      %4363 = vadd.xlane.f32.xlu0 %v4362
      %v4364 = vpop.xlane.xlu0 %4363
      %v4365 = vsel %vm508, %v4351, 0.0
      %4366 = vadd.xlane.f32.xlu0 %v4365
      %v4367 = vpop.xlane.xlu0 %4366
      %v4368 = vsel %vm508, %v4352, 0.0
      %4369 = vadd.xlane.f32.xlu0 %v4368
      %v4370 = vpop.xlane.xlu0 %4369
      %v4371 = vsel %vm508, %v4353, 0.0
      %4372 = vadd.xlane.f32.xlu0 %v4371
      %v4373 = vpop.xlane.xlu0 %4372
      %v4374 = vsel %vm508, %v4354, 0.0
      %4375 = vadd.xlane.f32.xlu0 %v4374
      %v4376 = vpop.xlane.xlu0 %4375
      %v4377 = vsel %vm508, %v4355, 0.0
      %4378 = vadd.xlane.f32.xlu0 %v4377
      %v4379 = vpop.xlane.xlu0 %4378
      %v4380 = vsel %vm508, %v4356, 0.0
      %4381 = vadd.xlane.f32.xlu0 %v4380
      %v4382 = vpop.xlane.xlu0 %4381
      %v4383 = vmul.f32 %v4361, %v533
      %v4384 = vmul.f32 %v4364, %v533
      %v4385 = vmul.f32 %v4367, %v533
      %v4386 = vmul.f32 %v4370, %v533
      %v4387 = vmul.f32 %v4373, %v533
      %v4388 = vmul.f32 %v4376, %v533
      %v4389 = vmul.f32 %v4379, %v533
      %v4390 = vmul.f32 %v4382, %v533
      %v4391 = vsub.f32 %v4349, %v4383
      %v4392 = vsub.f32 %v4350, %v4384
      %v4393 = vsub.f32 %v4351, %v4385
      %v4394 = vsub.f32 %v4352, %v4386
      %v4395 = vsub.f32 %v4353, %v4387
      %v4396 = vsub.f32 %v4354, %v4388
      %v4397 = vsub.f32 %v4355, %v4389
      %v4398 = vsub.f32 %v4356, %v4390
      %v4399 = vmul.f32 %v4391, %v4391
      %v4400 = vmul.f32 %v4392, %v4392
      %v4401 = vmul.f32 %v4393, %v4393
      %v4402 = vmul.f32 %v4394, %v4394
      %v4403 = vmul.f32 %v4395, %v4395
      %v4404 = vmul.f32 %v4396, %v4396
      %v4405 = vmul.f32 %v4397, %v4397
      %v4406 = vmul.f32 %v4398, %v4398
      %v4407 = vsel %vm508, %v4399, 0.0
      %4408 = vadd.xlane.f32.xlu0 %v4407
      %v4409 = vpop.xlane.xlu0 %4408
      %v4410 = vsel %vm508, %v4400, 0.0
      %4411 = vadd.xlane.f32.xlu0 %v4410
      %v4412 = vpop.xlane.xlu0 %4411
      %v4413 = vsel %vm508, %v4401, 0.0
      %4414 = vadd.xlane.f32.xlu0 %v4413
      %v4415 = vpop.xlane.xlu0 %4414
      %v4416 = vsel %vm508, %v4402, 0.0
      %4417 = vadd.xlane.f32.xlu0 %v4416
      %v4418 = vpop.xlane.xlu0 %4417
      %v4419 = vsel %vm508, %v4403, 0.0
      %4420 = vadd.xlane.f32.xlu0 %v4419
      %v4421 = vpop.xlane.xlu0 %4420
      %v4422 = vsel %vm508, %v4404, 0.0
      %4423 = vadd.xlane.f32.xlu0 %v4422
      %v4424 = vpop.xlane.xlu0 %4423
      %v4425 = vsel %vm508, %v4405, 0.0
      %4426 = vadd.xlane.f32.xlu0 %v4425
      %v4427 = vpop.xlane.xlu0 %4426
      %v4428 = vsel %vm508, %v4406, 0.0
      %4429 = vadd.xlane.f32.xlu0 %v4428
      %v4430 = vpop.xlane.xlu0 %4429
      %v4431 = vmul.f32 %v4409, %v533
      %v4432 = vmul.f32 %v4412, %v533
      %v4433 = vmul.f32 %v4415, %v533
      %v4434 = vmul.f32 %v4418, %v533
      %v4435 = vmul.f32 %v4421, %v533
      %v4436 = vmul.f32 %v4424, %v533
      %v4437 = vmul.f32 %v4427, %v533
      %v4438 = vmul.f32 %v4430, %v533
      %v4439 = vadd.f32 %v4431, 1e-05
      %v4440 = vadd.f32 %v4432, 1e-05
      %v4441 = vadd.f32 %v4433, 1e-05
      %v4442 = vadd.f32 %v4434, 1e-05
      %v4443 = vadd.f32 %v4435, 1e-05
      %v4444 = vadd.f32 %v4436, 1e-05
      %v4445 = vadd.f32 %v4437, 1e-05
      %v4446 = vadd.f32 %v4438, 1e-05
      %v4447 = vrsqrt.pop %v4439
      %v4448 = vrsqrt.pop %v4440
      %v4449 = vrsqrt.pop %v4441
      %v4450 = vrsqrt.pop %v4442
      %v4451 = vrsqrt.pop %v4443
      %v4452 = vrsqrt.pop %v4444
      %v4453 = vrsqrt.pop %v4445
      %v4454 = vrsqrt.pop %v4446
      %v4455 = vmul.f32 %v4391, %v4447
      %v4456 = vmul.f32 %v4392, %v4448
      %v4457 = vmul.f32 %v4393, %v4449
      %v4458 = vmul.f32 %v4394, %v4450
      %v4459 = vmul.f32 %v4395, %v4451
      %v4460 = vmul.f32 %v4396, %v4452
      %v4461 = vmul.f32 %v4397, %v4453
      %v4462 = vmul.f32 %v4398, %v4454
      %v4464 = vlaneseq
      %v4465 = vshrl.u32 %v4464, 7
      %v4466 = vsub.s32 0, %v4465
      %v4467 = vrot.slane %v4357, %v4466
      %v4469 = vmul.f32 %v4455, %v4467
      %v4470 = vmul.f32 %v4456, %v4467
      %v4471 = vmul.f32 %v4457, %v4467
      %v4472 = vmul.f32 %v4458, %v4467
      %v4473 = vmul.f32 %v4459, %v4467
      %v4474 = vmul.f32 %v4460, %v4467
      %v4475 = vmul.f32 %v4461, %v4467
      %v4476 = vmul.f32 %v4462, %v4467
      %v4478 = vlaneseq
      %v4479 = vshrl.u32 %v4478, 7
      %v4480 = vsub.s32 0, %v4479
      %v4481 = vrot.slane %v4358, %v4480
      %v4483 = vadd.f32 %v4469, %v4481
      %v4484 = vadd.f32 %v4470, %v4481
      %v4485 = vadd.f32 %v4471, %v4481
      %v4486 = vadd.f32 %v4472, %v4481
      %v4487 = vadd.f32 %v4473, %v4481
      %v4488 = vadd.f32 %v4474, %v4481
      %v4489 = vadd.f32 %v4475, %v4481
      %v4490 = vadd.f32 %v4476, %v4481
      %v4491 = vld [vmem:[%s11] sm:$0xff]
      %v4492 = vld [vmem:[%s11 + $0x8] sm:$0xff]
      %v4493 = vld [vmem:[%s11 + $0x10] sm:$0xff]
      %v4494 = vld [vmem:[%s11 + $0x18] sm:$0xff]
      %v4495 = vld [vmem:[%s12] sm:$0x1]
      %v4497 = vlaneseq
      %v4498 = vshrl.u32 %v4497, 7
      %v4499 = vsub.s32 0, %v4498
      %v4500 = vrot.slane %v4495, %v4499
      %v4503 = vsel %vm508, %v4483, 0
      %v4506 = vsel %vm508, %v4484, 0
      %v4509 = vsel %vm508, %v4485, 0
      %v4512 = vsel %vm508, %v4486, 0
      %v4515 = vsel %vm508, %v4487, 0
      %v4518 = vsel %vm508, %v4488, 0
      %v4521 = vsel %vm508, %v4489, 0
      %v4524 = vsel %vm508, %v4490, 0
      %4526 = vmatprep.subr.mxu0 0.0
      %4527 = vmatpush1.msra.mxu0 %v4491
      %4528 = vmatprep.subr.mxu0 0.0
      %4529 = vmatpush1.msra.mxu0 %v4492
      %4530 = vmatprep.subr.mxu0 0.0
      %4531 = vmatpush1.msra.mxu0 %v4493
      %4532 = vmatprep.subr.mxu0 0.0
      %4533 = vmatpush1.msra.mxu0 %v4494
      %4534 = vmatprep.subr.mxu0 0.0
      %4535 = vmatpush1.msra.mxu0 0.0
      %4536 = vmatprep.subr.mxu0 0.0
      %4537 = vmatpush1.msra.mxu0 0.0
      %4538 = vmatprep.subr.mxu0 0.0
      %4539 = vmatpush1.msra.mxu0 0.0
      %4540 = vmatprep.subr.mxu0 0.0
      %4541 = vmatpush1.msra.mxu0 0.0
      %4542 = vmatprep.subr.mxu0 0.0
      %4543 = vmatpush1.msra.mxu0 0.0
      %4544 = vmatprep.subr.mxu0 0.0
      %4545 = vmatpush1.msra.mxu0 0.0
      %4546 = vmatprep.subr.mxu0 0.0
      %4547 = vmatpush1.msra.mxu0 0.0
      %4548 = vmatprep.subr.mxu0 0.0
      %4549 = vmatpush1.msra.mxu0 0.0
      %4550 = vmatprep.subr.mxu0 0.0
      %4551 = vmatpush1.msra.mxu0 0.0
      %4552 = vmatprep.subr.mxu0 0.0
      %4553 = vmatpush1.msra.mxu0 0.0
      %4554 = vmatprep.subr.mxu0 0.0
      %4555 = vmatpush1.msra.mxu0 0.0
      %4556 = vmatprep.subr.mxu0 0.0
      %4557 = vmatpush1.msra.mxu0 0.0
      %4558 = vmatprep.subr.mxu0 0.0
      %4559 = vmatpush1.msra.mxu0 0.0
      %4560 = vmatprep.subr.mxu0 0.0
      %4561 = vmatpush1.msra.mxu0 0.0
      %4562 = vmatprep.subr.mxu0 0.0
      %4563 = vmatpush1.msra.mxu0 0.0
      %4564 = vmatprep.subr.mxu0 0.0
      %4565 = vmatpush1.msra.mxu0 0.0
      %4566 = vmatprep.subr.mxu0 0.0
      %4567 = vmatpush1.msra.mxu0 0.0
      %4568 = vmatprep.subr.mxu0 0.0
      %4569 = vmatpush1.msra.mxu0 0.0
      %4570 = vmatprep.subr.mxu0 0.0
      %4571 = vmatpush1.msra.mxu0 0.0
      %4572 = vmatprep.subr.mxu0 0.0
      %4573 = vmatpush1.msra.mxu0 0.0
      %4574 = vmatprep.subr.mxu0 0.0
      %4575 = vmatpush1.msra.mxu0 0.0
      %4576 = vmatprep.subr.mxu0 0.0
      %4577 = vmatpush1.msra.mxu0 0.0
      %4578 = vmatprep.subr.mxu0 0.0
      %4579 = vmatpush1.msra.mxu0 0.0
      %4580 = vmatprep.subr.mxu0 0.0
      %4581 = vmatpush1.msra.mxu0 0.0
      %4582 = vmatprep.subr.mxu0 0.0
      %4583 = vmatpush1.msra.mxu0 0.0
      %4584 = vmatprep.subr.mxu0 0.0
      %4585 = vmatpush1.msra.mxu0 0.0
      %4586 = vmatprep.subr.mxu0 0.0
      %4587 = vmatpush1.msra.mxu0 0.0
      %4588 = vmatprep.subr.mxu0 0.0
      %4589 = vmatpush1.msra.mxu0 0.0
      %4590 = vmatprep.mubr.f32.mxu0 0.0
      %4591 = vmatmul.mubr.f32.gmra.mrb[0].mxu0 %v4503
      %v4592 = vpop.f32.mrb[0].mxu0
      %v4593 = vadd.f32 %v4500, %v4592
      %v4594 = vpop.f32.mrb[0].mxu0
      %4595 = vmatprep.mubr.f32.mxu0 0.0
      %4596 = vmatmul.mubr.f32.gmra.mrb[0].mxu0 %v4506
      %v4597 = vpop.f32.mrb[0].mxu0
      %v4598 = vadd.f32 %v4500, %v4597
      %v4599 = vpop.f32.mrb[0].mxu0
      %4600 = vmatprep.mubr.f32.mxu0 0.0
      %4601 = vmatmul.mubr.f32.gmra.mrb[0].mxu0 %v4509
      %v4602 = vpop.f32.mrb[0].mxu0
      %v4603 = vadd.f32 %v4500, %v4602
      %v4604 = vpop.f32.mrb[0].mxu0
      %4605 = vmatprep.mubr.f32.mxu0 0.0
      %4606 = vmatmul.mubr.f32.gmra.mrb[0].mxu0 %v4512
      %v4607 = vpop.f32.mrb[0].mxu0
      %v4608 = vadd.f32 %v4500, %v4607
      %v4609 = vpop.f32.mrb[0].mxu0
      %4610 = vmatprep.mubr.f32.mxu0 0.0
      %4611 = vmatmul.mubr.f32.gmra.mrb[0].mxu0 %v4515
      %v4612 = vpop.f32.mrb[0].mxu0
      %v4613 = vadd.f32 %v4500, %v4612
      %v4614 = vpop.f32.mrb[0].mxu0
      %4615 = vmatprep.mubr.f32.mxu0 0.0
      %4616 = vmatmul.mubr.f32.gmra.mrb[0].mxu0 %v4518
      %v4617 = vpop.f32.mrb[0].mxu0
      %v4618 = vadd.f32 %v4500, %v4617
      %v4619 = vpop.f32.mrb[0].mxu0
      %4620 = vmatprep.mubr.f32.mxu0 0.0
      %4621 = vmatmul.mubr.f32.gmra.mrb[0].mxu0 %v4521
      %v4622 = vpop.f32.mrb[0].mxu0
      %v4623 = vadd.f32 %v4500, %v4622
      %v4624 = vpop.f32.mrb[0].mxu0
      %4625 = vmatprep.mubr.f32.mxu0 0.0
      %4626 = vmatmul.mubr.f32.gmra.mrb[0].mxu0 %v4524
      %v4627 = vpop.f32.mrb[0].mxu0
      %v4628 = vadd.f32 %v4500, %v4627
      %v4629 = vpop.f32.mrb[0].mxu0
      %4630 = vdwg.mxu0
      %v4631 = vmul.f32 %v4593, %v4593
      %v4632 = vmul.f32 %v4598, %v4598
      %v4633 = vmul.f32 %v4603, %v4603
      %v4634 = vmul.f32 %v4608, %v4608
      %v4635 = vmul.f32 %v4613, %v4613
      %v4636 = vmul.f32 %v4618, %v4618
      %v4637 = vmul.f32 %v4623, %v4623
      %v4638 = vmul.f32 %v4628, %v4628
      %v4639 = vmul.f32 %v4593, %v4631
      %v4640 = vmul.f32 %v4598, %v4632
      %v4641 = vmul.f32 %v4603, %v4633
      %v4642 = vmul.f32 %v4608, %v4634
      %v4643 = vmul.f32 %v4613, %v4635
      %v4644 = vmul.f32 %v4618, %v4636
      %v4645 = vmul.f32 %v4623, %v4637
      %v4646 = vmul.f32 %v4628, %v4638
      %v4647 = vmul.f32 %v4639, 0.044715
      %v4648 = vmul.f32 %v4640, 0.044715
      %v4649 = vmul.f32 %v4641, 0.044715
      %v4650 = vmul.f32 %v4642, 0.044715
      %v4651 = vmul.f32 %v4643, 0.044715
      %v4652 = vmul.f32 %v4644, 0.044715
      %v4653 = vmul.f32 %v4645, 0.044715
      %v4654 = vmul.f32 %v4646, 0.044715
      %v4655 = vadd.f32 %v4593, %v4647
      %v4656 = vadd.f32 %v4598, %v4648
      %v4657 = vadd.f32 %v4603, %v4649
      %v4658 = vadd.f32 %v4608, %v4650
      %v4659 = vadd.f32 %v4613, %v4651
      %v4660 = vadd.f32 %v4618, %v4652
      %v4661 = vadd.f32 %v4623, %v4653
      %v4662 = vadd.f32 %v4628, %v4654
      %v4663 = vmul.f32 %v4655, 0.7978846
      %v4664 = vmul.f32 %v4656, 0.7978846
      %v4665 = vmul.f32 %v4657, 0.7978846
      %v4666 = vmul.f32 %v4658, 0.7978846
      %v4667 = vmul.f32 %v4659, 0.7978846
      %v4668 = vmul.f32 %v4660, 0.7978846
      %v4669 = vmul.f32 %v4661, 0.7978846
      %v4670 = vmul.f32 %v4662, 0.7978846
      %v4671 = vtanh.pop %v4663
      %v4672 = vtanh.pop %v4664
      %v4673 = vtanh.pop %v4665
      %v4674 = vtanh.pop %v4666
      %v4675 = vtanh.pop %v4667
      %v4676 = vtanh.pop %v4668
      %v4677 = vtanh.pop %v4669
      %v4678 = vtanh.pop %v4670
      %v4679 = vadd.f32 %v4671, 1.0
      %v4680 = vadd.f32 %v4672, 1.0
      %v4681 = vadd.f32 %v4673, 1.0
      %v4682 = vadd.f32 %v4674, 1.0
      %v4683 = vadd.f32 %v4675, 1.0
      %v4684 = vadd.f32 %v4676, 1.0
      %v4685 = vadd.f32 %v4677, 1.0
      %v4686 = vadd.f32 %v4678, 1.0
      %v4687 = vmul.f32 %v4679, 0.5
      %v4688 = vmul.f32 %v4680, 0.5
      %v4689 = vmul.f32 %v4681, 0.5
      %v4690 = vmul.f32 %v4682, 0.5
      %v4691 = vmul.f32 %v4683, 0.5
      %v4692 = vmul.f32 %v4684, 0.5
      %v4693 = vmul.f32 %v4685, 0.5
      %v4694 = vmul.f32 %v4686, 0.5
      %v4695 = vmul.f32 %v4593, %v4687
      %v4696 = vmul.f32 %v4598, %v4688
      %v4697 = vmul.f32 %v4603, %v4689
      %v4698 = vmul.f32 %v4608, %v4690
      %v4699 = vmul.f32 %v4613, %v4691
      %v4700 = vmul.f32 %v4618, %v4692
      %v4701 = vmul.f32 %v4623, %v4693
      %v4702 = vmul.f32 %v4628, %v4694
      %v4703 = vld [vmem:[%s13] sm:$0xff]
      %v4704 = vld [vmem:[%s13 + $0x8] sm:$0xff]
      %v4705 = vld [vmem:[%s13 + $0x10] sm:$0xff]
      %v4706 = vld [vmem:[%s13 + $0x18] sm:$0xff]
      %v4707 = vld [vmem:[%s13 + $0x20] sm:$0xff]
      %v4708 = vld [vmem:[%s13 + $0x28] sm:$0xff]
      %v4709 = vld [vmem:[%s13 + $0x30] sm:$0xff]
      %v4710 = vld [vmem:[%s13 + $0x38] sm:$0xff]
      %v4711 = vld [vmem:[%s13 + $0x40] sm:$0xff]
      %v4712 = vld [vmem:[%s13 + $0x48] sm:$0xff]
      %v4713 = vld [vmem:[%s13 + $0x50] sm:$0xff]
      %v4714 = vld [vmem:[%s13 + $0x58] sm:$0xff]
      %v4715 = vld [vmem:[%s13 + $0x60] sm:$0xff]
      %v4716 = vld [vmem:[%s13 + $0x68] sm:$0xff]
      %v4717 = vld [vmem:[%s13 + $0x70] sm:$0xff]
      %v4718 = vld [vmem:[%s13 + $0x78] sm:$0xff]
      %v4719 = vld [vmem:[%s14] sm:$0x1]
      %v4721 = vlaneseq
      %v4722 = vshrl.u32 %v4721, 7
      %v4723 = vsub.s32 0, %v4722
      %v4724 = vrot.slane %v4719, %v4723
      %4726 = vmatprep.subr.mxu0 0.0
      %4727 = vmatpush1.msra.mxu0 %v4703
      %4728 = vmatprep.subr.mxu0 0.0
      %4729 = vmatpush1.msra.mxu0 %v4704
      %4730 = vmatprep.subr.mxu0 0.0
      %4731 = vmatpush1.msra.mxu0 %v4705
      %4732 = vmatprep.subr.mxu0 0.0
      %4733 = vmatpush1.msra.mxu0 %v4706
      %4734 = vmatprep.subr.mxu0 0.0
      %4735 = vmatpush1.msra.mxu0 %v4707
      %4736 = vmatprep.subr.mxu0 0.0
      %4737 = vmatpush1.msra.mxu0 %v4708
      %4738 = vmatprep.subr.mxu0 0.0
      %4739 = vmatpush1.msra.mxu0 %v4709
      %4740 = vmatprep.subr.mxu0 0.0
      %4741 = vmatpush1.msra.mxu0 %v4710
      %4742 = vmatprep.subr.mxu0 0.0
      %4743 = vmatpush1.msra.mxu0 %v4711
      %4744 = vmatprep.subr.mxu0 0.0
      %4745 = vmatpush1.msra.mxu0 %v4712
      %4746 = vmatprep.subr.mxu0 0.0
      %4747 = vmatpush1.msra.mxu0 %v4713
      %4748 = vmatprep.subr.mxu0 0.0
      %4749 = vmatpush1.msra.mxu0 %v4714
      %4750 = vmatprep.subr.mxu0 0.0
      %4751 = vmatpush1.msra.mxu0 %v4715
      %4752 = vmatprep.subr.mxu0 0.0
      %4753 = vmatpush1.msra.mxu0 %v4716
      %4754 = vmatprep.subr.mxu0 0.0
      %4755 = vmatpush1.msra.mxu0 %v4717
      %4756 = vmatprep.subr.mxu0 0.0
      %4757 = vmatpush1.msra.mxu0 %v4718
      %4758 = vmatprep.subr.mxu0 0.0
      %4759 = vmatpush1.msra.mxu0 0.0
      %4760 = vmatprep.subr.mxu0 0.0
      %4761 = vmatpush1.msra.mxu0 0.0
      %4762 = vmatprep.subr.mxu0 0.0
      %4763 = vmatpush1.msra.mxu0 0.0
      %4764 = vmatprep.subr.mxu0 0.0
      %4765 = vmatpush1.msra.mxu0 0.0
      %4766 = vmatprep.subr.mxu0 0.0
      %4767 = vmatpush1.msra.mxu0 0.0
      %4768 = vmatprep.subr.mxu0 0.0
      %4769 = vmatpush1.msra.mxu0 0.0
      %4770 = vmatprep.subr.mxu0 0.0
      %4771 = vmatpush1.msra.mxu0 0.0
      %4772 = vmatprep.subr.mxu0 0.0
      %4773 = vmatpush1.msra.mxu0 0.0
      %4774 = vmatprep.subr.mxu0 0.0
      %4775 = vmatpush1.msra.mxu0 0.0
      %4776 = vmatprep.subr.mxu0 0.0
      %4777 = vmatpush1.msra.mxu0 0.0
      %4778 = vmatprep.subr.mxu0 0.0
      %4779 = vmatpush1.msra.mxu0 0.0
      %4780 = vmatprep.subr.mxu0 0.0
      %4781 = vmatpush1.msra.mxu0 0.0
      %4782 = vmatprep.subr.mxu0 0.0
      %4783 = vmatpush1.msra.mxu0 0.0
      %4784 = vmatprep.subr.mxu0 0.0
      %4785 = vmatpush1.msra.mxu0 0.0
      %4786 = vmatprep.subr.mxu0 0.0
      %4787 = vmatpush1.msra.mxu0 0.0
      %4788 = vmatprep.subr.mxu0 0.0
      %4789 = vmatpush1.msra.mxu0 0.0
      %4790 = vmatprep.mubr.f32.mxu0 0.0
      %4791 = vmatmul.mubr.f32.gmra.mrb[0].mxu0 %v4695
      %v4792 = vpop.f32.mrb[0].mxu0
      %v4793 = vadd.f32 %v4724, %v4792
      %v4794 = vpop.f32.mrb[0].mxu0
      %4795 = vmatprep.mubr.f32.mxu0 0.0
      %4796 = vmatmul.mubr.f32.gmra.mrb[0].mxu0 %v4696
      %v4797 = vpop.f32.mrb[0].mxu0
      %v4798 = vadd.f32 %v4724, %v4797
      %v4799 = vpop.f32.mrb[0].mxu0
      %4800 = vmatprep.mubr.f32.mxu0 0.0
      %4801 = vmatmul.mubr.f32.gmra.mrb[0].mxu0 %v4697
      %v4802 = vpop.f32.mrb[0].mxu0
      %v4803 = vadd.f32 %v4724, %v4802
      %v4804 = vpop.f32.mrb[0].mxu0
      %4805 = vmatprep.mubr.f32.mxu0 0.0
      %4806 = vmatmul.mubr.f32.gmra.mrb[0].mxu0 %v4698
      %v4807 = vpop.f32.mrb[0].mxu0
      %v4808 = vadd.f32 %v4724, %v4807
      %v4809 = vpop.f32.mrb[0].mxu0
      %4810 = vmatprep.mubr.f32.mxu0 0.0
      %4811 = vmatmul.mubr.f32.gmra.mrb[0].mxu0 %v4699
      %v4812 = vpop.f32.mrb[0].mxu0
      %v4813 = vadd.f32 %v4724, %v4812
      %v4814 = vpop.f32.mrb[0].mxu0
      %4815 = vmatprep.mubr.f32.mxu0 0.0
      %4816 = vmatmul.mubr.f32.gmra.mrb[0].mxu0 %v4700
      %v4817 = vpop.f32.mrb[0].mxu0
      %v4818 = vadd.f32 %v4724, %v4817
      %v4819 = vpop.f32.mrb[0].mxu0
      %4820 = vmatprep.mubr.f32.mxu0 0.0
      %4821 = vmatmul.mubr.f32.gmra.mrb[0].mxu0 %v4701
      %v4822 = vpop.f32.mrb[0].mxu0
      %v4823 = vadd.f32 %v4724, %v4822
      %v4824 = vpop.f32.mrb[0].mxu0
      %4825 = vmatprep.mubr.f32.mxu0 0.0
      %4826 = vmatmul.mubr.f32.gmra.mrb[0].mxu0 %v4702
      %v4827 = vpop.f32.mrb[0].mxu0
      %v4828 = vadd.f32 %v4724, %v4827
      %v4829 = vpop.f32.mrb[0].mxu0
      %4830 = vdwg.mxu0
      %v4831 = vadd.f32 %v4793, %v4349
      %v4832 = vadd.f32 %v4798, %v4350
      %v4833 = vadd.f32 %v4803, %v4351
      %v4834 = vadd.f32 %v4808, %v4352
      %v4835 = vadd.f32 %v4813, %v4353
      %v4836 = vadd.f32 %v4818, %v4354
      %v4837 = vadd.f32 %v4823, %v4355
      %v4838 = vadd.f32 %v4828, %v4356
      %4839 = vst.msk [vmem:[%s496] sm:$0xff] %vm508, %v4831
      %4840 = vst.msk [vmem:[%s496 + $0x8] sm:$0xff] %vm508, %v4832
      %4841 = vst.msk [vmem:[%s496 + $0x10] sm:$0xff] %vm508, %v4833
      %4842 = vst.msk [vmem:[%s496 + $0x18] sm:$0xff] %vm508, %v4834
      %4843 = vst.msk [vmem:[%s496 + $0x20] sm:$0xff] %vm508, %v4835
      %4844 = vst.msk [vmem:[%s496 + $0x28] sm:$0xff] %vm508, %v4836
      %4845 = vst.msk [vmem:[%s496 + $0x30] sm:$0xff] %vm508, %v4837
      %4846 = vst.msk [vmem:[%s496 + $0x38] sm:$0xff] %vm508, %v4838
      %s4847 = smul.u32 8, %s26
      %p4848 = scmp.lt.s32.totalorder %s4847, 15
      %s4849 = scalar_select %p4848, %s4847, 15
      %s4850 = smul.addr %s4849, 8
      %s4851 = scalar_lea.vmem %s15, %s4850
      // Predicated region
      $region81: #{tpu_custom_call.1} parent=79 // pred_check
        %p4852 = pneg %p364
      $region82: #{tpu_custom_call.1} parent=79 // pred_check_branch
        %4854 = sbr.rel (%p4852) target = $region84
      $region83: #{tpu_custom_call.1} parent=79 // pred_region
        %s4855 = smul.u32 8, %s26
      $region84: #{tpu_custom_call.1} parent=79 // pred_fallthru
        _
    $region80: #{tpu_custom_call.1} parent=5 // pred_fallthru
      _
    %p4856 = scmp.le.s32.totalorder 2, %s21
    // Predicated region
    $region85: #{tpu_custom_call.1} parent=5 // pred_check
      %p4857 = pneg %p4856
    $region86: #{tpu_custom_call.1} parent=5 // pred_check_branch
      %4859 = sbr.rel (%p4857) target = $region88
    $region87: #{tpu_custom_call.1} parent=5 // pred_region
      %s4860 = ssub.s32 %s21, 2
      // Predicated region
      $region89: #{tpu_custom_call.1} parent=87 // pred_check
        %p4861 = pneg %p370
      $region90: #{tpu_custom_call.1} parent=87 // pred_check_branch
        %4863 = sbr.rel (%p4861) target = $region92
      $region91: #{tpu_custom_call.1} parent=87 // pred_region
        %s4864 = smul.u32 8, %s27
        %p4865 = scmp.lt.s32.totalorder %s4864, 15
        %s4866 = scalar_select %p4865, %s4864, 15
        %s4867 = smul.addr %s4866, 8
        %s4868 = scalar_lea.vmem %s15, %s4867
      $region92: #{tpu_custom_call.1} parent=87 // pred_fallthru
        _
    $region88: #{tpu_custom_call.1} parent=5 // pred_fallthru
      _
  $region6: #{tpu_custom_call.1} parent=0 // loop_footer
    %s25 = sadd.s32 1, %s21
  $region7: #{tpu_custom_call.1} parent=0 // loop_footer_branch
    %20 = sbr.rel target = $region3
  $region8: #{tpu_custom_call.1} parent=0 // loop_exit
    _

</llo_original>
